<compile_context>
chip_gen: v5e
topology: v5e:2x2
jax: 0.10.0
libtpu: 0.0.40
codegen_flags: <defaults>
</compile_context>

<pallas_src>
import functools

import jax
import jax.numpy as jnp
from jax.experimental import pallas as pl
from jax.experimental.pallas import tpu as pltpu


def _round_up(n, m):
    return ((n + m - 1) // m) * m


def _vistoatt_kernel(x_ref,
                     w1_ref, b1_ref, w2_ref, b2_ref, w3_ref, b3_ref,
                     f1_ref, c1_ref, f2_ref, c2_ref, f3_ref, c3_ref,
                     out_ref):
    def dense(a, w_ref, b_ref):
        # Cast activations to the (possibly bf16) streamed weight dtype; always
        # accumulate in f32 on the MXU.
        return (jnp.dot(a.astype(w_ref.dtype), w_ref[...],
                        preferred_element_type=jnp.float32)
                + b_ref[...])

    x = x_ref[...].astype(jnp.float32)

    # Attention gate branch: sigmoid(L3(relu(L2(relu(L1(x))))))
    h = jnp.maximum(dense(x, w1_ref, b1_ref), 0.0)
    h = jnp.maximum(dense(h, w2_ref, b2_ref), 0.0)
    g = dense(h, w3_ref, b3_ref)
    gate = 1.0 / (1.0 + jnp.exp(-g))          # sigmoid (exp on EUP)

    xr = gate + x                             # residual add (VPU)

    # Projection head: fc3(relu(fc2(relu(fc1(xr)))))
    h = jnp.maximum(dense(xr, f1_ref, c1_ref), 0.0)
    h = jnp.maximum(dense(h, f2_ref, c2_ref), 0.0)
    y = dense(h, f3_ref, c3_ref)

    # Row-wise L2 normalisation: y / sqrt(sum(y^2))  (no epsilon, as in the module)
    ssq = jnp.sum(y * y, axis=-1, keepdims=True)
    out_ref[...] = (y * jax.lax.rsqrt(ssq)).astype(out_ref.dtype)


@functools.partial(jax.jit, static_argnames=("tb", "single_buffer_weights"))
def _vistoatt_pallas(x, w1, b1, w2, b2, w3, b3, f1, c1, f2, c2, f3, c3,
                     *, tb=128, single_buffer_weights=True):
    B, D = x.shape
    H1 = w1.shape[1]          # 2 * visdim
    Dh = f1.shape[1]          # visdim // 2
    Do = f3.shape[1]          # dim

    # Fixed batch tile: multiple of 8, never larger than (padded) batch.
    tb_eff = _round_up(min(int(tb), _round_up(B, 8)), 8)
    Bp = _round_up(B, tb_eff)
    xp = jnp.pad(x, ((0, Bp - B), (0, 0))) if Bp != B else x
    grid = (Bp // tb_eff,)

    weights = (w1, b1, w2, b2, w3, b3, f1, c1, f2, c2, f3, c3)

    # Constant-index weight specs: request single buffering (they never change
    # across grid steps, so default double-buffering only wastes VMEM).
    weight_pm = pl.Buffered(1) if single_buffer_weights else None

    def wspec(shape):
        if weight_pm is None:
            return pl.BlockSpec(shape, lambda i: (0, 0))
        return pl.BlockSpec(shape, lambda i: (0, 0), pipeline_mode=weight_pm)

    def batch_spec(shape):
        return pl.BlockSpec(shape, lambda i: (i, 0))

    weight_specs = [wspec(w.shape) for w in weights]

    # --- cost estimate (advisory for XLA scheduling) ---
    dots = D * H1 + H1 * H1 + H1 * D + D * Dh + Dh * Dh + Dh * Do
    flops = 2 * Bp * dots + 8 * Bp * D            # matmuls + relu/sigmoid-add/residual
    transcendentals = Bp * D + Bp                 # exp for sigmoid, rsqrt per row
    weight_bytes = sum(int(w.size) * w.dtype.itemsize for w in weights)
    bytes_accessed = int(xp.size) * 4 + Bp * Do * 4 + weight_bytes
    cost = pl.CostEstimate(flops=int(flops),
                           transcendentals=int(transcendentals),
                           bytes_accessed=int(bytes_accessed))

    # --- VMEM budget: what we need (assume 2x weight buffers worst case) + headroom,
    #     capped well below v7x's 64 MiB physical VMEM. ---
    io_vmem = 2 * tb_eff * (D + Do) * 4                      # double-buffered x / out tiles
    act_vmem = 4 * tb_eff * (H1 + D + Dh + Do) * 4           # generous intermediate headroom
    vmem_limit = 2 * weight_bytes + io_vmem + act_vmem + (8 << 20)
    vmem_limit = int(max(min(vmem_limit, 48 << 20), 16 << 20))

    out = pl.pallas_call(
        _vistoatt_kernel,
        out_shape=jax.ShapeDtypeStruct((Bp, Do), jnp.float32),
        grid_spec=pltpu.PrefetchScalarGridSpec(
            num_scalar_prefetch=0,
            grid=grid,
            in_specs=[batch_spec((tb_eff, D))] + weight_specs,
            out_specs=batch_spec((tb_eff, Do)),
        ),
        compiler_params=pltpu.CompilerParams(
            dimension_semantics=("parallel",),
            vmem_limit_bytes=vmem_limit,
        ),
        cost_estimate=cost,
    )(xp, *weights)

    return out[:B] if Bp != B else out


_SINGLE_BUFFER_WEIGHTS_OK = True


def vistoatt_forward(params, x, *, tb=128, weight_dtype=None):
    """JAX wrapper mirroring VistoAtt.forward (self.sigmoid is None)."""
    global _SINGLE_BUFFER_WEIGHTS_OK
    p = dict(params)
    if weight_dtype is not None:
        # Stream weight matrices in reduced precision; biases / accumulate stay f32.
        for k in ("w1", "w2", "w3", "f1", "f2", "f3"):
            p[k] = p[k].astype(weight_dtype)
    args = (x, p["w1"], p["b1"], p["w2"], p["b2"], p["w3"], p["b3"],
            p["f1"], p["c1"], p["f2"], p["c2"], p["f3"], p["c3"])
    if _SINGLE_BUFFER_WEIGHTS_OK:
        try:
            return _vistoatt_pallas(*args, tb=tb, single_buffer_weights=True)
        except Exception:
            # pl.Buffered(1) not supported by this jax/mosaic build; use default
            # double-buffering (correctness identical, slightly more VMEM).
            _SINGLE_BUFFER_WEIGHTS_OK = False
    return _vistoatt_pallas(*args, tb=tb, single_buffer_weights=False)


def init_params(key, *, visdim, dim):
    """weights_init: Linear weights ~ N(0, 0.02), biases = 0."""
    ks = jax.random.split(key, 6)
    n = lambda k, shape: 0.02 * jax.random.normal(k, shape, jnp.float32)
    z = lambda width: jnp.zeros((1, width), jnp.float32)
    h1, dh = 2 * visdim, visdim // 2
    return dict(
        w1=n(ks[0], (visdim, h1)), b1=z(h1),
        w2=n(ks[1], (h1, h1)),     b2=z(h1),
        w3=n(ks[2], (h1, visdim)), b3=z(visdim),
        f1=n(ks[3], (visdim, dh)), c1=z(dh),
        f2=n(ks[4], (dh, dh)),     c2=z(dh),
        f3=n(ks[5], (dh, dim)),    c3=z(dim),
    )


def _reference_forward(params, x):
    relu = lambda v: jnp.maximum(v, 0.0)
    h = relu(x @ params["w1"] + params["b1"])
    h = relu(h @ params["w2"] + params["b2"])
    gate = jax.nn.sigmoid(h @ params["w3"] + params["b3"])
    xr = gate + x
    h = relu(xr @ params["f1"] + params["c1"])
    h = relu(h @ params["f2"] + params["c2"])
    y = h @ params["f3"] + params["c3"]
    return y / jnp.sqrt(jnp.sum(y * y, axis=1, keepdims=True))


if __name__ == "__main__":
    # Small shapes consistent with the module: batch=16, visdim=256 (so the
    # hidden dims 512 / 128 and the 128-wide output are all lane-dense), dim=128.
    B, VISDIM, DIM = 16, 256, 128

    key = jax.random.PRNGKey(0)
    pkey, xkey = jax.random.split(key)
    params = init_params(pkey, visdim=VISDIM, dim=DIM)
    x = jax.random.normal(xkey, (B, VISDIM), jnp.float32)

    # f32 weights; tb=8 -> grid=(2,) so the batch pipeline has >1 step.
    h = vistoatt_forward(params, x, tb=8)
    jax.block_until_ready(h)

    h_ref = _reference_forward(params, x)
    assert h.shape == (B, DIM)
    assert jnp.allclose(h, h_ref, atol=1e-2, rtol=1e-2), float(jnp.max(jnp.abs(h - h_ref)))

    # Optional bf16 weight streaming (mem-bound win); f32 MXU accumulate, looser check.
    h_bf16 = vistoatt_forward(params, x, tb=8, weight_dtype=jnp.bfloat16)
    jax.block_until_ready(h_bf16)
    assert jnp.allclose(h_bf16, h_ref, atol=5e-2, rtol=5e-2), \
        float(jnp.max(jnp.abs(h_bf16 - h_ref)))

    # TODO(synk): the `self.sigmoid is not None` output branch is dead in the
    #             module (sigmoid is always None); only the L2-norm path is kernelised.
    print("KERNEL_OK")
</pallas_src>

<mosaic_0001>
module attributes {stable_mosaic.version = 11 : i64} {
  func.func @_vistoatt_kernel(%arg0: i32, %arg1: memref<8x256xf32, #tpu.memory_space<vmem>>, %arg2: memref<256x512xf32, #tpu.memory_space<vmem>>, %arg3: memref<1x512xf32, #tpu.memory_space<vmem>>, %arg4: memref<512x512xf32, #tpu.memory_space<vmem>>, %arg5: memref<1x512xf32, #tpu.memory_space<vmem>>, %arg6: memref<512x256xf32, #tpu.memory_space<vmem>>, %arg7: memref<1x256xf32, #tpu.memory_space<vmem>>, %arg8: memref<256x128xf32, #tpu.memory_space<vmem>>, %arg9: memref<1x128xf32, #tpu.memory_space<vmem>>, %arg10: memref<128x128xf32, #tpu.memory_space<vmem>>, %arg11: memref<1x128xf32, #tpu.memory_space<vmem>>, %arg12: memref<128x128xf32, #tpu.memory_space<vmem>>, %arg13: memref<1x128xf32, #tpu.memory_space<vmem>>, %arg14: memref<8x128xf32, #tpu.memory_space<vmem>>) attributes {dimension_semantics = [#tpu.dimension_semantics<parallel>], iteration_bounds = array<i64: 2>, scalar_prefetch = 0 : i64, scratch_operands = 0 : i64, tpu.core_type = #tpu.core_type<tc>, window_params = [{transform_indices = @transform_0, window_bounds = array<i64: 8, 256>}, {pipeline_mode = #tpu.pipeline_mode<synchronous>, transform_indices = @transform_1, window_bounds = array<i64: 256, 512>}, {pipeline_mode = #tpu.pipeline_mode<synchronous>, transform_indices = @transform_2, window_bounds = array<i64: 1, 512>}, {pipeline_mode = #tpu.pipeline_mode<synchronous>, transform_indices = @transform_3, window_bounds = array<i64: 512, 512>}, {pipeline_mode = #tpu.pipeline_mode<synchronous>, transform_indices = @transform_4, window_bounds = array<i64: 1, 512>}, {pipeline_mode = #tpu.pipeline_mode<synchronous>, transform_indices = @transform_5, window_bounds = array<i64: 512, 256>}, {pipeline_mode = #tpu.pipeline_mode<synchronous>, transform_indices = @transform_6, window_bounds = array<i64: 1, 256>}, {pipeline_mode = #tpu.pipeline_mode<synchronous>, transform_indices = @transform_7, window_bounds = array<i64: 256, 128>}, {pipeline_mode = #tpu.pipeline_mode<synchronous>, transform_indices = @transform_8, window_bounds = array<i64: 1, 128>}, {pipeline_mode = #tpu.pipeline_mode<synchronous>, transform_indices = @transform_9, window_bounds = array<i64: 128, 128>}, {pipeline_mode = #tpu.pipeline_mode<synchronous>, transform_indices = @transform_10, window_bounds = array<i64: 1, 128>}, {pipeline_mode = #tpu.pipeline_mode<synchronous>, transform_indices = @transform_11, window_bounds = array<i64: 128, 128>}, {pipeline_mode = #tpu.pipeline_mode<synchronous>, transform_indices = @transform_12, window_bounds = array<i64: 1, 128>}, {transform_indices = @transform_13, window_bounds = array<i64: 8, 128>}]} {
    %c0 = arith.constant 0 : index
    %c0_0 = arith.constant 0 : index
    %0 = vector.load %arg1[%c0, %c0_0] : memref<8x256xf32, #tpu.memory_space<vmem>>, vector<8x256xf32>
    %c0_1 = arith.constant 0 : index
    %c0_2 = arith.constant 0 : index
    %1 = vector.load %arg2[%c0_1, %c0_2] : memref<256x512xf32, #tpu.memory_space<vmem>>, vector<256x512xf32>
    %cst = arith.constant dense<0.000000e+00> : vector<8x512xf32>
    %2 = tpu.matmul %0, %1, %cst {dimension_numbers = #tpu.dot_dimension_numbers<[1], [0], [0], [1], [0, 0, 1, 1], [], []>} : vector<8x256xf32>, vector<256x512xf32>, vector<8x512xf32> -> vector<8x512xf32>
    %c0_3 = arith.constant 0 : index
    %c0_4 = arith.constant 0 : index
    %3 = vector.load %arg3[%c0_3, %c0_4] : memref<1x512xf32, #tpu.memory_space<vmem>>, vector<1x512xf32>
    %4 = vector.broadcast %3 : vector<1x512xf32> to vector<8x512xf32>
    %5 = arith.addf %2, %4 : vector<8x512xf32>
    %cst_5 = arith.constant 0.000000e+00 : f32
    %6 = vector.broadcast %cst_5 : f32 to vector<8x512xf32>
    %7 = arith.maximumf %5, %6 : vector<8x512xf32>
    %c0_6 = arith.constant 0 : index
    %c0_7 = arith.constant 0 : index
    %8 = vector.load %arg4[%c0_6, %c0_7] : memref<512x512xf32, #tpu.memory_space<vmem>>, vector<512x512xf32>
    %cst_8 = arith.constant dense<0.000000e+00> : vector<8x512xf32>
    %9 = tpu.matmul %7, %8, %cst_8 {dimension_numbers = #tpu.dot_dimension_numbers<[1], [0], [0], [1], [0, 0, 1, 1], [], []>} : vector<8x512xf32>, vector<512x512xf32>, vector<8x512xf32> -> vector<8x512xf32>
    %c0_9 = arith.constant 0 : index
    %c0_10 = arith.constant 0 : index
    %10 = vector.load %arg5[%c0_9, %c0_10] : memref<1x512xf32, #tpu.memory_space<vmem>>, vector<1x512xf32>
    %11 = vector.broadcast %10 : vector<1x512xf32> to vector<8x512xf32>
    %12 = arith.addf %9, %11 : vector<8x512xf32>
    %cst_11 = arith.constant 0.000000e+00 : f32
    %13 = vector.broadcast %cst_11 : f32 to vector<8x512xf32>
    %14 = arith.maximumf %12, %13 : vector<8x512xf32>
    %c0_12 = arith.constant 0 : index
    %c0_13 = arith.constant 0 : index
    %15 = vector.load %arg6[%c0_12, %c0_13] : memref<512x256xf32, #tpu.memory_space<vmem>>, vector<512x256xf32>
    %cst_14 = arith.constant dense<0.000000e+00> : vector<8x256xf32>
    %16 = tpu.matmul %14, %15, %cst_14 {dimension_numbers = #tpu.dot_dimension_numbers<[1], [0], [0], [1], [0, 0, 1, 1], [], []>} : vector<8x512xf32>, vector<512x256xf32>, vector<8x256xf32> -> vector<8x256xf32>
    %c0_15 = arith.constant 0 : index
    %c0_16 = arith.constant 0 : index
    %17 = vector.load %arg7[%c0_15, %c0_16] : memref<1x256xf32, #tpu.memory_space<vmem>>, vector<1x256xf32>
    %18 = vector.broadcast %17 : vector<1x256xf32> to vector<8x256xf32>
    %19 = arith.addf %16, %18 : vector<8x256xf32>
    %cst_17 = arith.constant 0.000000e+00 : f32
    %20 = vector.broadcast %cst_17 : f32 to vector<8x256xf32>
    %21 = arith.subf %20, %19 : vector<8x256xf32>
    %22 = math.exp %21 : vector<8x256xf32>
    %cst_18 = arith.constant 1.000000e+00 : f32
    %23 = vector.broadcast %cst_18 : f32 to vector<8x256xf32>
    %24 = arith.addf %23, %22 : vector<8x256xf32>
    %cst_19 = arith.constant 1.000000e+00 : f32
    %25 = vector.broadcast %cst_19 : f32 to vector<8x256xf32>
    %26 = arith.divf %25, %24 : vector<8x256xf32>
    %27 = arith.addf %26, %0 : vector<8x256xf32>
    %c0_20 = arith.constant 0 : index
    %c0_21 = arith.constant 0 : index
    %28 = vector.load %arg8[%c0_20, %c0_21] : memref<256x128xf32, #tpu.memory_space<vmem>>, vector<256x128xf32>
    %cst_22 = arith.constant dense<0.000000e+00> : vector<8x128xf32>
    %29 = tpu.matmul %27, %28, %cst_22 {dimension_numbers = #tpu.dot_dimension_numbers<[1], [0], [0], [1], [0, 0, 1, 1], [], []>} : vector<8x256xf32>, vector<256x128xf32>, vector<8x128xf32> -> vector<8x128xf32>
    %c0_23 = arith.constant 0 : index
    %c0_24 = arith.constant 0 : index
    %30 = vector.load %arg9[%c0_23, %c0_24] : memref<1x128xf32, #tpu.memory_space<vmem>>, vector<1x128xf32>
    %31 = vector.broadcast %30 : vector<1x128xf32> to vector<8x128xf32>
    %32 = arith.addf %29, %31 : vector<8x128xf32>
    %cst_25 = arith.constant 0.000000e+00 : f32
    %33 = vector.broadcast %cst_25 : f32 to vector<8x128xf32>
    %34 = arith.maximumf %32, %33 : vector<8x128xf32>
    %c0_26 = arith.constant 0 : index
    %c0_27 = arith.constant 0 : index
    %35 = vector.load %arg10[%c0_26, %c0_27] : memref<128x128xf32, #tpu.memory_space<vmem>>, vector<128x128xf32>
    %cst_28 = arith.constant dense<0.000000e+00> : vector<8x128xf32>
    %36 = tpu.matmul %34, %35, %cst_28 {dimension_numbers = #tpu.dot_dimension_numbers<[1], [0], [0], [1], [0, 0, 1, 1], [], []>} : vector<8x128xf32>, vector<128x128xf32>, vector<8x128xf32> -> vector<8x128xf32>
    %c0_29 = arith.constant 0 : index
    %c0_30 = arith.constant 0 : index
    %37 = vector.load %arg11[%c0_29, %c0_30] : memref<1x128xf32, #tpu.memory_space<vmem>>, vector<1x128xf32>
    %38 = vector.broadcast %37 : vector<1x128xf32> to vector<8x128xf32>
    %39 = arith.addf %36, %38 : vector<8x128xf32>
    %cst_31 = arith.constant 0.000000e+00 : f32
    %40 = vector.broadcast %cst_31 : f32 to vector<8x128xf32>
    %41 = arith.maximumf %39, %40 : vector<8x128xf32>
    %c0_32 = arith.constant 0 : index
    %c0_33 = arith.constant 0 : index
    %42 = vector.load %arg12[%c0_32, %c0_33] : memref<128x128xf32, #tpu.memory_space<vmem>>, vector<128x128xf32>
    %cst_34 = arith.constant dense<0.000000e+00> : vector<8x128xf32>
    %43 = tpu.matmul %41, %42, %cst_34 {dimension_numbers = #tpu.dot_dimension_numbers<[1], [0], [0], [1], [0, 0, 1, 1], [], []>} : vector<8x128xf32>, vector<128x128xf32>, vector<8x128xf32> -> vector<8x128xf32>
    %c0_35 = arith.constant 0 : index
    %c0_36 = arith.constant 0 : index
    %44 = vector.load %arg13[%c0_35, %c0_36] : memref<1x128xf32, #tpu.memory_space<vmem>>, vector<1x128xf32>
    %45 = vector.broadcast %44 : vector<1x128xf32> to vector<8x128xf32>
    %46 = arith.addf %43, %45 : vector<8x128xf32>
    %47 = arith.mulf %46, %46 : vector<8x128xf32>
    %cst_37 = arith.constant dense<0.000000e+00> : vector<8xf32>
    %48 = vector.multi_reduction <add>, %47, %cst_37 [1] : vector<8x128xf32> to vector<8xf32>
    %49 = vector.shape_cast %48 : vector<8xf32> to vector<8x1xf32>
    %50 = math.rsqrt %49 : vector<8x1xf32>
    %51 = vector.broadcast %50 : vector<8x1xf32> to vector<8x128xf32>
    %52 = arith.mulf %46, %51 : vector<8x128xf32>
    %c0_38 = arith.constant 0 : index
    %c0_39 = arith.constant 0 : index
    %53 = vector.load %arg14[%c0_38, %c0_39] : memref<8x128xf32, #tpu.memory_space<vmem>>, vector<8x128xf32>
    tpu.vector_store %arg14[%c0_38, %c0_39], %52 {strides = array<i32>} : memref<8x128xf32, #tpu.memory_space<vmem>>, vector<8x128xf32>,
    return
  }
  func.func @transform_0(%arg0: i32) -> (i32, i32) {
    %c0_i32 = arith.constant 0 : i32
    %c0_i32_0 = arith.constant 0 : i32
    return %arg0, %c0_i32 : i32, i32
  }
  func.func @transform_1(%arg0: i32) -> (i32, i32) {
    %c0_i32 = arith.constant 0 : i32
    %c0_i32_0 = arith.constant 0 : i32
    %c0_i32_1 = arith.constant 0 : i32
    return %c0_i32, %c0_i32_0 : i32, i32
  }
  func.func @transform_2(%arg0: i32) -> (i32, i32) {
    %c0_i32 = arith.constant 0 : i32
    %c0_i32_0 = arith.constant 0 : i32
    %c0_i32_1 = arith.constant 0 : i32
    return %c0_i32, %c0_i32_0 : i32, i32
  }
  func.func @transform_3(%arg0: i32) -> (i32, i32) {
    %c0_i32 = arith.constant 0 : i32
    %c0_i32_0 = arith.constant 0 : i32
    %c0_i32_1 = arith.constant 0 : i32
    return %c0_i32, %c0_i32_0 : i32, i32
  }
  func.func @transform_4(%arg0: i32) -> (i32, i32) {
    %c0_i32 = arith.constant 0 : i32
    %c0_i32_0 = arith.constant 0 : i32
    %c0_i32_1 = arith.constant 0 : i32
    return %c0_i32, %c0_i32_0 : i32, i32
  }
  func.func @transform_5(%arg0: i32) -> (i32, i32) {
    %c0_i32 = arith.constant 0 : i32
    %c0_i32_0 = arith.constant 0 : i32
    %c0_i32_1 = arith.constant 0 : i32
    return %c0_i32, %c0_i32_0 : i32, i32
  }
  func.func @transform_6(%arg0: i32) -> (i32, i32) {
    %c0_i32 = arith.constant 0 : i32
    %c0_i32_0 = arith.constant 0 : i32
    %c0_i32_1 = arith.constant 0 : i32
    return %c0_i32, %c0_i32_0 : i32, i32
  }
  func.func @transform_7(%arg0: i32) -> (i32, i32) {
    %c0_i32 = arith.constant 0 : i32
    %c0_i32_0 = arith.constant 0 : i32
    %c0_i32_1 = arith.constant 0 : i32
    return %c0_i32, %c0_i32_0 : i32, i32
  }
  func.func @transform_8(%arg0: i32) -> (i32, i32) {
    %c0_i32 = arith.constant 0 : i32
    %c0_i32_0 = arith.constant 0 : i32
    %c0_i32_1 = arith.constant 0 : i32
    return %c0_i32, %c0_i32_0 : i32, i32
  }
  func.func @transform_9(%arg0: i32) -> (i32, i32) {
    %c0_i32 = arith.constant 0 : i32
    %c0_i32_0 = arith.constant 0 : i32
    %c0_i32_1 = arith.constant 0 : i32
    return %c0_i32, %c0_i32_0 : i32, i32
  }
  func.func @transform_10(%arg0: i32) -> (i32, i32) {
    %c0_i32 = arith.constant 0 : i32
    %c0_i32_0 = arith.constant 0 : i32
    %c0_i32_1 = arith.constant 0 : i32
    return %c0_i32, %c0_i32_0 : i32, i32
  }
  func.func @transform_11(%arg0: i32) -> (i32, i32) {
    %c0_i32 = arith.constant 0 : i32
    %c0_i32_0 = arith.constant 0 : i32
    %c0_i32_1 = arith.constant 0 : i32
    return %c0_i32, %c0_i32_0 : i32, i32
  }
  func.func @transform_12(%arg0: i32) -> (i32, i32) {
    %c0_i32 = arith.constant 0 : i32
    %c0_i32_0 = arith.constant 0 : i32
    %c0_i32_1 = arith.constant 0 : i32
    return %c0_i32, %c0_i32_0 : i32, i32
  }
  func.func @transform_13(%arg0: i32) -> (i32, i32) {
    %c0_i32 = arith.constant 0 : i32
    %c0_i32_0 = arith.constant 0 : i32
    return %arg0, %c0_i32 : i32, i32
  }
}

module attributes {stable_mosaic.version = 11 : i64} {
  func.func @_vistoatt_kernel(%arg0: i32, %arg1: memref<8x256xf32, #tpu.memory_space<vmem>>, %arg2: memref<256x512xf32, #tpu.memory_space<vmem>>, %arg3: memref<1x512xf32, #tpu.memory_space<vmem>>, %arg4: memref<512x512xf32, #tpu.memory_space<vmem>>, %arg5: memref<1x512xf32, #tpu.memory_space<vmem>>, %arg6: memref<512x256xf32, #tpu.memory_space<vmem>>, %arg7: memref<1x256xf32, #tpu.memory_space<vmem>>, %arg8: memref<256x128xf32, #tpu.memory_space<vmem>>, %arg9: memref<1x128xf32, #tpu.memory_space<vmem>>, %arg10: memref<128x128xf32, #tpu.memory_space<vmem>>, %arg11: memref<1x128xf32, #tpu.memory_space<vmem>>, %arg12: memref<128x128xf32, #tpu.memory_space<vmem>>, %arg13: memref<1x128xf32, #tpu.memory_space<vmem>>, %arg14: memref<8x128xf32, #tpu.memory_space<vmem>>) attributes {dimension_semantics = [#tpu.dimension_semantics<parallel>], iteration_bounds = array<i64: 2>, scalar_prefetch = 0 : i64, scratch_operands = 0 : i64, tpu.core_type = #tpu.core_type<tc>, window_params = [{transform_indices = @transform_0, window_bounds = array<i64: 8, 256>}, {pipeline_mode = #tpu.pipeline_mode<synchronous>, transform_indices = @transform_1, window_bounds = array<i64: 256, 512>}, {pipeline_mode = #tpu.pipeline_mode<synchronous>, transform_indices = @transform_2, window_bounds = array<i64: 1, 512>}, {pipeline_mode = #tpu.pipeline_mode<synchronous>, transform_indices = @transform_3, window_bounds = array<i64: 512, 512>}, {pipeline_mode = #tpu.pipeline_mode<synchronous>, transform_indices = @transform_4, window_bounds = array<i64: 1, 512>}, {pipeline_mode = #tpu.pipeline_mode<synchronous>, transform_indices = @transform_5, window_bounds = array<i64: 512, 256>}, {pipeline_mode = #tpu.pipeline_mode<synchronous>, transform_indices = @transform_6, window_bounds = array<i64: 1, 256>}, {pipeline_mode = #tpu.pipeline_mode<synchronous>, transform_indices = @transform_7, window_bounds = array<i64: 256, 128>}, {pipeline_mode = #tpu.pipeline_mode<synchronous>, transform_indices = @transform_8, window_bounds = array<i64: 1, 128>}, {pipeline_mode = #tpu.pipeline_mode<synchronous>, transform_indices = @transform_9, window_bounds = array<i64: 128, 128>}, {pipeline_mode = #tpu.pipeline_mode<synchronous>, transform_indices = @transform_10, window_bounds = array<i64: 1, 128>}, {pipeline_mode = #tpu.pipeline_mode<synchronous>, transform_indices = @transform_11, window_bounds = array<i64: 128, 128>}, {pipeline_mode = #tpu.pipeline_mode<synchronous>, transform_indices = @transform_12, window_bounds = array<i64: 1, 128>}, {transform_indices = @transform_13, window_bounds = array<i64: 8, 128>}]} {
    %c0 = arith.constant 0 : index
    %c0_0 = arith.constant 0 : index
    %0 = vector.load %arg1[%c0, %c0_0] : memref<8x256xf32, #tpu.memory_space<vmem>>, vector<8x256xf32>
    %c0_1 = arith.constant 0 : index
    %c0_2 = arith.constant 0 : index
    %1 = vector.load %arg2[%c0_1, %c0_2] : memref<256x512xf32, #tpu.memory_space<vmem>>, vector<256x512xf32>
    %cst = arith.constant dense<0.000000e+00> : vector<8x512xf32>
    %2 = tpu.matmul %0, %1, %cst {dimension_numbers = #tpu.dot_dimension_numbers<[1], [0], [0], [1], [0, 0, 1, 1], [], []>} : vector<8x256xf32>, vector<256x512xf32>, vector<8x512xf32> -> vector<8x512xf32>
    %c0_3 = arith.constant 0 : index
    %c0_4 = arith.constant 0 : index
    %3 = vector.load %arg3[%c0_3, %c0_4] : memref<1x512xf32, #tpu.memory_space<vmem>>, vector<1x512xf32>
    %4 = vector.broadcast %3 : vector<1x512xf32> to vector<8x512xf32>
    %5 = arith.addf %2, %4 : vector<8x512xf32>
    %cst_5 = arith.constant 0.000000e+00 : f32
    %6 = vector.broadcast %cst_5 : f32 to vector<8x512xf32>
    %7 = arith.maximumf %5, %6 : vector<8x512xf32>
    %c0_6 = arith.constant 0 : index
    %c0_7 = arith.constant 0 : index
    %8 = vector.load %arg4[%c0_6, %c0_7] : memref<512x512xf32, #tpu.memory_space<vmem>>, vector<512x512xf32>
    %cst_8 = arith.constant dense<0.000000e+00> : vector<8x512xf32>
    %9 = tpu.matmul %7, %8, %cst_8 {dimension_numbers = #tpu.dot_dimension_numbers<[1], [0], [0], [1], [0, 0, 1, 1], [], []>} : vector<8x512xf32>, vector<512x512xf32>, vector<8x512xf32> -> vector<8x512xf32>
    %c0_9 = arith.constant 0 : index
    %c0_10 = arith.constant 0 : index
    %10 = vector.load %arg5[%c0_9, %c0_10] : memref<1x512xf32, #tpu.memory_space<vmem>>, vector<1x512xf32>
    %11 = vector.broadcast %10 : vector<1x512xf32> to vector<8x512xf32>
    %12 = arith.addf %9, %11 : vector<8x512xf32>
    %cst_11 = arith.constant 0.000000e+00 : f32
    %13 = vector.broadcast %cst_11 : f32 to vector<8x512xf32>
    %14 = arith.maximumf %12, %13 : vector<8x512xf32>
    %c0_12 = arith.constant 0 : index
    %c0_13 = arith.constant 0 : index
    %15 = vector.load %arg6[%c0_12, %c0_13] : memref<512x256xf32, #tpu.memory_space<vmem>>, vector<512x256xf32>
    %cst_14 = arith.constant dense<0.000000e+00> : vector<8x256xf32>
    %16 = tpu.matmul %14, %15, %cst_14 {dimension_numbers = #tpu.dot_dimension_numbers<[1], [0], [0], [1], [0, 0, 1, 1], [], []>} : vector<8x512xf32>, vector<512x256xf32>, vector<8x256xf32> -> vector<8x256xf32>
    %c0_15 = arith.constant 0 : index
    %c0_16 = arith.constant 0 : index
    %17 = vector.load %arg7[%c0_15, %c0_16] : memref<1x256xf32, #tpu.memory_space<vmem>>, vector<1x256xf32>
    %18 = vector.broadcast %17 : vector<1x256xf32> to vector<8x256xf32>
    %19 = arith.addf %16, %18 : vector<8x256xf32>
    %cst_17 = arith.constant 0.000000e+00 : f32
    %20 = vector.broadcast %cst_17 : f32 to vector<8x256xf32>
    %21 = arith.subf %20, %19 : vector<8x256xf32>
    %22 = math.exp %21 : vector<8x256xf32>
    %cst_18 = arith.constant 1.000000e+00 : f32
    %23 = vector.broadcast %cst_18 : f32 to vector<8x256xf32>
    %24 = arith.addf %23, %22 : vector<8x256xf32>
    %cst_19 = arith.constant 1.000000e+00 : f32
    %25 = vector.broadcast %cst_19 : f32 to vector<8x256xf32>
    %26 = arith.divf %25, %24 : vector<8x256xf32>
    %27 = arith.addf %26, %0 : vector<8x256xf32>
    %c0_20 = arith.constant 0 : index
    %c0_21 = arith.constant 0 : index
    %28 = vector.load %arg8[%c0_20, %c0_21] : memref<256x128xf32, #tpu.memory_space<vmem>>, vector<256x128xf32>
    %cst_22 = arith.constant dense<0.000000e+00> : vector<8x128xf32>
    %29 = tpu.matmul %27, %28, %cst_22 {dimension_numbers = #tpu.dot_dimension_numbers<[1], [0], [0], [1], [0, 0, 1, 1], [], []>} : vector<8x256xf32>, vector<256x128xf32>, vector<8x128xf32> -> vector<8x128xf32>
    %c0_23 = arith.constant 0 : index
    %c0_24 = arith.constant 0 : index
    %30 = vector.load %arg9[%c0_23, %c0_24] : memref<1x128xf32, #tpu.memory_space<vmem>>, vector<1x128xf32>
    %31 = vector.broadcast %30 : vector<1x128xf32> to vector<8x128xf32>
    %32 = arith.addf %29, %31 : vector<8x128xf32>
    %cst_25 = arith.constant 0.000000e+00 : f32
    %33 = vector.broadcast %cst_25 : f32 to vector<8x128xf32>
    %34 = arith.maximumf %32, %33 : vector<8x128xf32>
    %c0_26 = arith.constant 0 : index
    %c0_27 = arith.constant 0 : index
    %35 = vector.load %arg10[%c0_26, %c0_27] : memref<128x128xf32, #tpu.memory_space<vmem>>, vector<128x128xf32>
    %cst_28 = arith.constant dense<0.000000e+00> : vector<8x128xf32>
    %36 = tpu.matmul %34, %35, %cst_28 {dimension_numbers = #tpu.dot_dimension_numbers<[1], [0], [0], [1], [0, 0, 1, 1], [], []>} : vector<8x128xf32>, vector<128x128xf32>, vector<8x128xf32> -> vector<8x128xf32>
    %c0_29 = arith.constant 0 : index
    %c0_30 = arith.constant 0 : index
    %37 = vector.load %arg11[%c0_29, %c0_30] : memref<1x128xf32, #tpu.memory_space<vmem>>, vector<1x128xf32>
    %38 = vector.broadcast %37 : vector<1x128xf32> to vector<8x128xf32>
    %39 = arith.addf %36, %38 : vector<8x128xf32>
    %cst_31 = arith.constant 0.000000e+00 : f32
    %40 = vector.broadcast %cst_31 : f32 to vector<8x128xf32>
    %41 = arith.maximumf %39, %40 : vector<8x128xf32>
    %c0_32 = arith.constant 0 : index
    %c0_33 = arith.constant 0 : index
    %42 = vector.load %arg12[%c0_32, %c0_33] : memref<128x128xf32, #tpu.memory_space<vmem>>, vector<128x128xf32>
    %cst_34 = arith.constant dense<0.000000e+00> : vector<8x128xf32>
    %43 = tpu.matmul %41, %42, %cst_34 {dimension_numbers = #tpu.dot_dimension_numbers<[1], [0], [0], [1], [0, 0, 1, 1], [], []>} : vector<8x128xf32>, vector<128x128xf32>, vector<8x128xf32> -> vector<8x128xf32>
    %c0_35 = arith.constant 0 : index
    %c0_36 = arith.constant 0 : index
    %44 = vector.load %arg13[%c0_35, %c0_36] : memref<1x128xf32, #tpu.memory_space<vmem>>, vector<1x128xf32>
    %45 = vector.broadcast %44 : vector<1x128xf32> to vector<8x128xf32>
    %46 = arith.addf %43, %45 : vector<8x128xf32>
    %47 = arith.mulf %46, %46 : vector<8x128xf32>
    %cst_37 = arith.constant dense<0.000000e+00> : vector<8xf32>
    %48 = vector.multi_reduction <add>, %47, %cst_37 [1] : vector<8x128xf32> to vector<8xf32>
    %49 = vector.shape_cast %48 : vector<8xf32> to vector<8x1xf32>
    %50 = math.rsqrt %49 : vector<8x1xf32>
    %51 = vector.broadcast %50 : vector<8x1xf32> to vector<8x128xf32>
    %52 = arith.mulf %46, %51 : vector<8x128xf32>
    %c0_38 = arith.constant 0 : index
    %c0_39 = arith.constant 0 : index
    %53 = vector.load %arg14[%c0_38, %c0_39] : memref<8x128xf32, #tpu.memory_space<vmem>>, vector<8x128xf32>
    tpu.vector_store %arg14[%c0_38, %c0_39], %52 {strides = array<i32>} : memref<8x128xf32, #tpu.memory_space<vmem>>, vector<8x128xf32>,
    return
  }
  func.func @transform_0(%arg0: i32) -> (i32, i32) {
    %c0_i32 = arith.constant 0 : i32
    %c0_i32_0 = arith.constant 0 : i32
    return %arg0, %c0_i32 : i32, i32
  }
  func.func @transform_1(%arg0: i32) -> (i32, i32) {
    %c0_i32 = arith.constant 0 : i32
    %c0_i32_0 = arith.constant 0 : i32
    %c0_i32_1 = arith.constant 0 : i32
    return %c0_i32, %c0_i32_0 : i32, i32
  }
  func.func @transform_2(%arg0: i32) -> (i32, i32) {
    %c0_i32 = arith.constant 0 : i32
    %c0_i32_0 = arith.constant 0 : i32
    %c0_i32_1 = arith.constant 0 : i32
    return %c0_i32, %c0_i32_0 : i32, i32
  }
  func.func @transform_3(%arg0: i32) -> (i32, i32) {
    %c0_i32 = arith.constant 0 : i32
    %c0_i32_0 = arith.constant 0 : i32
    %c0_i32_1 = arith.constant 0 : i32
    return %c0_i32, %c0_i32_0 : i32, i32
  }
  func.func @transform_4(%arg0: i32) -> (i32, i32) {
    %c0_i32 = arith.constant 0 : i32
    %c0_i32_0 = arith.constant 0 : i32
    %c0_i32_1 = arith.constant 0 : i32
    return %c0_i32, %c0_i32_0 : i32, i32
  }
  func.func @transform_5(%arg0: i32) -> (i32, i32) {
    %c0_i32 = arith.constant 0 : i32
    %c0_i32_0 = arith.constant 0 : i32
    %c0_i32_1 = arith.constant 0 : i32
    return %c0_i32, %c0_i32_0 : i32, i32
  }
  func.func @transform_6(%arg0: i32) -> (i32, i32) {
    %c0_i32 = arith.constant 0 : i32
    %c0_i32_0 = arith.constant 0 : i32
    %c0_i32_1 = arith.constant 0 : i32
    return %c0_i32, %c0_i32_0 : i32, i32
  }
  func.func @transform_7(%arg0: i32) -> (i32, i32) {
    %c0_i32 = arith.constant 0 : i32
    %c0_i32_0 = arith.constant 0 : i32
    %c0_i32_1 = arith.constant 0 : i32
    return %c0_i32, %c0_i32_0 : i32, i32
  }
  func.func @transform_8(%arg0: i32) -> (i32, i32) {
    %c0_i32 = arith.constant 0 : i32
    %c0_i32_0 = arith.constant 0 : i32
    %c0_i32_1 = arith.constant 0 : i32
    return %c0_i32, %c0_i32_0 : i32, i32
  }
  func.func @transform_9(%arg0: i32) -> (i32, i32) {
    %c0_i32 = arith.constant 0 : i32
    %c0_i32_0 = arith.constant 0 : i32
    %c0_i32_1 = arith.constant 0 : i32
    return %c0_i32, %c0_i32_0 : i32, i32
  }
  func.func @transform_10(%arg0: i32) -> (i32, i32) {
    %c0_i32 = arith.constant 0 : i32
    %c0_i32_0 = arith.constant 0 : i32
    %c0_i32_1 = arith.constant 0 : i32
    return %c0_i32, %c0_i32_0 : i32, i32
  }
  func.func @transform_11(%arg0: i32) -> (i32, i32) {
    %c0_i32 = arith.constant 0 : i32
    %c0_i32_0 = arith.constant 0 : i32
    %c0_i32_1 = arith.constant 0 : i32
    return %c0_i32, %c0_i32_0 : i32, i32
  }
  func.func @transform_12(%arg0: i32) -> (i32, i32) {
    %c0_i32 = arith.constant 0 : i32
    %c0_i32_0 = arith.constant 0 : i32
    %c0_i32_1 = arith.constant 0 : i32
    return %c0_i32, %c0_i32_0 : i32, i32
  }
  func.func @transform_13(%arg0: i32) -> (i32, i32) {
    %c0_i32 = arith.constant 0 : i32
    %c0_i32_0 = arith.constant 0 : i32
    return %arg0, %c0_i32 : i32, i32
  }
}

</mosaic_0001>

<llo_original>
// kernel: _vistoatt_pallas.1
$region0: #{_vistoatt_pallas.1}
  #allocation0 [shape = 'u32[]', space=smem, size = 0x4, offset = 0x4, fixed_abs, tag = 'smem constant byte address 0x4 - core index']
  #allocation1 [shape = 'u32[72,128]{1,0:T(1,128)}', space=vmem, size = 0x9000, scoped, tag = 'internal scratch']
  %s0 = inlined_call_operand.hbm [shape: f32[16,256], index: 0, kind: input, shape index: {}]
  %s1 = inlined_call_operand.hbm [shape: f32[256,512], index: 1, kind: input, shape index: {}]
  %s2 = inlined_call_operand.hbm [shape: f32[1,512], index: 2, kind: input, shape index: {}]
  %s3 = inlined_call_operand.hbm [shape: f32[512,512], index: 3, kind: input, shape index: {}]
  %s4 = inlined_call_operand.hbm [shape: f32[1,512], index: 4, kind: input, shape index: {}]
  %s5 = inlined_call_operand.hbm [shape: f32[512,256], index: 5, kind: input, shape index: {}]
  %s6 = inlined_call_operand.vmem [shape: f32[1,256], index: 6, kind: input, shape index: {}]
  %s7 = inlined_call_operand.hbm [shape: f32[256,128], index: 7, kind: input, shape index: {}]
  %s8 = inlined_call_operand.vmem [shape: f32[1,128], index: 8, kind: input, shape index: {}]
  %s9 = inlined_call_operand.hbm [shape: f32[128,128], index: 9, kind: input, shape index: {}]
  %s10 = inlined_call_operand.vmem [shape: f32[1,128], index: 10, kind: input, shape index: {}]
  %s11 = inlined_call_operand.hbm [shape: f32[128,128], index: 11, kind: input, shape index: {}]
  %s12 = inlined_call_operand.vmem [shape: f32[1,128], index: 12, kind: input, shape index: {}]
  %s13 = inlined_call_operand.hbm [shape: f32[16,128], index: 13, kind: output, shape index: {}]
  %s14 = sld [smem:[#allocation0]]
  $region121: #{_vistoatt_pallas.1} parent=0
    _
  %s16 = ssub.s32 1, %s14
  %s17 = scalar_select 0, %s16, %s14
  $region1: #{_vistoatt_pallas.1} parent=0
    #allocation2 [shape = 'u8[16384]{0}', space=vmem, size = 0x4000, scoped, tag = 'input window, operand 0']
    #allocation3 [shape = 's32[2]{0}', space=sflag, size = 0x8, scoped, tag = 'scoped memory for _vistoatt_pallas.1']
    #allocation4 [shape = 's32[2]{0}', space=sflag, size = 0x8, scoped, tag = 'scoped memory for _vistoatt_pallas.1']
    #allocation5 [shape = 'u8[524288]{0}', space=vmem, size = 0x80000, scoped, tag = 'input window, operand 1, single buffered']
    #allocation6 [shape = 's32[1]{0}', space=sflag, size = 0x4, scoped, tag = 'scoped memory for _vistoatt_pallas.1']
    #allocation7 [shape = 'u8[2048]{0}', space=vmem, size = 0x800, scoped, tag = 'input window, operand 2, single buffered']
    #allocation8 [shape = 'u8[1048576]{0}', space=vmem, size = 0x100000, scoped, tag = 'input window, operand 3, single buffered']
    #allocation9 [shape = 's32[1]{0}', space=sflag, size = 0x4, scoped, tag = 'scoped memory for _vistoatt_pallas.1']
    #allocation10 [shape = 'u8[2048]{0}', space=vmem, size = 0x800, scoped, tag = 'input window, operand 4, single buffered']
    #allocation11 [shape = 'u8[524288]{0}', space=vmem, size = 0x80000, scoped, tag = 'input window, operand 5, single buffered']
    #allocation12 [shape = 's32[1]{0}', space=sflag, size = 0x4, scoped, tag = 'scoped memory for _vistoatt_pallas.1']
    #allocation13 [shape = 'u8[131072]{0}', space=vmem, size = 0x20000, scoped, tag = 'input window, operand 7, single buffered']
    #allocation14 [shape = 'u8[65536]{0}', space=vmem, size = 0x10000, scoped, tag = 'input window, operand 9, single buffered']
    #allocation15 [shape = 's32[1]{0}', space=sflag, size = 0x4, scoped, tag = 'scoped memory for _vistoatt_pallas.1']
    #allocation16 [shape = 'u8[65536]{0}', space=vmem, size = 0x10000, scoped, tag = 'input window, operand 11, single buffered']
    #allocation17 [shape = 'u8[8192]{0}', space=vmem, size = 0x2000, scoped, tag = 'output window, operand 0']
    %18 = vsyncpa [#allocation3], 0
    %s19 = scalar_lea.sflag [#allocation3], 1
    %20 = vsyncpa %s19, 0
    %21 = vsyncpa [#allocation6], 0
    %22 = vsyncpa [#allocation9], 0
    %23 = vsyncpa [#allocation12], 0
    %24 = vsyncpa [#allocation15], 0
    %25 = vsyncpa [#allocation4], 0
    %s26 = scalar_lea.sflag [#allocation4], 1
    %27 = vsyncpa %s26, 0
    loop: start=0, step=1, limit=4
    $region2: #{_vistoatt_pallas.1} parent=1 // loop_pre_header
      _
    $region3: #{_vistoatt_pallas.1} parent=1 // loop_header
      %s29 = sphi 0, %s33
      %p30 = scmp.ge.s32.totalorder %s29, 4
      %s39 = sphi 0, %s41
      %s42 = sphi 0, %s39
      %s43 = sphi 0, %s42
      %s59 = sphi 0, %s43
      %s63 = sphi 0, %s63
      %s65 = sphi 0, %s63
      %s66 = sphi 0, %s65
      %s80 = sphi 0, %s66
      %s84 = sphi 0, %s84
      %s86 = sphi 0, %s84
      %s87 = sphi 0, %s86
      %s101 = sphi 0, %s87
      %s105 = sphi 0, %s105
      %s107 = sphi 0, %s105
      %s108 = sphi 0, %s107
      %s122 = sphi 0, %s108
      %s126 = sphi 0, %s126
      %s128 = sphi 0, %s126
      %s129 = sphi 0, %s128
      %s143 = sphi 0, %s129
      %s147 = sphi 0, %s147
      %s149 = sphi 0, %s147
      %s150 = sphi 0, %s149
      %s164 = sphi 0, %s150
      %s168 = sphi 0, %s168
      %s170 = sphi 0, %s168
      %s171 = sphi 0, %s170
      %s185 = sphi 0, %s171
      %s189 = sphi 0, %s189
      %s191 = sphi 0, %s189
      %s192 = sphi 0, %s191
      %s206 = sphi 0, %s192
      %s210 = sphi 0, %s210
      %s212 = sphi 0, %s210
      %s213 = sphi 0, %s212
      %s227 = sphi 0, %s213
      %s231 = sphi 0, %s231
      %s233 = sphi 0, %s231
      %s234 = sphi 0, %s233
      %s248 = sphi 0, %s234
      %s252 = sphi 0, %s252
      %s254 = sphi 0, %s252
      %s255 = sphi 0, %s254
      %s269 = sphi 0, %s255
      %s273 = sphi 0, %s273
      %s275 = sphi 0, %s273
      %s276 = sphi 0, %s275
      %s290 = sphi 0, %s276
      %s294 = sphi 0, %s294
      %s296 = sphi 0, %s294
      %s297 = sphi 0, %s296
      %s311 = sphi 0, %s297
      %s317 = sphi 0, %s319
      %s320 = sphi 0, %s317
      %s321 = sphi 0, %s320
      %s337 = sphi 0, %s321
    $region4: #{_vistoatt_pallas.1} parent=1 // loop_header_branch
      %32 = sbr.rel (%p30) target = $region8
    $region5: #{_vistoatt_pallas.1} parent=1 // loop_body
      %s34 = ssub.s32 %s29, 1
      %s35 = ssub.s32 %s29, 2
      %s36 = sadd.s32 %s29, 1
      %s37 = ssub.s32 %s29, %s36
      %p38 = scmp.eq.s32.totalorder %s37, 0
      %s40 = sadd.s32 %s39, 1
      %s41 = scalar_select %p38, %s39, %s40
      %p44 = pneg %p38
      %p45 = scmp.eq.s32.totalorder %s29, 1
      %p46 = por %p44, %p45
      %p47 = scmp.ne.s32.totalorder %s39, %s42
      %p48 = scmp.eq.s32.totalorder %s29, 0
      %p49 = por %p47, %p48
      %p50 = scmp.ne.s32.totalorder %s39, %s42
      %p51 = scmp.eq.s32.totalorder %s34, 1
      %p52 = por %p50, %p51
      %p53 = scmp.ne.s32.totalorder %s42, %s43
      %p54 = scmp.eq.s32.totalorder %s34, 0
      %p55 = por %p53, %p54
      %p56 = scmp.ne.s32.totalorder %s42, %s43
      %p57 = scmp.eq.s32.totalorder %s35, 1
      %p58 = por %p56, %p57
      %p60 = scmp.ne.s32.totalorder %s43, %s59
      %p61 = scmp.eq.s32.totalorder %s35, 0
      %p62 = por %p60, %p61
      %s64 = sadd.s32 %s63, 1
      %p67 = scmp.eq.s32.totalorder %s29, 1
      %p68 = scmp.ne.s32.totalorder %s63, %s65
      %p69 = scmp.eq.s32.totalorder %s29, 0
      %p70 = por %p68, %p69
      %p71 = scmp.ne.s32.totalorder %s63, %s65
      %p72 = scmp.eq.s32.totalorder %s34, 1
      %p73 = por %p71, %p72
      %p74 = scmp.ne.s32.totalorder %s65, %s66
      %p75 = scmp.eq.s32.totalorder %s34, 0
      %p76 = por %p74, %p75
      %p77 = scmp.ne.s32.totalorder %s65, %s66
      %p78 = scmp.eq.s32.totalorder %s35, 1
      %p79 = por %p77, %p78
      %p81 = scmp.ne.s32.totalorder %s66, %s80
      %p82 = scmp.eq.s32.totalorder %s35, 0
      %p83 = por %p81, %p82
      %s85 = sadd.s32 %s84, 1
      %p88 = scmp.eq.s32.totalorder %s29, 1
      %p89 = scmp.ne.s32.totalorder %s84, %s86
      %p90 = scmp.eq.s32.totalorder %s29, 0
      %p91 = por %p89, %p90
      %p92 = scmp.ne.s32.totalorder %s84, %s86
      %p93 = scmp.eq.s32.totalorder %s34, 1
      %p94 = por %p92, %p93
      %p95 = scmp.ne.s32.totalorder %s86, %s87
      %p96 = scmp.eq.s32.totalorder %s34, 0
      %p97 = por %p95, %p96
      %p98 = scmp.ne.s32.totalorder %s86, %s87
      %p99 = scmp.eq.s32.totalorder %s35, 1
      %p100 = por %p98, %p99
      %p102 = scmp.ne.s32.totalorder %s87, %s101
      %p103 = scmp.eq.s32.totalorder %s35, 0
      %p104 = por %p102, %p103
      %s106 = sadd.s32 %s105, 1
      %p109 = scmp.eq.s32.totalorder %s29, 1
      %p110 = scmp.ne.s32.totalorder %s105, %s107
      %p111 = scmp.eq.s32.totalorder %s29, 0
      %p112 = por %p110, %p111
      %p113 = scmp.ne.s32.totalorder %s105, %s107
      %p114 = scmp.eq.s32.totalorder %s34, 1
      %p115 = por %p113, %p114
      %p116 = scmp.ne.s32.totalorder %s107, %s108
      %p117 = scmp.eq.s32.totalorder %s34, 0
      %p118 = por %p116, %p117
      %p119 = scmp.ne.s32.totalorder %s107, %s108
      %p120 = scmp.eq.s32.totalorder %s35, 1
      %p121 = por %p119, %p120
      %p123 = scmp.ne.s32.totalorder %s108, %s122
      %p124 = scmp.eq.s32.totalorder %s35, 0
      %p125 = por %p123, %p124
      %s127 = sadd.s32 %s126, 1
      %p130 = scmp.eq.s32.totalorder %s29, 1
      %p131 = scmp.ne.s32.totalorder %s126, %s128
      %p132 = scmp.eq.s32.totalorder %s29, 0
      %p133 = por %p131, %p132
      %p134 = scmp.ne.s32.totalorder %s126, %s128
      %p135 = scmp.eq.s32.totalorder %s34, 1
      %p136 = por %p134, %p135
      %p137 = scmp.ne.s32.totalorder %s128, %s129
      %p138 = scmp.eq.s32.totalorder %s34, 0
      %p139 = por %p137, %p138
      %p140 = scmp.ne.s32.totalorder %s128, %s129
      %p141 = scmp.eq.s32.totalorder %s35, 1
      %p142 = por %p140, %p141
      %p144 = scmp.ne.s32.totalorder %s129, %s143
      %p145 = scmp.eq.s32.totalorder %s35, 0
      %p146 = por %p144, %p145
      %s148 = sadd.s32 %s147, 1
      %p151 = scmp.eq.s32.totalorder %s29, 1
      %p152 = scmp.ne.s32.totalorder %s147, %s149
      %p153 = scmp.eq.s32.totalorder %s29, 0
      %p154 = por %p152, %p153
      %p155 = scmp.ne.s32.totalorder %s147, %s149
      %p156 = scmp.eq.s32.totalorder %s34, 1
      %p157 = por %p155, %p156
      %p158 = scmp.ne.s32.totalorder %s149, %s150
      %p159 = scmp.eq.s32.totalorder %s34, 0
      %p160 = por %p158, %p159
      %p161 = scmp.ne.s32.totalorder %s149, %s150
      %p162 = scmp.eq.s32.totalorder %s35, 1
      %p163 = por %p161, %p162
      %p165 = scmp.ne.s32.totalorder %s150, %s164
      %p166 = scmp.eq.s32.totalorder %s35, 0
      %p167 = por %p165, %p166
      %s169 = sadd.s32 %s168, 1
      %p172 = scmp.eq.s32.totalorder %s29, 1
      %p173 = scmp.ne.s32.totalorder %s168, %s170
      %p174 = scmp.eq.s32.totalorder %s29, 0
      %p175 = por %p173, %p174
      %p176 = scmp.ne.s32.totalorder %s168, %s170
      %p177 = scmp.eq.s32.totalorder %s34, 1
      %p178 = por %p176, %p177
      %p179 = scmp.ne.s32.totalorder %s170, %s171
      %p180 = scmp.eq.s32.totalorder %s34, 0
      %p181 = por %p179, %p180
      %p182 = scmp.ne.s32.totalorder %s170, %s171
      %p183 = scmp.eq.s32.totalorder %s35, 1
      %p184 = por %p182, %p183
      %p186 = scmp.ne.s32.totalorder %s171, %s185
      %p187 = scmp.eq.s32.totalorder %s35, 0
      %p188 = por %p186, %p187
      %s190 = sadd.s32 %s189, 1
      %p193 = scmp.eq.s32.totalorder %s29, 1
      %p194 = scmp.ne.s32.totalorder %s189, %s191
      %p195 = scmp.eq.s32.totalorder %s29, 0
      %p196 = por %p194, %p195
      %p197 = scmp.ne.s32.totalorder %s189, %s191
      %p198 = scmp.eq.s32.totalorder %s34, 1
      %p199 = por %p197, %p198
      %p200 = scmp.ne.s32.totalorder %s191, %s192
      %p201 = scmp.eq.s32.totalorder %s34, 0
      %p202 = por %p200, %p201
      %p203 = scmp.ne.s32.totalorder %s191, %s192
      %p204 = scmp.eq.s32.totalorder %s35, 1
      %p205 = por %p203, %p204
      %p207 = scmp.ne.s32.totalorder %s192, %s206
      %p208 = scmp.eq.s32.totalorder %s35, 0
      %p209 = por %p207, %p208
      %s211 = sadd.s32 %s210, 1
      %p214 = scmp.eq.s32.totalorder %s29, 1
      %p215 = scmp.ne.s32.totalorder %s210, %s212
      %p216 = scmp.eq.s32.totalorder %s29, 0
      %p217 = por %p215, %p216
      %p218 = scmp.ne.s32.totalorder %s210, %s212
      %p219 = scmp.eq.s32.totalorder %s34, 1
      %p220 = por %p218, %p219
      %p221 = scmp.ne.s32.totalorder %s212, %s213
      %p222 = scmp.eq.s32.totalorder %s34, 0
      %p223 = por %p221, %p222
      %p224 = scmp.ne.s32.totalorder %s212, %s213
      %p225 = scmp.eq.s32.totalorder %s35, 1
      %p226 = por %p224, %p225
      %p228 = scmp.ne.s32.totalorder %s213, %s227
      %p229 = scmp.eq.s32.totalorder %s35, 0
      %p230 = por %p228, %p229
      %s232 = sadd.s32 %s231, 1
      %p235 = scmp.eq.s32.totalorder %s29, 1
      %p236 = scmp.ne.s32.totalorder %s231, %s233
      %p237 = scmp.eq.s32.totalorder %s29, 0
      %p238 = por %p236, %p237
      %p239 = scmp.ne.s32.totalorder %s231, %s233
      %p240 = scmp.eq.s32.totalorder %s34, 1
      %p241 = por %p239, %p240
      %p242 = scmp.ne.s32.totalorder %s233, %s234
      %p243 = scmp.eq.s32.totalorder %s34, 0
      %p244 = por %p242, %p243
      %p245 = scmp.ne.s32.totalorder %s233, %s234
      %p246 = scmp.eq.s32.totalorder %s35, 1
      %p247 = por %p245, %p246
      %p249 = scmp.ne.s32.totalorder %s234, %s248
      %p250 = scmp.eq.s32.totalorder %s35, 0
      %p251 = por %p249, %p250
      %s253 = sadd.s32 %s252, 1
      %p256 = scmp.eq.s32.totalorder %s29, 1
      %p257 = scmp.ne.s32.totalorder %s252, %s254
      %p258 = scmp.eq.s32.totalorder %s29, 0
      %p259 = por %p257, %p258
      %p260 = scmp.ne.s32.totalorder %s252, %s254
      %p261 = scmp.eq.s32.totalorder %s34, 1
      %p262 = por %p260, %p261
      %p263 = scmp.ne.s32.totalorder %s254, %s255
      %p264 = scmp.eq.s32.totalorder %s34, 0
      %p265 = por %p263, %p264
      %p266 = scmp.ne.s32.totalorder %s254, %s255
      %p267 = scmp.eq.s32.totalorder %s35, 1
      %p268 = por %p266, %p267
      %p270 = scmp.ne.s32.totalorder %s255, %s269
      %p271 = scmp.eq.s32.totalorder %s35, 0
      %p272 = por %p270, %p271
      %s274 = sadd.s32 %s273, 1
      %p277 = scmp.eq.s32.totalorder %s29, 1
      %p278 = scmp.ne.s32.totalorder %s273, %s275
      %p279 = scmp.eq.s32.totalorder %s29, 0
      %p280 = por %p278, %p279
      %p281 = scmp.ne.s32.totalorder %s273, %s275
      %p282 = scmp.eq.s32.totalorder %s34, 1
      %p283 = por %p281, %p282
      %p284 = scmp.ne.s32.totalorder %s275, %s276
      %p285 = scmp.eq.s32.totalorder %s34, 0
      %p286 = por %p284, %p285
      %p287 = scmp.ne.s32.totalorder %s275, %s276
      %p288 = scmp.eq.s32.totalorder %s35, 1
      %p289 = por %p287, %p288
      %p291 = scmp.ne.s32.totalorder %s276, %s290
      %p292 = scmp.eq.s32.totalorder %s35, 0
      %p293 = por %p291, %p292
      %s295 = sadd.s32 %s294, 1
      %p298 = scmp.eq.s32.totalorder %s29, 1
      %p299 = scmp.ne.s32.totalorder %s294, %s296
      %p300 = scmp.eq.s32.totalorder %s29, 0
      %p301 = por %p299, %p300
      %p302 = scmp.ne.s32.totalorder %s294, %s296
      %p303 = scmp.eq.s32.totalorder %s34, 1
      %p304 = por %p302, %p303
      %p305 = scmp.ne.s32.totalorder %s296, %s297
      %p306 = scmp.eq.s32.totalorder %s34, 0
      %p307 = por %p305, %p306
      %p308 = scmp.ne.s32.totalorder %s296, %s297
      %p309 = scmp.eq.s32.totalorder %s35, 1
      %p310 = por %p308, %p309
      %p312 = scmp.ne.s32.totalorder %s297, %s311
      %p313 = scmp.eq.s32.totalorder %s35, 0
      %p314 = por %p312, %p313
      %s315 = ssub.s32 %s29, %s36
      %p316 = scmp.eq.s32.totalorder %s315, 0
      %s318 = sadd.s32 %s317, 1
      %s319 = scalar_select %p316, %s317, %s318
      %p322 = pneg %p316
      %p323 = scmp.eq.s32.totalorder %s29, 1
      %p324 = por %p322, %p323
      %p325 = scmp.ne.s32.totalorder %s317, %s320
      %p326 = scmp.eq.s32.totalorder %s29, 0
      %p327 = por %p325, %p326
      %p328 = scmp.ne.s32.totalorder %s317, %s320
      %p329 = scmp.eq.s32.totalorder %s34, 1
      %p330 = por %p328, %p329
      %p331 = scmp.ne.s32.totalorder %s320, %s321
      %p332 = scmp.eq.s32.totalorder %s34, 0
      %p333 = por %p331, %p332
      %p334 = scmp.ne.s32.totalorder %s320, %s321
      %p335 = scmp.eq.s32.totalorder %s35, 1
      %p336 = por %p334, %p335
      %p338 = scmp.ne.s32.totalorder %s321, %s337
      %p339 = scmp.eq.s32.totalorder %s35, 0
      %p340 = por %p338, %p339
      %p341 = scmp.le.s32.totalorder 1, %s29
      %p342 = scmp.lt.s32.totalorder %s29, 3
      %p343 = pnand %p341, %p342
      %p344 = pneg %p343
      // Predicated region
      $region9: #{_vistoatt_pallas.1} parent=5 // pred_check
        _
      $region10: #{_vistoatt_pallas.1} parent=5 // pred_check_branch
        %346 = sbr.rel (%p343) target = $region12
      $region11: #{_vistoatt_pallas.1} parent=5 // pred_region
        %s347 = ssub.s32 %s29, 1
        // Predicated region
        $region13: #{_vistoatt_pallas.1} parent=11 // pred_check
          %p348 = pneg %p76
        $region14: #{_vistoatt_pallas.1} parent=11 // pred_check_branch
          %350 = sbr.rel (%p348) target = $region16
        $region15: #{_vistoatt_pallas.1} parent=11 // pred_region
          %352 = vsyncadd [#allocation6], 0
          %s353 = sshll.u32 %s1, 4
          %s354 = int_to_ptr.hbm [resolvable:$true] %s353
          %s355 = sshll.u32 [#allocation5], 4
          %s356 = int_to_ptr.vmem [resolvable:$true] %s355
          %361 = dma.hbm_to_vmem [thread:$0]  %s354, 16384, %s356, [#allocation6], 512, 512, 32
        $region16: #{_vistoatt_pallas.1} parent=11 // pred_fallthru
          _
        // Predicated region
        $region17: #{_vistoatt_pallas.1} parent=11 // pred_check
          %p362 = pneg %p97
        $region18: #{_vistoatt_pallas.1} parent=11 // pred_check_branch
          %364 = sbr.rel (%p362) target = $region20
        $region19: #{_vistoatt_pallas.1} parent=11 // pred_region
          %366 = vsyncadd [#allocation6], 0
          %s368 = sshll.u32 %s2, 4
          %s369 = int_to_ptr.hbm [resolvable:$true] %s368
          %s370 = sshll.u32 [#allocation7], 4
          %s371 = int_to_ptr.vmem [resolvable:$true] %s370
          %373 = dma.hbm_to_vmem [thread:$0]  %s369, 64, %s371, [#allocation6]
        $region20: #{_vistoatt_pallas.1} parent=11 // pred_fallthru
          _
        // Predicated region
        $region21: #{_vistoatt_pallas.1} parent=11 // pred_check
          %p374 = pneg %p118
        $region22: #{_vistoatt_pallas.1} parent=11 // pred_check_branch
          %376 = sbr.rel (%p374) target = $region24
        $region23: #{_vistoatt_pallas.1} parent=11 // pred_region
          %378 = vsyncadd [#allocation9], 0
          %s379 = sshll.u32 %s3, 4
          %s380 = int_to_ptr.hbm [resolvable:$true] %s379
          %s381 = sshll.u32 [#allocation8], 4
          %s382 = int_to_ptr.vmem [resolvable:$true] %s381
          %387 = dma.hbm_to_vmem [thread:$0]  %s380, 32768, %s382, [#allocation9], 512, 512, 32
        $region24: #{_vistoatt_pallas.1} parent=11 // pred_fallthru
          _
        // Predicated region
        $region25: #{_vistoatt_pallas.1} parent=11 // pred_check
          %p388 = pneg %p139
        $region26: #{_vistoatt_pallas.1} parent=11 // pred_check_branch
          %390 = sbr.rel (%p388) target = $region28
        $region27: #{_vistoatt_pallas.1} parent=11 // pred_region
          %392 = vsyncadd [#allocation9], 0
          %s394 = sshll.u32 %s4, 4
          %s395 = int_to_ptr.hbm [resolvable:$true] %s394
          %s396 = sshll.u32 [#allocation10], 4
          %s397 = int_to_ptr.vmem [resolvable:$true] %s396
          %399 = dma.hbm_to_vmem [thread:$0]  %s395, 64, %s397, [#allocation9]
        $region28: #{_vistoatt_pallas.1} parent=11 // pred_fallthru
          _
        // Predicated region
        $region29: #{_vistoatt_pallas.1} parent=11 // pred_check
          %p400 = pneg %p160
        $region30: #{_vistoatt_pallas.1} parent=11 // pred_check_branch
          %402 = sbr.rel (%p400) target = $region32
        $region31: #{_vistoatt_pallas.1} parent=11 // pred_region
          %404 = vsyncadd [#allocation12], 0
          %s405 = sshll.u32 %s5, 4
          %s406 = int_to_ptr.hbm [resolvable:$true] %s405
          %s407 = sshll.u32 [#allocation11], 4
          %s408 = int_to_ptr.vmem [resolvable:$true] %s407
          %413 = dma.hbm_to_vmem [thread:$0]  %s406, 16384, %s408, [#allocation12], 256, 256, 16
        $region32: #{_vistoatt_pallas.1} parent=11 // pred_fallthru
          _
        // Predicated region
        $region33: #{_vistoatt_pallas.1} parent=11 // pred_check
          %p414 = pneg %p181
        $region34: #{_vistoatt_pallas.1} parent=11 // pred_check_branch
          %416 = sbr.rel (%p414) target = $region36
        $region35: #{_vistoatt_pallas.1} parent=11 // pred_region
          _
        $region36: #{_vistoatt_pallas.1} parent=11 // pred_fallthru
          _
        // Predicated region
        $region37: #{_vistoatt_pallas.1} parent=11 // pred_check
          %p417 = pneg %p202
        $region38: #{_vistoatt_pallas.1} parent=11 // pred_check_branch
          %419 = sbr.rel (%p417) target = $region40
        $region39: #{_vistoatt_pallas.1} parent=11 // pred_region
          %421 = vsyncadd [#allocation12], 0
          %s422 = sshll.u32 %s7, 4
          %s423 = int_to_ptr.hbm [resolvable:$true] %s422
          %s424 = sshll.u32 [#allocation13], 4
          %s425 = int_to_ptr.vmem [resolvable:$true] %s424
          %430 = dma.hbm_to_vmem [thread:$0]  %s423, 4096, %s425, [#allocation12], 128, 128, 8
        $region40: #{_vistoatt_pallas.1} parent=11 // pred_fallthru
          _
        // Predicated region
        $region41: #{_vistoatt_pallas.1} parent=11 // pred_check
          %p431 = pneg %p223
        $region42: #{_vistoatt_pallas.1} parent=11 // pred_check_branch
          %433 = sbr.rel (%p431) target = $region44
        $region43: #{_vistoatt_pallas.1} parent=11 // pred_region
          _
        $region44: #{_vistoatt_pallas.1} parent=11 // pred_fallthru
          _
        // Predicated region
        $region45: #{_vistoatt_pallas.1} parent=11 // pred_check
          %p434 = pneg %p244
        $region46: #{_vistoatt_pallas.1} parent=11 // pred_check_branch
          %436 = sbr.rel (%p434) target = $region48
        $region47: #{_vistoatt_pallas.1} parent=11 // pred_region
          %438 = vsyncadd [#allocation15], 0
          %s439 = sshll.u32 %s9, 4
          %s440 = int_to_ptr.hbm [resolvable:$true] %s439
          %s441 = sshll.u32 [#allocation14], 4
          %s442 = int_to_ptr.vmem [resolvable:$true] %s441
          %447 = dma.hbm_to_vmem [thread:$0]  %s440, 2048, %s442, [#allocation15], 128, 128, 8
        $region48: #{_vistoatt_pallas.1} parent=11 // pred_fallthru
          _
        // Predicated region
        $region49: #{_vistoatt_pallas.1} parent=11 // pred_check
          %p448 = pneg %p265
        $region50: #{_vistoatt_pallas.1} parent=11 // pred_check_branch
          %450 = sbr.rel (%p448) target = $region52
        $region51: #{_vistoatt_pallas.1} parent=11 // pred_region
          _
        $region52: #{_vistoatt_pallas.1} parent=11 // pred_fallthru
          _
        // Predicated region
        $region53: #{_vistoatt_pallas.1} parent=11 // pred_check
          %p451 = pneg %p286
        $region54: #{_vistoatt_pallas.1} parent=11 // pred_check_branch
          %453 = sbr.rel (%p451) target = $region56
        $region55: #{_vistoatt_pallas.1} parent=11 // pred_region
          %455 = vsyncadd [#allocation15], 0
          %s456 = sshll.u32 %s11, 4
          %s457 = int_to_ptr.hbm [resolvable:$true] %s456
          %s458 = sshll.u32 [#allocation16], 4
          %s459 = int_to_ptr.vmem [resolvable:$true] %s458
          %464 = dma.hbm_to_vmem [thread:$0]  %s457, 2048, %s459, [#allocation15], 128, 128, 8
        $region56: #{_vistoatt_pallas.1} parent=11 // pred_fallthru
          _
        // Predicated region
        $region57: #{_vistoatt_pallas.1} parent=11 // pred_check
          %p465 = pneg %p307
        $region58: #{_vistoatt_pallas.1} parent=11 // pred_check_branch
          %467 = sbr.rel (%p465) target = $region60
        $region59: #{_vistoatt_pallas.1} parent=11 // pred_region
          _
        $region60: #{_vistoatt_pallas.1} parent=11 // pred_fallthru
          _
      $region12: #{_vistoatt_pallas.1} parent=5 // pred_fallthru
        _
      %p468 = scmp.lt.s32.totalorder %s29, 2
      // Predicated region
      $region61: #{_vistoatt_pallas.1} parent=5 // pred_check
        %p469 = pneg %p468
      $region62: #{_vistoatt_pallas.1} parent=5 // pred_check_branch
        %471 = sbr.rel (%p469) target = $region64
      $region63: #{_vistoatt_pallas.1} parent=5 // pred_region
        // Predicated region
        $region65: #{_vistoatt_pallas.1} parent=63 // pred_check
          %p472 = pneg %p49
        $region66: #{_vistoatt_pallas.1} parent=63 // pred_check_branch
          %474 = sbr.rel (%p472) target = $region68
        $region67: #{_vistoatt_pallas.1} parent=63 // pred_region
          %s475 = sand.u32 %s39, 1
          %s476 = scalar_lea.sflag [#allocation3], %s475
          %s477 = sand.u32 %s39, 1
          %s478 = smul.addr %s477, 16
          %s479 = scalar_lea.vmem [#allocation2], %s478
          %481 = vsyncadd %s476, 0
          %s482 = smul.addr %s29, 2
          %s483 = smul.addr %s482, 8
          %s484 = scalar_lea.hbm %s0, %s483
          %s486 = sshll.u32 %s484, 4
          %s487 = int_to_ptr.hbm [resolvable:$true] %s486
          %s488 = sshll.u32 %s479, 4
          %s489 = int_to_ptr.vmem [resolvable:$true] %s488
          %491 = dma.hbm_to_vmem [thread:$0]  %s487, 256, %s489, %s476
        $region68: #{_vistoatt_pallas.1} parent=63 // pred_fallthru
          _
      $region64: #{_vistoatt_pallas.1} parent=5 // pred_fallthru
        _
      %p492 = scmp.le.s32.totalorder 1, %s29
      %p493 = scmp.lt.s32.totalorder %s29, 3
      %p494 = pnand %p492, %p493
      %p495 = pneg %p494
      // Predicated region
      $region69: #{_vistoatt_pallas.1} parent=5 // pred_check
        _
      $region70: #{_vistoatt_pallas.1} parent=5 // pred_check_branch
        %497 = sbr.rel (%p494) target = $region72
      $region71: #{_vistoatt_pallas.1} parent=5 // pred_region
        %s498 = ssub.s32 %s29, 1
        %s499 = sand.u32 %s42, 1
        %s500 = scalar_lea.sflag [#allocation3], %s499
        %s501 = sand.u32 %s42, 1
        %s502 = smul.addr %s501, 16
        %s503 = scalar_lea.vmem [#allocation2], %s502
        // Predicated region
        $region73: #{_vistoatt_pallas.1} parent=71 // pred_check
          %p504 = pneg %p55
        $region74: #{_vistoatt_pallas.1} parent=71 // pred_check_branch
          %506 = sbr.rel (%p504) target = $region76
        $region75: #{_vistoatt_pallas.1} parent=71 // pred_region
          %508 = dma.done %s500, 256
        $region76: #{_vistoatt_pallas.1} parent=71 // pred_fallthru
          _
        // Predicated region
        $region77: #{_vistoatt_pallas.1} parent=71 // pred_check
          %p509 = pneg %p76
        $region78: #{_vistoatt_pallas.1} parent=71 // pred_check_branch
          %511 = sbr.rel (%p509) target = $region80
        $region79: #{_vistoatt_pallas.1} parent=71 // pred_region
          %513 = dma.done [#allocation6], 16384
        $region80: #{_vistoatt_pallas.1} parent=71 // pred_fallthru
          _
        // Predicated region
        $region81: #{_vistoatt_pallas.1} parent=71 // pred_check
          %p514 = pneg %p97
        $region82: #{_vistoatt_pallas.1} parent=71 // pred_check_branch
          %516 = sbr.rel (%p514) target = $region84
        $region83: #{_vistoatt_pallas.1} parent=71 // pred_region
          %518 = dma.done [#allocation6], 64
        $region84: #{_vistoatt_pallas.1} parent=71 // pred_fallthru
          _
        // Predicated region
        $region85: #{_vistoatt_pallas.1} parent=71 // pred_check
          %p519 = pneg %p118
        $region86: #{_vistoatt_pallas.1} parent=71 // pred_check_branch
          %521 = sbr.rel (%p519) target = $region88
        $region87: #{_vistoatt_pallas.1} parent=71 // pred_region
          %523 = dma.done [#allocation9], 32768
        $region88: #{_vistoatt_pallas.1} parent=71 // pred_fallthru
          _
        // Predicated region
        $region89: #{_vistoatt_pallas.1} parent=71 // pred_check
          %p524 = pneg %p139
        $region90: #{_vistoatt_pallas.1} parent=71 // pred_check_branch
          %526 = sbr.rel (%p524) target = $region92
        $region91: #{_vistoatt_pallas.1} parent=71 // pred_region
          %528 = dma.done [#allocation9], 64
        $region92: #{_vistoatt_pallas.1} parent=71 // pred_fallthru
          _
        // Predicated region
        $region93: #{_vistoatt_pallas.1} parent=71 // pred_check
          %p529 = pneg %p160
        $region94: #{_vistoatt_pallas.1} parent=71 // pred_check_branch
          %531 = sbr.rel (%p529) target = $region96
        $region95: #{_vistoatt_pallas.1} parent=71 // pred_region
          %533 = dma.done [#allocation12], 16384
        $region96: #{_vistoatt_pallas.1} parent=71 // pred_fallthru
          _
        // Predicated region
        $region97: #{_vistoatt_pallas.1} parent=71 // pred_check
          %p534 = pneg %p202
        $region98: #{_vistoatt_pallas.1} parent=71 // pred_check_branch
          %536 = sbr.rel (%p534) target = $region100
        $region99: #{_vistoatt_pallas.1} parent=71 // pred_region
          %538 = dma.done [#allocation12], 4096
        $region100: #{_vistoatt_pallas.1} parent=71 // pred_fallthru
          _
        // Predicated region
        $region101: #{_vistoatt_pallas.1} parent=71 // pred_check
          %p539 = pneg %p244
        $region102: #{_vistoatt_pallas.1} parent=71 // pred_check_branch
          %541 = sbr.rel (%p539) target = $region104
        $region103: #{_vistoatt_pallas.1} parent=71 // pred_region
          %543 = dma.done [#allocation15], 2048
        $region104: #{_vistoatt_pallas.1} parent=71 // pred_fallthru
          _
        // Predicated region
        $region105: #{_vistoatt_pallas.1} parent=71 // pred_check
          %p544 = pneg %p286
        $region106: #{_vistoatt_pallas.1} parent=71 // pred_check_branch
          %546 = sbr.rel (%p544) target = $region108
        $region107: #{_vistoatt_pallas.1} parent=71 // pred_region
          %548 = dma.done [#allocation15], 2048
        $region108: #{_vistoatt_pallas.1} parent=71 // pred_fallthru
          _
        %s549 = sand.u32 %s42, 1
        %s550 = scalar_lea.sflag [#allocation3], %s549
        %s551 = sand.u32 %s42, 1
        %s552 = smul.addr %s551, 16
        %s553 = scalar_lea.vmem [#allocation2], %s552
        %p554 = pneg %p55
        %p555 = pneg %p52
        %p556 = pneg %p76
        %p557 = pneg %p73
        %p558 = pneg %p97
        %p559 = pneg %p94
        %p560 = pneg %p118
        %p561 = pneg %p115
        %p562 = pneg %p139
        %p563 = pneg %p136
        %p564 = pneg %p160
        %p565 = pneg %p157
        %p566 = pneg %p181
        %p567 = pneg %p178
        %p568 = pneg %p202
        %p569 = pneg %p199
        %p570 = pneg %p223
        %p571 = pneg %p220
        %p572 = pneg %p244
        %p573 = pneg %p241
        %p574 = pneg %p265
        %p575 = pneg %p262
        %p576 = pneg %p286
        %p577 = pneg %p283
        %p578 = pneg %p307
        %p579 = pneg %p304
        %p580 = pneg %p333
        %p581 = pneg %p330
        %s582 = sand.u32 %s320, 1
        %s583 = scalar_lea.sflag [#allocation4], %s582
        %s584 = sand.u32 %s320, 1
        %s585 = smul.addr %s584, 8
        %s586 = scalar_lea.vmem [#allocation17], %s585
        %v587 = vld [vmem:[%s503] sm:$0xff]
        %v588 = vld [vmem:[%s503 + $0x8] sm:$0xff]
        %v589 = vld [vmem:[#allocation5] sm:$0xff]
        %v590 = vld [vmem:[#allocation5 + $0x8] sm:$0xff]
        %v591 = vld [vmem:[#allocation5 + $0x10] sm:$0xff]
        %v592 = vld [vmem:[#allocation5 + $0x18] sm:$0xff]
        %v593 = vld [vmem:[#allocation5 + $0x20] sm:$0xff]
        %v594 = vld [vmem:[#allocation5 + $0x28] sm:$0xff]
        %v595 = vld [vmem:[#allocation5 + $0x30] sm:$0xff]
        %v596 = vld [vmem:[#allocation5 + $0x38] sm:$0xff]
        %v597 = vld [vmem:[#allocation5 + $0x40] sm:$0xff]
        %v598 = vld [vmem:[#allocation5 + $0x48] sm:$0xff]
        %v599 = vld [vmem:[#allocation5 + $0x50] sm:$0xff]
        %v600 = vld [vmem:[#allocation5 + $0x58] sm:$0xff]
        %v601 = vld [vmem:[#allocation5 + $0x60] sm:$0xff]
        %v602 = vld [vmem:[#allocation5 + $0x68] sm:$0xff]
        %v603 = vld [vmem:[#allocation5 + $0x70] sm:$0xff]
        %v604 = vld [vmem:[#allocation5 + $0x78] sm:$0xff]
        %v605 = vld [vmem:[#allocation5 + $0x80] sm:$0xff]
        %v606 = vld [vmem:[#allocation5 + $0x88] sm:$0xff]
        %v607 = vld [vmem:[#allocation5 + $0x90] sm:$0xff]
        %v608 = vld [vmem:[#allocation5 + $0x98] sm:$0xff]
        %v609 = vld [vmem:[#allocation5 + $0xa0] sm:$0xff]
        %v610 = vld [vmem:[#allocation5 + $0xa8] sm:$0xff]
        %v611 = vld [vmem:[#allocation5 + $0xb0] sm:$0xff]
        %v612 = vld [vmem:[#allocation5 + $0xb8] sm:$0xff]
        %v613 = vld [vmem:[#allocation5 + $0xc0] sm:$0xff]
        %v614 = vld [vmem:[#allocation5 + $0xc8] sm:$0xff]
        %v615 = vld [vmem:[#allocation5 + $0xd0] sm:$0xff]
        %v616 = vld [vmem:[#allocation5 + $0xd8] sm:$0xff]
        %v617 = vld [vmem:[#allocation5 + $0xe0] sm:$0xff]
        %v618 = vld [vmem:[#allocation5 + $0xe8] sm:$0xff]
        %v619 = vld [vmem:[#allocation5 + $0xf0] sm:$0xff]
        %v620 = vld [vmem:[#allocation5 + $0xf8] sm:$0xff]
        %v621 = vld [vmem:[#allocation5 + $0x100] sm:$0xff]
        %v622 = vld [vmem:[#allocation5 + $0x108] sm:$0xff]
        %v623 = vld [vmem:[#allocation5 + $0x110] sm:$0xff]
        %v624 = vld [vmem:[#allocation5 + $0x118] sm:$0xff]
        %v625 = vld [vmem:[#allocation5 + $0x120] sm:$0xff]
        %v626 = vld [vmem:[#allocation5 + $0x128] sm:$0xff]
        %v627 = vld [vmem:[#allocation5 + $0x130] sm:$0xff]
        %v628 = vld [vmem:[#allocation5 + $0x138] sm:$0xff]
        %v629 = vld [vmem:[#allocation5 + $0x140] sm:$0xff]
        %v630 = vld [vmem:[#allocation5 + $0x148] sm:$0xff]
        %v631 = vld [vmem:[#allocation5 + $0x150] sm:$0xff]
        %v632 = vld [vmem:[#allocation5 + $0x158] sm:$0xff]
        %v633 = vld [vmem:[#allocation5 + $0x160] sm:$0xff]
        %v634 = vld [vmem:[#allocation5 + $0x168] sm:$0xff]
        %v635 = vld [vmem:[#allocation5 + $0x170] sm:$0xff]
        %v636 = vld [vmem:[#allocation5 + $0x178] sm:$0xff]
        %v637 = vld [vmem:[#allocation5 + $0x180] sm:$0xff]
        %v638 = vld [vmem:[#allocation5 + $0x188] sm:$0xff]
        %v639 = vld [vmem:[#allocation5 + $0x190] sm:$0xff]
        %v640 = vld [vmem:[#allocation5 + $0x198] sm:$0xff]
        %v641 = vld [vmem:[#allocation5 + $0x1a0] sm:$0xff]
        %v642 = vld [vmem:[#allocation5 + $0x1a8] sm:$0xff]
        %v643 = vld [vmem:[#allocation5 + $0x1b0] sm:$0xff]
        %v644 = vld [vmem:[#allocation5 + $0x1b8] sm:$0xff]
        %v645 = vld [vmem:[#allocation5 + $0x1c0] sm:$0xff]
        %v646 = vld [vmem:[#allocation5 + $0x1c8] sm:$0xff]
        %v647 = vld [vmem:[#allocation5 + $0x1d0] sm:$0xff]
        %v648 = vld [vmem:[#allocation5 + $0x1d8] sm:$0xff]
        %v649 = vld [vmem:[#allocation5 + $0x1e0] sm:$0xff]
        %v650 = vld [vmem:[#allocation5 + $0x1e8] sm:$0xff]
        %v651 = vld [vmem:[#allocation5 + $0x1f0] sm:$0xff]
        %v652 = vld [vmem:[#allocation5 + $0x1f8] sm:$0xff]
        %v653 = vld [vmem:[#allocation5 + $0x200] sm:$0xff]
        %v654 = vld [vmem:[#allocation5 + $0x208] sm:$0xff]
        %v655 = vld [vmem:[#allocation5 + $0x210] sm:$0xff]
        %v656 = vld [vmem:[#allocation5 + $0x218] sm:$0xff]
        %v657 = vld [vmem:[#allocation5 + $0x220] sm:$0xff]
        %v658 = vld [vmem:[#allocation5 + $0x228] sm:$0xff]
        %v659 = vld [vmem:[#allocation5 + $0x230] sm:$0xff]
        %v660 = vld [vmem:[#allocation5 + $0x238] sm:$0xff]
        %v661 = vld [vmem:[#allocation5 + $0x240] sm:$0xff]
        %v662 = vld [vmem:[#allocation5 + $0x248] sm:$0xff]
        %v663 = vld [vmem:[#allocation5 + $0x250] sm:$0xff]
        %v664 = vld [vmem:[#allocation5 + $0x258] sm:$0xff]
        %v665 = vld [vmem:[#allocation5 + $0x260] sm:$0xff]
        %v666 = vld [vmem:[#allocation5 + $0x268] sm:$0xff]
        %v667 = vld [vmem:[#allocation5 + $0x270] sm:$0xff]
        %v668 = vld [vmem:[#allocation5 + $0x278] sm:$0xff]
        %v669 = vld [vmem:[#allocation5 + $0x280] sm:$0xff]
        %v670 = vld [vmem:[#allocation5 + $0x288] sm:$0xff]
        %v671 = vld [vmem:[#allocation5 + $0x290] sm:$0xff]
        %v672 = vld [vmem:[#allocation5 + $0x298] sm:$0xff]
        %v673 = vld [vmem:[#allocation5 + $0x2a0] sm:$0xff]
        %v674 = vld [vmem:[#allocation5 + $0x2a8] sm:$0xff]
        %v675 = vld [vmem:[#allocation5 + $0x2b0] sm:$0xff]
        %v676 = vld [vmem:[#allocation5 + $0x2b8] sm:$0xff]
        %v677 = vld [vmem:[#allocation5 + $0x2c0] sm:$0xff]
        %v678 = vld [vmem:[#allocation5 + $0x2c8] sm:$0xff]
        %v679 = vld [vmem:[#allocation5 + $0x2d0] sm:$0xff]
        %v680 = vld [vmem:[#allocation5 + $0x2d8] sm:$0xff]
        %v681 = vld [vmem:[#allocation5 + $0x2e0] sm:$0xff]
        %v682 = vld [vmem:[#allocation5 + $0x2e8] sm:$0xff]
        %v683 = vld [vmem:[#allocation5 + $0x2f0] sm:$0xff]
        %v684 = vld [vmem:[#allocation5 + $0x2f8] sm:$0xff]
        %v685 = vld [vmem:[#allocation5 + $0x300] sm:$0xff]
        %v686 = vld [vmem:[#allocation5 + $0x308] sm:$0xff]
        %v687 = vld [vmem:[#allocation5 + $0x310] sm:$0xff]
        %v688 = vld [vmem:[#allocation5 + $0x318] sm:$0xff]
        %v689 = vld [vmem:[#allocation5 + $0x320] sm:$0xff]
        %v690 = vld [vmem:[#allocation5 + $0x328] sm:$0xff]
        %v691 = vld [vmem:[#allocation5 + $0x330] sm:$0xff]
        %v692 = vld [vmem:[#allocation5 + $0x338] sm:$0xff]
        %v693 = vld [vmem:[#allocation5 + $0x340] sm:$0xff]
        %v694 = vld [vmem:[#allocation5 + $0x348] sm:$0xff]
        %v695 = vld [vmem:[#allocation5 + $0x350] sm:$0xff]
        %v696 = vld [vmem:[#allocation5 + $0x358] sm:$0xff]
        %v697 = vld [vmem:[#allocation5 + $0x360] sm:$0xff]
        %v698 = vld [vmem:[#allocation5 + $0x368] sm:$0xff]
        %v699 = vld [vmem:[#allocation5 + $0x370] sm:$0xff]
        %v700 = vld [vmem:[#allocation5 + $0x378] sm:$0xff]
        %v701 = vld [vmem:[#allocation5 + $0x380] sm:$0xff]
        %v702 = vld [vmem:[#allocation5 + $0x388] sm:$0xff]
        %v703 = vld [vmem:[#allocation5 + $0x390] sm:$0xff]
        %v704 = vld [vmem:[#allocation5 + $0x398] sm:$0xff]
        %v705 = vld [vmem:[#allocation5 + $0x3a0] sm:$0xff]
        %v706 = vld [vmem:[#allocation5 + $0x3a8] sm:$0xff]
        %v707 = vld [vmem:[#allocation5 + $0x3b0] sm:$0xff]
        %v708 = vld [vmem:[#allocation5 + $0x3b8] sm:$0xff]
        %v709 = vld [vmem:[#allocation5 + $0x3c0] sm:$0xff]
        %v710 = vld [vmem:[#allocation5 + $0x3c8] sm:$0xff]
        %v711 = vld [vmem:[#allocation5 + $0x3d0] sm:$0xff]
        %v712 = vld [vmem:[#allocation5 + $0x3d8] sm:$0xff]
        %v713 = vld [vmem:[#allocation5 + $0x3e0] sm:$0xff]
        %v714 = vld [vmem:[#allocation5 + $0x3e8] sm:$0xff]
        %v715 = vld [vmem:[#allocation5 + $0x3f0] sm:$0xff]
        %v716 = vld [vmem:[#allocation5 + $0x3f8] sm:$0xff]
        %v717 = vld [vmem:[#allocation7] sm:$0xf]
        %v719 = vperm.slane %v717, 0
        %v720 = vperm.slane %v717, 1
        %v721 = vperm.slane %v717, 2
        %v722 = vperm.slane %v717, 3
        %727 = vmatpush.msra.mxu0 %v649
        %728 = vmatpush.msra.mxu0 %v645
        %729 = vmatpush.msra.mxu0 %v641
        %730 = vmatpush.msra.mxu0 %v637
        %731 = vmatpush.msra.mxu0 %v633
        %732 = vmatpush.msra.mxu0 %v629
        %733 = vmatpush.msra.mxu0 %v625
        %734 = vmatpush.msra.mxu0 %v621
        %735 = vmatpush.msra.mxu0 %v617
        %736 = vmatpush.msra.mxu0 %v613
        %737 = vmatpush.msra.mxu0 %v609
        %738 = vmatpush.msra.mxu0 %v605
        %739 = vmatpush.msra.mxu0 %v601
        %740 = vmatpush.msra.mxu0 %v597
        %741 = vmatpush.msra.mxu0 %v593
        %742 = vmatpush.msra.mxu0 %v589
        %743 = vmatmul.f32.gmra.mxu0 %v587
        %v744 = vpop.f32.mrf.mxu0
        %v745 = vadd.f32 %v719, %v744
        %746 = vdwg.mxu0
        %747 = vmatpush.msra.mxu0 %v713
        %748 = vmatpush.msra.mxu0 %v709
        %749 = vmatpush.msra.mxu0 %v705
        %750 = vmatpush.msra.mxu0 %v701
        %751 = vmatpush.msra.mxu0 %v697
        %752 = vmatpush.msra.mxu0 %v693
        %753 = vmatpush.msra.mxu0 %v689
        %754 = vmatpush.msra.mxu0 %v685
        %755 = vmatpush.msra.mxu0 %v681
        %756 = vmatpush.msra.mxu0 %v677
        %757 = vmatpush.msra.mxu0 %v673
        %758 = vmatpush.msra.mxu0 %v669
        %759 = vmatpush.msra.mxu0 %v665
        %760 = vmatpush.msra.mxu0 %v661
        %761 = vmatpush.msra.mxu0 %v657
        %762 = vmatpush.msra.mxu0 %v653
        %763 = vmatmul.f32.gmra.mxu0 %v588
        %v764 = vpop.f32.mrf.mxu0
        %v765 = vadd.f32 %v745, %v764
        %766 = vdwg.mxu0
        %767 = vmatpush.msra.mxu0 %v650
        %768 = vmatpush.msra.mxu0 %v646
        %769 = vmatpush.msra.mxu0 %v642
        %770 = vmatpush.msra.mxu0 %v638
        %771 = vmatpush.msra.mxu0 %v634
        %772 = vmatpush.msra.mxu0 %v630
        %773 = vmatpush.msra.mxu0 %v626
        %774 = vmatpush.msra.mxu0 %v622
        %775 = vmatpush.msra.mxu0 %v618
        %776 = vmatpush.msra.mxu0 %v614
        %777 = vmatpush.msra.mxu0 %v610
        %778 = vmatpush.msra.mxu0 %v606
        %779 = vmatpush.msra.mxu0 %v602
        %780 = vmatpush.msra.mxu0 %v598
        %781 = vmatpush.msra.mxu0 %v594
        %782 = vmatpush.msra.mxu0 %v590
        %783 = vmatmul.f32.gmra.mxu0 %v587
        %v784 = vpop.f32.mrf.mxu0
        %v785 = vadd.f32 %v720, %v784
        %786 = vdwg.mxu0
        %787 = vmatpush.msra.mxu0 %v714
        %788 = vmatpush.msra.mxu0 %v710
        %789 = vmatpush.msra.mxu0 %v706
        %790 = vmatpush.msra.mxu0 %v702
        %791 = vmatpush.msra.mxu0 %v698
        %792 = vmatpush.msra.mxu0 %v694
        %793 = vmatpush.msra.mxu0 %v690
        %794 = vmatpush.msra.mxu0 %v686
        %795 = vmatpush.msra.mxu0 %v682
        %796 = vmatpush.msra.mxu0 %v678
        %797 = vmatpush.msra.mxu0 %v674
        %798 = vmatpush.msra.mxu0 %v670
        %799 = vmatpush.msra.mxu0 %v666
        %800 = vmatpush.msra.mxu0 %v662
        %801 = vmatpush.msra.mxu0 %v658
        %802 = vmatpush.msra.mxu0 %v654
        %803 = vmatmul.f32.gmra.mxu0 %v588
        %v804 = vpop.f32.mrf.mxu0
        %v805 = vadd.f32 %v785, %v804
        %806 = vdwg.mxu0
        %807 = vmatpush.msra.mxu0 %v651
        %808 = vmatpush.msra.mxu0 %v647
        %809 = vmatpush.msra.mxu0 %v643
        %810 = vmatpush.msra.mxu0 %v639
        %811 = vmatpush.msra.mxu0 %v635
        %812 = vmatpush.msra.mxu0 %v631
        %813 = vmatpush.msra.mxu0 %v627
        %814 = vmatpush.msra.mxu0 %v623
        %815 = vmatpush.msra.mxu0 %v619
        %816 = vmatpush.msra.mxu0 %v615
        %817 = vmatpush.msra.mxu0 %v611
        %818 = vmatpush.msra.mxu0 %v607
        %819 = vmatpush.msra.mxu0 %v603
        %820 = vmatpush.msra.mxu0 %v599
        %821 = vmatpush.msra.mxu0 %v595
        %822 = vmatpush.msra.mxu0 %v591
        %823 = vmatmul.f32.gmra.mxu0 %v587
        %v824 = vpop.f32.mrf.mxu0
        %v825 = vadd.f32 %v721, %v824
        %826 = vdwg.mxu0
        %827 = vmatpush.msra.mxu0 %v715
        %828 = vmatpush.msra.mxu0 %v711
        %829 = vmatpush.msra.mxu0 %v707
        %830 = vmatpush.msra.mxu0 %v703
        %831 = vmatpush.msra.mxu0 %v699
        %832 = vmatpush.msra.mxu0 %v695
        %833 = vmatpush.msra.mxu0 %v691
        %834 = vmatpush.msra.mxu0 %v687
        %835 = vmatpush.msra.mxu0 %v683
        %836 = vmatpush.msra.mxu0 %v679
        %837 = vmatpush.msra.mxu0 %v675
        %838 = vmatpush.msra.mxu0 %v671
        %839 = vmatpush.msra.mxu0 %v667
        %840 = vmatpush.msra.mxu0 %v663
        %841 = vmatpush.msra.mxu0 %v659
        %842 = vmatpush.msra.mxu0 %v655
        %843 = vmatmul.f32.gmra.mxu0 %v588
        %v844 = vpop.f32.mrf.mxu0
        %v845 = vadd.f32 %v825, %v844
        %846 = vdwg.mxu0
        %847 = vmatpush.msra.mxu0 %v652
        %848 = vmatpush.msra.mxu0 %v648
        %849 = vmatpush.msra.mxu0 %v644
        %850 = vmatpush.msra.mxu0 %v640
        %851 = vmatpush.msra.mxu0 %v636
        %852 = vmatpush.msra.mxu0 %v632
        %853 = vmatpush.msra.mxu0 %v628
        %854 = vmatpush.msra.mxu0 %v624
        %855 = vmatpush.msra.mxu0 %v620
        %856 = vmatpush.msra.mxu0 %v616
        %857 = vmatpush.msra.mxu0 %v612
        %858 = vmatpush.msra.mxu0 %v608
        %859 = vmatpush.msra.mxu0 %v604
        %860 = vmatpush.msra.mxu0 %v600
        %861 = vmatpush.msra.mxu0 %v596
        %862 = vmatpush.msra.mxu0 %v592
        %863 = vmatmul.f32.gmra.mxu0 %v587
        %v864 = vpop.f32.mrf.mxu0
        %v865 = vadd.f32 %v722, %v864
        %866 = vdwg.mxu0
        %867 = vmatpush.msra.mxu0 %v716
        %868 = vmatpush.msra.mxu0 %v712
        %869 = vmatpush.msra.mxu0 %v708
        %870 = vmatpush.msra.mxu0 %v704
        %871 = vmatpush.msra.mxu0 %v700
        %872 = vmatpush.msra.mxu0 %v696
        %873 = vmatpush.msra.mxu0 %v692
        %874 = vmatpush.msra.mxu0 %v688
        %875 = vmatpush.msra.mxu0 %v684
        %876 = vmatpush.msra.mxu0 %v680
        %877 = vmatpush.msra.mxu0 %v676
        %878 = vmatpush.msra.mxu0 %v672
        %879 = vmatpush.msra.mxu0 %v668
        %880 = vmatpush.msra.mxu0 %v664
        %881 = vmatpush.msra.mxu0 %v660
        %882 = vmatpush.msra.mxu0 %v656
        %883 = vmatmul.f32.gmra.mxu0 %v588
        %v884 = vpop.f32.mrf.mxu0
        %v885 = vadd.f32 %v865, %v884
        %886 = vdwg.mxu0
        %v887 = vmax.f32 %v765, 0.0
        %v888 = vmax.f32 %v805, 0.0
        %v889 = vmax.f32 %v845, 0.0
        %v890 = vmax.f32 %v885, 0.0
        %v891 = vld [vmem:[#allocation8] sm:$0xff]
        %v892 = vld [vmem:[#allocation8 + $0x8] sm:$0xff]
        %v893 = vld [vmem:[#allocation8 + $0x10] sm:$0xff]
        %v894 = vld [vmem:[#allocation8 + $0x18] sm:$0xff]
        %v895 = vld [vmem:[#allocation8 + $0x20] sm:$0xff]
        %v896 = vld [vmem:[#allocation8 + $0x28] sm:$0xff]
        %v897 = vld [vmem:[#allocation8 + $0x30] sm:$0xff]
        %v898 = vld [vmem:[#allocation8 + $0x38] sm:$0xff]
        %v899 = vld [vmem:[#allocation8 + $0x40] sm:$0xff]
        %v900 = vld [vmem:[#allocation8 + $0x48] sm:$0xff]
        %v901 = vld [vmem:[#allocation8 + $0x50] sm:$0xff]
        %v902 = vld [vmem:[#allocation8 + $0x58] sm:$0xff]
        %v903 = vld [vmem:[#allocation8 + $0x60] sm:$0xff]
        %v904 = vld [vmem:[#allocation8 + $0x68] sm:$0xff]
        %v905 = vld [vmem:[#allocation8 + $0x70] sm:$0xff]
        %v906 = vld [vmem:[#allocation8 + $0x78] sm:$0xff]
        %v907 = vld [vmem:[#allocation8 + $0x80] sm:$0xff]
        %v908 = vld [vmem:[#allocation8 + $0x88] sm:$0xff]
        %v909 = vld [vmem:[#allocation8 + $0x90] sm:$0xff]
        %v910 = vld [vmem:[#allocation8 + $0x98] sm:$0xff]
        %v911 = vld [vmem:[#allocation8 + $0xa0] sm:$0xff]
        %v912 = vld [vmem:[#allocation8 + $0xa8] sm:$0xff]
        %v913 = vld [vmem:[#allocation8 + $0xb0] sm:$0xff]
        %v914 = vld [vmem:[#allocation8 + $0xb8] sm:$0xff]
        %v915 = vld [vmem:[#allocation8 + $0xc0] sm:$0xff]
        %v916 = vld [vmem:[#allocation8 + $0xc8] sm:$0xff]
        %v917 = vld [vmem:[#allocation8 + $0xd0] sm:$0xff]
        %v918 = vld [vmem:[#allocation8 + $0xd8] sm:$0xff]
        %v919 = vld [vmem:[#allocation8 + $0xe0] sm:$0xff]
        %v920 = vld [vmem:[#allocation8 + $0xe8] sm:$0xff]
        %v921 = vld [vmem:[#allocation8 + $0xf0] sm:$0xff]
        %v922 = vld [vmem:[#allocation8 + $0xf8] sm:$0xff]
        %v923 = vld [vmem:[#allocation8 + $0x100] sm:$0xff]
        %v924 = vld [vmem:[#allocation8 + $0x108] sm:$0xff]
        %v925 = vld [vmem:[#allocation8 + $0x110] sm:$0xff]
        %v926 = vld [vmem:[#allocation8 + $0x118] sm:$0xff]
        %v927 = vld [vmem:[#allocation8 + $0x120] sm:$0xff]
        %v928 = vld [vmem:[#allocation8 + $0x128] sm:$0xff]
        %v929 = vld [vmem:[#allocation8 + $0x130] sm:$0xff]
        %v930 = vld [vmem:[#allocation8 + $0x138] sm:$0xff]
        %v931 = vld [vmem:[#allocation8 + $0x140] sm:$0xff]
        %v932 = vld [vmem:[#allocation8 + $0x148] sm:$0xff]
        %v933 = vld [vmem:[#allocation8 + $0x150] sm:$0xff]
        %v934 = vld [vmem:[#allocation8 + $0x158] sm:$0xff]
        %v935 = vld [vmem:[#allocation8 + $0x160] sm:$0xff]
        %v936 = vld [vmem:[#allocation8 + $0x168] sm:$0xff]
        %v937 = vld [vmem:[#allocation8 + $0x170] sm:$0xff]
        %v938 = vld [vmem:[#allocation8 + $0x178] sm:$0xff]
        %v939 = vld [vmem:[#allocation8 + $0x180] sm:$0xff]
        %v940 = vld [vmem:[#allocation8 + $0x188] sm:$0xff]
        %v941 = vld [vmem:[#allocation8 + $0x190] sm:$0xff]
        %v942 = vld [vmem:[#allocation8 + $0x198] sm:$0xff]
        %v943 = vld [vmem:[#allocation8 + $0x1a0] sm:$0xff]
        %v944 = vld [vmem:[#allocation8 + $0x1a8] sm:$0xff]
        %v945 = vld [vmem:[#allocation8 + $0x1b0] sm:$0xff]
        %v946 = vld [vmem:[#allocation8 + $0x1b8] sm:$0xff]
        %v947 = vld [vmem:[#allocation8 + $0x1c0] sm:$0xff]
        %v948 = vld [vmem:[#allocation8 + $0x1c8] sm:$0xff]
        %v949 = vld [vmem:[#allocation8 + $0x1d0] sm:$0xff]
        %v950 = vld [vmem:[#allocation8 + $0x1d8] sm:$0xff]
        %v951 = vld [vmem:[#allocation8 + $0x1e0] sm:$0xff]
        %v952 = vld [vmem:[#allocation8 + $0x1e8] sm:$0xff]
        %v953 = vld [vmem:[#allocation8 + $0x1f0] sm:$0xff]
        %v954 = vld [vmem:[#allocation8 + $0x1f8] sm:$0xff]
        %v955 = vld [vmem:[#allocation8 + $0x200] sm:$0xff]
        %v956 = vld [vmem:[#allocation8 + $0x208] sm:$0xff]
        %v957 = vld [vmem:[#allocation8 + $0x210] sm:$0xff]
        %v958 = vld [vmem:[#allocation8 + $0x218] sm:$0xff]
        %v959 = vld [vmem:[#allocation8 + $0x220] sm:$0xff]
        %v960 = vld [vmem:[#allocation8 + $0x228] sm:$0xff]
        %v961 = vld [vmem:[#allocation8 + $0x230] sm:$0xff]
        %v962 = vld [vmem:[#allocation8 + $0x238] sm:$0xff]
        %v963 = vld [vmem:[#allocation8 + $0x240] sm:$0xff]
        %v964 = vld [vmem:[#allocation8 + $0x248] sm:$0xff]
        %v965 = vld [vmem:[#allocation8 + $0x250] sm:$0xff]
        %v966 = vld [vmem:[#allocation8 + $0x258] sm:$0xff]
        %v967 = vld [vmem:[#allocation8 + $0x260] sm:$0xff]
        %v968 = vld [vmem:[#allocation8 + $0x268] sm:$0xff]
        %v969 = vld [vmem:[#allocation8 + $0x270] sm:$0xff]
        %v970 = vld [vmem:[#allocation8 + $0x278] sm:$0xff]
        %v971 = vld [vmem:[#allocation8 + $0x280] sm:$0xff]
        %v972 = vld [vmem:[#allocation8 + $0x288] sm:$0xff]
        %v973 = vld [vmem:[#allocation8 + $0x290] sm:$0xff]
        %v974 = vld [vmem:[#allocation8 + $0x298] sm:$0xff]
        %v975 = vld [vmem:[#allocation8 + $0x2a0] sm:$0xff]
        %v976 = vld [vmem:[#allocation8 + $0x2a8] sm:$0xff]
        %v977 = vld [vmem:[#allocation8 + $0x2b0] sm:$0xff]
        %v978 = vld [vmem:[#allocation8 + $0x2b8] sm:$0xff]
        %v979 = vld [vmem:[#allocation8 + $0x2c0] sm:$0xff]
        %v980 = vld [vmem:[#allocation8 + $0x2c8] sm:$0xff]
        %v981 = vld [vmem:[#allocation8 + $0x2d0] sm:$0xff]
        %v982 = vld [vmem:[#allocation8 + $0x2d8] sm:$0xff]
        %v983 = vld [vmem:[#allocation8 + $0x2e0] sm:$0xff]
        %v984 = vld [vmem:[#allocation8 + $0x2e8] sm:$0xff]
        %v985 = vld [vmem:[#allocation8 + $0x2f0] sm:$0xff]
        %v986 = vld [vmem:[#allocation8 + $0x2f8] sm:$0xff]
        %v987 = vld [vmem:[#allocation8 + $0x300] sm:$0xff]
        %v988 = vld [vmem:[#allocation8 + $0x308] sm:$0xff]
        %v989 = vld [vmem:[#allocation8 + $0x310] sm:$0xff]
        %v990 = vld [vmem:[#allocation8 + $0x318] sm:$0xff]
        %v991 = vld [vmem:[#allocation8 + $0x320] sm:$0xff]
        %v992 = vld [vmem:[#allocation8 + $0x328] sm:$0xff]
        %v993 = vld [vmem:[#allocation8 + $0x330] sm:$0xff]
        %v994 = vld [vmem:[#allocation8 + $0x338] sm:$0xff]
        %v995 = vld [vmem:[#allocation8 + $0x340] sm:$0xff]
        %v996 = vld [vmem:[#allocation8 + $0x348] sm:$0xff]
        %v997 = vld [vmem:[#allocation8 + $0x350] sm:$0xff]
        %v998 = vld [vmem:[#allocation8 + $0x358] sm:$0xff]
        %v999 = vld [vmem:[#allocation8 + $0x360] sm:$0xff]
        %v1000 = vld [vmem:[#allocation8 + $0x368] sm:$0xff]
        %v1001 = vld [vmem:[#allocation8 + $0x370] sm:$0xff]
        %v1002 = vld [vmem:[#allocation8 + $0x378] sm:$0xff]
        %v1003 = vld [vmem:[#allocation8 + $0x380] sm:$0xff]
        %v1004 = vld [vmem:[#allocation8 + $0x388] sm:$0xff]
        %v1005 = vld [vmem:[#allocation8 + $0x390] sm:$0xff]
        %v1006 = vld [vmem:[#allocation8 + $0x398] sm:$0xff]
        %v1007 = vld [vmem:[#allocation8 + $0x3a0] sm:$0xff]
        %v1008 = vld [vmem:[#allocation8 + $0x3a8] sm:$0xff]
        %v1009 = vld [vmem:[#allocation8 + $0x3b0] sm:$0xff]
        %v1010 = vld [vmem:[#allocation8 + $0x3b8] sm:$0xff]
        %v1011 = vld [vmem:[#allocation8 + $0x3c0] sm:$0xff]
        %v1012 = vld [vmem:[#allocation8 + $0x3c8] sm:$0xff]
        %v1013 = vld [vmem:[#allocation8 + $0x3d0] sm:$0xff]
        %v1014 = vld [vmem:[#allocation8 + $0x3d8] sm:$0xff]
        %v1015 = vld [vmem:[#allocation8 + $0x3e0] sm:$0xff]
        %v1016 = vld [vmem:[#allocation8 + $0x3e8] sm:$0xff]
        %v1017 = vld [vmem:[#allocation8 + $0x3f0] sm:$0xff]
        %v1018 = vld [vmem:[#allocation8 + $0x3f8] sm:$0xff]
        %v1019 = vld [vmem:[#allocation8 + $0x400] sm:$0xff]
        %v1020 = vld [vmem:[#allocation8 + $0x408] sm:$0xff]
        %v1021 = vld [vmem:[#allocation8 + $0x410] sm:$0xff]
        %v1022 = vld [vmem:[#allocation8 + $0x418] sm:$0xff]
        %v1023 = vld [vmem:[#allocation8 + $0x420] sm:$0xff]
        %v1024 = vld [vmem:[#allocation8 + $0x428] sm:$0xff]
        %v1025 = vld [vmem:[#allocation8 + $0x430] sm:$0xff]
        %v1026 = vld [vmem:[#allocation8 + $0x438] sm:$0xff]
        %v1027 = vld [vmem:[#allocation8 + $0x440] sm:$0xff]
        %v1028 = vld [vmem:[#allocation8 + $0x448] sm:$0xff]
        %v1029 = vld [vmem:[#allocation8 + $0x450] sm:$0xff]
        %v1030 = vld [vmem:[#allocation8 + $0x458] sm:$0xff]
        %v1031 = vld [vmem:[#allocation8 + $0x460] sm:$0xff]
        %v1032 = vld [vmem:[#allocation8 + $0x468] sm:$0xff]
        %v1033 = vld [vmem:[#allocation8 + $0x470] sm:$0xff]
        %v1034 = vld [vmem:[#allocation8 + $0x478] sm:$0xff]
        %v1035 = vld [vmem:[#allocation8 + $0x480] sm:$0xff]
        %v1036 = vld [vmem:[#allocation8 + $0x488] sm:$0xff]
        %v1037 = vld [vmem:[#allocation8 + $0x490] sm:$0xff]
        %v1038 = vld [vmem:[#allocation8 + $0x498] sm:$0xff]
        %v1039 = vld [vmem:[#allocation8 + $0x4a0] sm:$0xff]
        %v1040 = vld [vmem:[#allocation8 + $0x4a8] sm:$0xff]
        %v1041 = vld [vmem:[#allocation8 + $0x4b0] sm:$0xff]
        %v1042 = vld [vmem:[#allocation8 + $0x4b8] sm:$0xff]
        %v1043 = vld [vmem:[#allocation8 + $0x4c0] sm:$0xff]
        %v1044 = vld [vmem:[#allocation8 + $0x4c8] sm:$0xff]
        %v1045 = vld [vmem:[#allocation8 + $0x4d0] sm:$0xff]
        %v1046 = vld [vmem:[#allocation8 + $0x4d8] sm:$0xff]
        %v1047 = vld [vmem:[#allocation8 + $0x4e0] sm:$0xff]
        %v1048 = vld [vmem:[#allocation8 + $0x4e8] sm:$0xff]
        %v1049 = vld [vmem:[#allocation8 + $0x4f0] sm:$0xff]
        %v1050 = vld [vmem:[#allocation8 + $0x4f8] sm:$0xff]
        %v1051 = vld [vmem:[#allocation8 + $0x500] sm:$0xff]
        %v1052 = vld [vmem:[#allocation8 + $0x508] sm:$0xff]
        %v1053 = vld [vmem:[#allocation8 + $0x510] sm:$0xff]
        %v1054 = vld [vmem:[#allocation8 + $0x518] sm:$0xff]
        %v1055 = vld [vmem:[#allocation8 + $0x520] sm:$0xff]
        %v1056 = vld [vmem:[#allocation8 + $0x528] sm:$0xff]
        %v1057 = vld [vmem:[#allocation8 + $0x530] sm:$0xff]
        %v1058 = vld [vmem:[#allocation8 + $0x538] sm:$0xff]
        %v1059 = vld [vmem:[#allocation8 + $0x540] sm:$0xff]
        %v1060 = vld [vmem:[#allocation8 + $0x548] sm:$0xff]
        %v1061 = vld [vmem:[#allocation8 + $0x550] sm:$0xff]
        %v1062 = vld [vmem:[#allocation8 + $0x558] sm:$0xff]
        %v1063 = vld [vmem:[#allocation8 + $0x560] sm:$0xff]
        %v1064 = vld [vmem:[#allocation8 + $0x568] sm:$0xff]
        %v1065 = vld [vmem:[#allocation8 + $0x570] sm:$0xff]
        %v1066 = vld [vmem:[#allocation8 + $0x578] sm:$0xff]
        %v1067 = vld [vmem:[#allocation8 + $0x580] sm:$0xff]
        %v1068 = vld [vmem:[#allocation8 + $0x588] sm:$0xff]
        %v1069 = vld [vmem:[#allocation8 + $0x590] sm:$0xff]
        %v1070 = vld [vmem:[#allocation8 + $0x598] sm:$0xff]
        %v1071 = vld [vmem:[#allocation8 + $0x5a0] sm:$0xff]
        %v1072 = vld [vmem:[#allocation8 + $0x5a8] sm:$0xff]
        %v1073 = vld [vmem:[#allocation8 + $0x5b0] sm:$0xff]
        %v1074 = vld [vmem:[#allocation8 + $0x5b8] sm:$0xff]
        %v1075 = vld [vmem:[#allocation8 + $0x5c0] sm:$0xff]
        %v1076 = vld [vmem:[#allocation8 + $0x5c8] sm:$0xff]
        %v1077 = vld [vmem:[#allocation8 + $0x5d0] sm:$0xff]
        %v1078 = vld [vmem:[#allocation8 + $0x5d8] sm:$0xff]
        %v1079 = vld [vmem:[#allocation8 + $0x5e0] sm:$0xff]
        %v1080 = vld [vmem:[#allocation8 + $0x5e8] sm:$0xff]
        %v1081 = vld [vmem:[#allocation8 + $0x5f0] sm:$0xff]
        %v1082 = vld [vmem:[#allocation8 + $0x5f8] sm:$0xff]
        %v1083 = vld [vmem:[#allocation8 + $0x600] sm:$0xff]
        %v1084 = vld [vmem:[#allocation8 + $0x608] sm:$0xff]
        %v1085 = vld [vmem:[#allocation8 + $0x610] sm:$0xff]
        %v1086 = vld [vmem:[#allocation8 + $0x618] sm:$0xff]
        %v1087 = vld [vmem:[#allocation8 + $0x620] sm:$0xff]
        %v1088 = vld [vmem:[#allocation8 + $0x628] sm:$0xff]
        %v1089 = vld [vmem:[#allocation8 + $0x630] sm:$0xff]
        %v1090 = vld [vmem:[#allocation8 + $0x638] sm:$0xff]
        %v1091 = vld [vmem:[#allocation8 + $0x640] sm:$0xff]
        %v1092 = vld [vmem:[#allocation8 + $0x648] sm:$0xff]
        %v1093 = vld [vmem:[#allocation8 + $0x650] sm:$0xff]
        %v1094 = vld [vmem:[#allocation8 + $0x658] sm:$0xff]
        %v1095 = vld [vmem:[#allocation8 + $0x660] sm:$0xff]
        %v1096 = vld [vmem:[#allocation8 + $0x668] sm:$0xff]
        %v1097 = vld [vmem:[#allocation8 + $0x670] sm:$0xff]
        %v1098 = vld [vmem:[#allocation8 + $0x678] sm:$0xff]
        %v1099 = vld [vmem:[#allocation8 + $0x680] sm:$0xff]
        %v1100 = vld [vmem:[#allocation8 + $0x688] sm:$0xff]
        %v1101 = vld [vmem:[#allocation8 + $0x690] sm:$0xff]
        %v1102 = vld [vmem:[#allocation8 + $0x698] sm:$0xff]
        %v1103 = vld [vmem:[#allocation8 + $0x6a0] sm:$0xff]
        %v1104 = vld [vmem:[#allocation8 + $0x6a8] sm:$0xff]
        %v1105 = vld [vmem:[#allocation8 + $0x6b0] sm:$0xff]
        %v1106 = vld [vmem:[#allocation8 + $0x6b8] sm:$0xff]
        %v1107 = vld [vmem:[#allocation8 + $0x6c0] sm:$0xff]
        %v1108 = vld [vmem:[#allocation8 + $0x6c8] sm:$0xff]
        %v1109 = vld [vmem:[#allocation8 + $0x6d0] sm:$0xff]
        %v1110 = vld [vmem:[#allocation8 + $0x6d8] sm:$0xff]
        %v1111 = vld [vmem:[#allocation8 + $0x6e0] sm:$0xff]
        %v1112 = vld [vmem:[#allocation8 + $0x6e8] sm:$0xff]
        %v1113 = vld [vmem:[#allocation8 + $0x6f0] sm:$0xff]
        %v1114 = vld [vmem:[#allocation8 + $0x6f8] sm:$0xff]
        %v1115 = vld [vmem:[#allocation8 + $0x700] sm:$0xff]
        %v1116 = vld [vmem:[#allocation8 + $0x708] sm:$0xff]
        %v1117 = vld [vmem:[#allocation8 + $0x710] sm:$0xff]
        %v1118 = vld [vmem:[#allocation8 + $0x718] sm:$0xff]
        %v1119 = vld [vmem:[#allocation8 + $0x720] sm:$0xff]
        %v1120 = vld [vmem:[#allocation8 + $0x728] sm:$0xff]
        %v1121 = vld [vmem:[#allocation8 + $0x730] sm:$0xff]
        %v1122 = vld [vmem:[#allocation8 + $0x738] sm:$0xff]
        %v1123 = vld [vmem:[#allocation8 + $0x740] sm:$0xff]
        %v1124 = vld [vmem:[#allocation8 + $0x748] sm:$0xff]
        %v1125 = vld [vmem:[#allocation8 + $0x750] sm:$0xff]
        %v1126 = vld [vmem:[#allocation8 + $0x758] sm:$0xff]
        %v1127 = vld [vmem:[#allocation8 + $0x760] sm:$0xff]
        %v1128 = vld [vmem:[#allocation8 + $0x768] sm:$0xff]
        %v1129 = vld [vmem:[#allocation8 + $0x770] sm:$0xff]
        %v1130 = vld [vmem:[#allocation8 + $0x778] sm:$0xff]
        %v1131 = vld [vmem:[#allocation8 + $0x780] sm:$0xff]
        %v1132 = vld [vmem:[#allocation8 + $0x788] sm:$0xff]
        %v1133 = vld [vmem:[#allocation8 + $0x790] sm:$0xff]
        %v1134 = vld [vmem:[#allocation8 + $0x798] sm:$0xff]
        %v1135 = vld [vmem:[#allocation8 + $0x7a0] sm:$0xff]
        %v1136 = vld [vmem:[#allocation8 + $0x7a8] sm:$0xff]
        %v1137 = vld [vmem:[#allocation8 + $0x7b0] sm:$0xff]
        %v1138 = vld [vmem:[#allocation8 + $0x7b8] sm:$0xff]
        %v1139 = vld [vmem:[#allocation8 + $0x7c0] sm:$0xff]
        %v1140 = vld [vmem:[#allocation8 + $0x7c8] sm:$0xff]
        %v1141 = vld [vmem:[#allocation8 + $0x7d0] sm:$0xff]
        %v1142 = vld [vmem:[#allocation8 + $0x7d8] sm:$0xff]
        %v1143 = vld [vmem:[#allocation8 + $0x7e0] sm:$0xff]
        %v1144 = vld [vmem:[#allocation8 + $0x7e8] sm:$0xff]
        %v1145 = vld [vmem:[#allocation8 + $0x7f0] sm:$0xff]
        %v1146 = vld [vmem:[#allocation8 + $0x7f8] sm:$0xff]
        %v1147 = vld [vmem:[#allocation10] sm:$0xf]
        %v1149 = vperm.slane %v1147, 0
        %v1150 = vperm.slane %v1147, 1
        %v1151 = vperm.slane %v1147, 2
        %v1152 = vperm.slane %v1147, 3
        %1157 = vmatpush.msra.mxu0 %v951
        %1158 = vmatpush.msra.mxu0 %v947
        %1159 = vmatpush.msra.mxu0 %v943
        %1160 = vmatpush.msra.mxu0 %v939
        %1161 = vmatpush.msra.mxu0 %v935
        %1162 = vmatpush.msra.mxu0 %v931
        %1163 = vmatpush.msra.mxu0 %v927
        %1164 = vmatpush.msra.mxu0 %v923
        %1165 = vmatpush.msra.mxu0 %v919
        %1166 = vmatpush.msra.mxu0 %v915
        %1167 = vmatpush.msra.mxu0 %v911
        %1168 = vmatpush.msra.mxu0 %v907
        %1169 = vmatpush.msra.mxu0 %v903
        %1170 = vmatpush.msra.mxu0 %v899
        %1171 = vmatpush.msra.mxu0 %v895
        %1172 = vmatpush.msra.mxu0 %v891
        %1173 = vmatmul.f32.gmra.mxu0 %v887
        %v1174 = vpop.f32.mrf.mxu0
        %v1175 = vadd.f32 %v1149, %v1174
        %1176 = vdwg.mxu0
        %1177 = vmatpush.msra.mxu0 %v1015
        %1178 = vmatpush.msra.mxu0 %v1011
        %1179 = vmatpush.msra.mxu0 %v1007
        %1180 = vmatpush.msra.mxu0 %v1003
        %1181 = vmatpush.msra.mxu0 %v999
        %1182 = vmatpush.msra.mxu0 %v995
        %1183 = vmatpush.msra.mxu0 %v991
        %1184 = vmatpush.msra.mxu0 %v987
        %1185 = vmatpush.msra.mxu0 %v983
        %1186 = vmatpush.msra.mxu0 %v979
        %1187 = vmatpush.msra.mxu0 %v975
        %1188 = vmatpush.msra.mxu0 %v971
        %1189 = vmatpush.msra.mxu0 %v967
        %1190 = vmatpush.msra.mxu0 %v963
        %1191 = vmatpush.msra.mxu0 %v959
        %1192 = vmatpush.msra.mxu0 %v955
        %1193 = vmatmul.f32.gmra.mxu0 %v888
        %v1194 = vpop.f32.mrf.mxu0
        %v1195 = vadd.f32 %v1175, %v1194
        %1196 = vdwg.mxu0
        %1197 = vmatpush.msra.mxu0 %v1079
        %1198 = vmatpush.msra.mxu0 %v1075
        %1199 = vmatpush.msra.mxu0 %v1071
        %1200 = vmatpush.msra.mxu0 %v1067
        %1201 = vmatpush.msra.mxu0 %v1063
        %1202 = vmatpush.msra.mxu0 %v1059
        %1203 = vmatpush.msra.mxu0 %v1055
        %1204 = vmatpush.msra.mxu0 %v1051
        %1205 = vmatpush.msra.mxu0 %v1047
        %1206 = vmatpush.msra.mxu0 %v1043
        %1207 = vmatpush.msra.mxu0 %v1039
        %1208 = vmatpush.msra.mxu0 %v1035
        %1209 = vmatpush.msra.mxu0 %v1031
        %1210 = vmatpush.msra.mxu0 %v1027
        %1211 = vmatpush.msra.mxu0 %v1023
        %1212 = vmatpush.msra.mxu0 %v1019
        %1213 = vmatmul.f32.gmra.mxu0 %v889
        %v1214 = vpop.f32.mrf.mxu0
        %v1215 = vadd.f32 %v1195, %v1214
        %1216 = vdwg.mxu0
        %1217 = vmatpush.msra.mxu0 %v1143
        %1218 = vmatpush.msra.mxu0 %v1139
        %1219 = vmatpush.msra.mxu0 %v1135
        %1220 = vmatpush.msra.mxu0 %v1131
        %1221 = vmatpush.msra.mxu0 %v1127
        %1222 = vmatpush.msra.mxu0 %v1123
        %1223 = vmatpush.msra.mxu0 %v1119
        %1224 = vmatpush.msra.mxu0 %v1115
        %1225 = vmatpush.msra.mxu0 %v1111
        %1226 = vmatpush.msra.mxu0 %v1107
        %1227 = vmatpush.msra.mxu0 %v1103
        %1228 = vmatpush.msra.mxu0 %v1099
        %1229 = vmatpush.msra.mxu0 %v1095
        %1230 = vmatpush.msra.mxu0 %v1091
        %1231 = vmatpush.msra.mxu0 %v1087
        %1232 = vmatpush.msra.mxu0 %v1083
        %1233 = vmatmul.f32.gmra.mxu0 %v890
        %v1234 = vpop.f32.mrf.mxu0
        %v1235 = vadd.f32 %v1215, %v1234
        %1236 = vdwg.mxu0
        %1237 = vmatpush.msra.mxu0 %v952
        %1238 = vmatpush.msra.mxu0 %v948
        %1239 = vmatpush.msra.mxu0 %v944
        %1240 = vmatpush.msra.mxu0 %v940
        %1241 = vmatpush.msra.mxu0 %v936
        %1242 = vmatpush.msra.mxu0 %v932
        %1243 = vmatpush.msra.mxu0 %v928
        %1244 = vmatpush.msra.mxu0 %v924
        %1245 = vmatpush.msra.mxu0 %v920
        %1246 = vmatpush.msra.mxu0 %v916
        %1247 = vmatpush.msra.mxu0 %v912
        %1248 = vmatpush.msra.mxu0 %v908
        %1249 = vmatpush.msra.mxu0 %v904
        %1250 = vmatpush.msra.mxu0 %v900
        %1251 = vmatpush.msra.mxu0 %v896
        %1252 = vmatpush.msra.mxu0 %v892
        %1253 = vmatmul.f32.gmra.mxu0 %v887
        %v1254 = vpop.f32.mrf.mxu0
        %v1255 = vadd.f32 %v1150, %v1254
        %1256 = vdwg.mxu0
        %1257 = vmatpush.msra.mxu0 %v1016
        %1258 = vmatpush.msra.mxu0 %v1012
        %1259 = vmatpush.msra.mxu0 %v1008
        %1260 = vmatpush.msra.mxu0 %v1004
        %1261 = vmatpush.msra.mxu0 %v1000
        %1262 = vmatpush.msra.mxu0 %v996
        %1263 = vmatpush.msra.mxu0 %v992
        %1264 = vmatpush.msra.mxu0 %v988
        %1265 = vmatpush.msra.mxu0 %v984
        %1266 = vmatpush.msra.mxu0 %v980
        %1267 = vmatpush.msra.mxu0 %v976
        %1268 = vmatpush.msra.mxu0 %v972
        %1269 = vmatpush.msra.mxu0 %v968
        %1270 = vmatpush.msra.mxu0 %v964
        %1271 = vmatpush.msra.mxu0 %v960
        %1272 = vmatpush.msra.mxu0 %v956
        %1273 = vmatmul.f32.gmra.mxu0 %v888
        %v1274 = vpop.f32.mrf.mxu0
        %v1275 = vadd.f32 %v1255, %v1274
        %1276 = vdwg.mxu0
        %1277 = vmatpush.msra.mxu0 %v1080
        %1278 = vmatpush.msra.mxu0 %v1076
        %1279 = vmatpush.msra.mxu0 %v1072
        %1280 = vmatpush.msra.mxu0 %v1068
        %1281 = vmatpush.msra.mxu0 %v1064
        %1282 = vmatpush.msra.mxu0 %v1060
        %1283 = vmatpush.msra.mxu0 %v1056
        %1284 = vmatpush.msra.mxu0 %v1052
        %1285 = vmatpush.msra.mxu0 %v1048
        %1286 = vmatpush.msra.mxu0 %v1044
        %1287 = vmatpush.msra.mxu0 %v1040
        %1288 = vmatpush.msra.mxu0 %v1036
        %1289 = vmatpush.msra.mxu0 %v1032
        %1290 = vmatpush.msra.mxu0 %v1028
        %1291 = vmatpush.msra.mxu0 %v1024
        %1292 = vmatpush.msra.mxu0 %v1020
        %1293 = vmatmul.f32.gmra.mxu0 %v889
        %v1294 = vpop.f32.mrf.mxu0
        %v1295 = vadd.f32 %v1275, %v1294
        %1296 = vdwg.mxu0
        %1297 = vmatpush.msra.mxu0 %v1144
        %1298 = vmatpush.msra.mxu0 %v1140
        %1299 = vmatpush.msra.mxu0 %v1136
        %1300 = vmatpush.msra.mxu0 %v1132
        %1301 = vmatpush.msra.mxu0 %v1128
        %1302 = vmatpush.msra.mxu0 %v1124
        %1303 = vmatpush.msra.mxu0 %v1120
        %1304 = vmatpush.msra.mxu0 %v1116
        %1305 = vmatpush.msra.mxu0 %v1112
        %1306 = vmatpush.msra.mxu0 %v1108
        %1307 = vmatpush.msra.mxu0 %v1104
        %1308 = vmatpush.msra.mxu0 %v1100
        %1309 = vmatpush.msra.mxu0 %v1096
        %1310 = vmatpush.msra.mxu0 %v1092
        %1311 = vmatpush.msra.mxu0 %v1088
        %1312 = vmatpush.msra.mxu0 %v1084
        %1313 = vmatmul.f32.gmra.mxu0 %v890
        %v1314 = vpop.f32.mrf.mxu0
        %v1315 = vadd.f32 %v1295, %v1314
        %1316 = vdwg.mxu0
        %1317 = vmatpush.msra.mxu0 %v953
        %1318 = vmatpush.msra.mxu0 %v949
        %1319 = vmatpush.msra.mxu0 %v945
        %1320 = vmatpush.msra.mxu0 %v941
        %1321 = vmatpush.msra.mxu0 %v937
        %1322 = vmatpush.msra.mxu0 %v933
        %1323 = vmatpush.msra.mxu0 %v929
        %1324 = vmatpush.msra.mxu0 %v925
        %1325 = vmatpush.msra.mxu0 %v921
        %1326 = vmatpush.msra.mxu0 %v917
        %1327 = vmatpush.msra.mxu0 %v913
        %1328 = vmatpush.msra.mxu0 %v909
        %1329 = vmatpush.msra.mxu0 %v905
        %1330 = vmatpush.msra.mxu0 %v901
        %1331 = vmatpush.msra.mxu0 %v897
        %1332 = vmatpush.msra.mxu0 %v893
        %1333 = vmatmul.f32.gmra.mxu0 %v887
        %v1334 = vpop.f32.mrf.mxu0
        %v1335 = vadd.f32 %v1151, %v1334
        %1336 = vdwg.mxu0
        %1337 = vmatpush.msra.mxu0 %v1017
        %1338 = vmatpush.msra.mxu0 %v1013
        %1339 = vmatpush.msra.mxu0 %v1009
        %1340 = vmatpush.msra.mxu0 %v1005
        %1341 = vmatpush.msra.mxu0 %v1001
        %1342 = vmatpush.msra.mxu0 %v997
        %1343 = vmatpush.msra.mxu0 %v993
        %1344 = vmatpush.msra.mxu0 %v989
        %1345 = vmatpush.msra.mxu0 %v985
        %1346 = vmatpush.msra.mxu0 %v981
        %1347 = vmatpush.msra.mxu0 %v977
        %1348 = vmatpush.msra.mxu0 %v973
        %1349 = vmatpush.msra.mxu0 %v969
        %1350 = vmatpush.msra.mxu0 %v965
        %1351 = vmatpush.msra.mxu0 %v961
        %1352 = vmatpush.msra.mxu0 %v957
        %1353 = vmatmul.f32.gmra.mxu0 %v888
        %v1354 = vpop.f32.mrf.mxu0
        %v1355 = vadd.f32 %v1335, %v1354
        %1356 = vdwg.mxu0
        %1357 = vmatpush.msra.mxu0 %v1081
        %1358 = vmatpush.msra.mxu0 %v1077
        %1359 = vmatpush.msra.mxu0 %v1073
        %1360 = vmatpush.msra.mxu0 %v1069
        %1361 = vmatpush.msra.mxu0 %v1065
        %1362 = vmatpush.msra.mxu0 %v1061
        %1363 = vmatpush.msra.mxu0 %v1057
        %1364 = vmatpush.msra.mxu0 %v1053
        %1365 = vmatpush.msra.mxu0 %v1049
        %1366 = vmatpush.msra.mxu0 %v1045
        %1367 = vmatpush.msra.mxu0 %v1041
        %1368 = vmatpush.msra.mxu0 %v1037
        %1369 = vmatpush.msra.mxu0 %v1033
        %1370 = vmatpush.msra.mxu0 %v1029
        %1371 = vmatpush.msra.mxu0 %v1025
        %1372 = vmatpush.msra.mxu0 %v1021
        %1373 = vmatmul.f32.gmra.mxu0 %v889
        %v1374 = vpop.f32.mrf.mxu0
        %v1375 = vadd.f32 %v1355, %v1374
        %1376 = vdwg.mxu0
        %1377 = vmatpush.msra.mxu0 %v1145
        %1378 = vmatpush.msra.mxu0 %v1141
        %1379 = vmatpush.msra.mxu0 %v1137
        %1380 = vmatpush.msra.mxu0 %v1133
        %1381 = vmatpush.msra.mxu0 %v1129
        %1382 = vmatpush.msra.mxu0 %v1125
        %1383 = vmatpush.msra.mxu0 %v1121
        %1384 = vmatpush.msra.mxu0 %v1117
        %1385 = vmatpush.msra.mxu0 %v1113
        %1386 = vmatpush.msra.mxu0 %v1109
        %1387 = vmatpush.msra.mxu0 %v1105
        %1388 = vmatpush.msra.mxu0 %v1101
        %1389 = vmatpush.msra.mxu0 %v1097
        %1390 = vmatpush.msra.mxu0 %v1093
        %1391 = vmatpush.msra.mxu0 %v1089
        %1392 = vmatpush.msra.mxu0 %v1085
        %1393 = vmatmul.f32.gmra.mxu0 %v890
        %v1394 = vpop.f32.mrf.mxu0
        %v1395 = vadd.f32 %v1375, %v1394
        %1396 = vdwg.mxu0
        %1397 = vmatpush.msra.mxu0 %v954
        %1398 = vmatpush.msra.mxu0 %v950
        %1399 = vmatpush.msra.mxu0 %v946
        %1400 = vmatpush.msra.mxu0 %v942
        %1401 = vmatpush.msra.mxu0 %v938
        %1402 = vmatpush.msra.mxu0 %v934
        %1403 = vmatpush.msra.mxu0 %v930
        %1404 = vmatpush.msra.mxu0 %v926
        %1405 = vmatpush.msra.mxu0 %v922
        %1406 = vmatpush.msra.mxu0 %v918
        %1407 = vmatpush.msra.mxu0 %v914
        %1408 = vmatpush.msra.mxu0 %v910
        %1409 = vmatpush.msra.mxu0 %v906
        %1410 = vmatpush.msra.mxu0 %v902
        %1411 = vmatpush.msra.mxu0 %v898
        %1412 = vmatpush.msra.mxu0 %v894
        %1413 = vmatmul.f32.gmra.mxu0 %v887
        %v1414 = vpop.f32.mrf.mxu0
        %v1415 = vadd.f32 %v1152, %v1414
        %1416 = vdwg.mxu0
        %1417 = vmatpush.msra.mxu0 %v1018
        %1418 = vmatpush.msra.mxu0 %v1014
        %1419 = vmatpush.msra.mxu0 %v1010
        %1420 = vmatpush.msra.mxu0 %v1006
        %1421 = vmatpush.msra.mxu0 %v1002
        %1422 = vmatpush.msra.mxu0 %v998
        %1423 = vmatpush.msra.mxu0 %v994
        %1424 = vmatpush.msra.mxu0 %v990
        %1425 = vmatpush.msra.mxu0 %v986
        %1426 = vmatpush.msra.mxu0 %v982
        %1427 = vmatpush.msra.mxu0 %v978
        %1428 = vmatpush.msra.mxu0 %v974
        %1429 = vmatpush.msra.mxu0 %v970
        %1430 = vmatpush.msra.mxu0 %v966
        %1431 = vmatpush.msra.mxu0 %v962
        %1432 = vmatpush.msra.mxu0 %v958
        %1433 = vmatmul.f32.gmra.mxu0 %v888
        %v1434 = vpop.f32.mrf.mxu0
        %v1435 = vadd.f32 %v1415, %v1434
        %1436 = vdwg.mxu0
        %1437 = vmatpush.msra.mxu0 %v1082
        %1438 = vmatpush.msra.mxu0 %v1078
        %1439 = vmatpush.msra.mxu0 %v1074
        %1440 = vmatpush.msra.mxu0 %v1070
        %1441 = vmatpush.msra.mxu0 %v1066
        %1442 = vmatpush.msra.mxu0 %v1062
        %1443 = vmatpush.msra.mxu0 %v1058
        %1444 = vmatpush.msra.mxu0 %v1054
        %1445 = vmatpush.msra.mxu0 %v1050
        %1446 = vmatpush.msra.mxu0 %v1046
        %1447 = vmatpush.msra.mxu0 %v1042
        %1448 = vmatpush.msra.mxu0 %v1038
        %1449 = vmatpush.msra.mxu0 %v1034
        %1450 = vmatpush.msra.mxu0 %v1030
        %1451 = vmatpush.msra.mxu0 %v1026
        %1452 = vmatpush.msra.mxu0 %v1022
        %1453 = vmatmul.f32.gmra.mxu0 %v889
        %v1454 = vpop.f32.mrf.mxu0
        %v1455 = vadd.f32 %v1435, %v1454
        %1456 = vdwg.mxu0
        %1457 = vmatpush.msra.mxu0 %v1146
        %1458 = vmatpush.msra.mxu0 %v1142
        %1459 = vmatpush.msra.mxu0 %v1138
        %1460 = vmatpush.msra.mxu0 %v1134
        %1461 = vmatpush.msra.mxu0 %v1130
        %1462 = vmatpush.msra.mxu0 %v1126
        %1463 = vmatpush.msra.mxu0 %v1122
        %1464 = vmatpush.msra.mxu0 %v1118
        %1465 = vmatpush.msra.mxu0 %v1114
        %1466 = vmatpush.msra.mxu0 %v1110
        %1467 = vmatpush.msra.mxu0 %v1106
        %1468 = vmatpush.msra.mxu0 %v1102
        %1469 = vmatpush.msra.mxu0 %v1098
        %1470 = vmatpush.msra.mxu0 %v1094
        %1471 = vmatpush.msra.mxu0 %v1090
        %1472 = vmatpush.msra.mxu0 %v1086
        %1473 = vmatmul.f32.gmra.mxu0 %v890
        %v1474 = vpop.f32.mrf.mxu0
        %v1475 = vadd.f32 %v1455, %v1474
        %1476 = vdwg.mxu0
        %v1477 = vmax.f32 %v1235, 0.0
        %v1478 = vmax.f32 %v1315, 0.0
        %v1479 = vmax.f32 %v1395, 0.0
        %v1480 = vmax.f32 %v1475, 0.0
        %v1481 = vld [vmem:[#allocation11] sm:$0xff]
        %v1482 = vld [vmem:[#allocation11 + $0x8] sm:$0xff]
        %v1483 = vld [vmem:[#allocation11 + $0x10] sm:$0xff]
        %v1484 = vld [vmem:[#allocation11 + $0x18] sm:$0xff]
        %v1485 = vld [vmem:[#allocation11 + $0x20] sm:$0xff]
        %v1486 = vld [vmem:[#allocation11 + $0x28] sm:$0xff]
        %v1487 = vld [vmem:[#allocation11 + $0x30] sm:$0xff]
        %v1488 = vld [vmem:[#allocation11 + $0x38] sm:$0xff]
        %v1489 = vld [vmem:[#allocation11 + $0x40] sm:$0xff]
        %v1490 = vld [vmem:[#allocation11 + $0x48] sm:$0xff]
        %v1491 = vld [vmem:[#allocation11 + $0x50] sm:$0xff]
        %v1492 = vld [vmem:[#allocation11 + $0x58] sm:$0xff]
        %v1493 = vld [vmem:[#allocation11 + $0x60] sm:$0xff]
        %v1494 = vld [vmem:[#allocation11 + $0x68] sm:$0xff]
        %v1495 = vld [vmem:[#allocation11 + $0x70] sm:$0xff]
        %v1496 = vld [vmem:[#allocation11 + $0x78] sm:$0xff]
        %v1497 = vld [vmem:[#allocation11 + $0x80] sm:$0xff]
        %v1498 = vld [vmem:[#allocation11 + $0x88] sm:$0xff]
        %v1499 = vld [vmem:[#allocation11 + $0x90] sm:$0xff]
        %v1500 = vld [vmem:[#allocation11 + $0x98] sm:$0xff]
        %v1501 = vld [vmem:[#allocation11 + $0xa0] sm:$0xff]
        %v1502 = vld [vmem:[#allocation11 + $0xa8] sm:$0xff]
        %v1503 = vld [vmem:[#allocation11 + $0xb0] sm:$0xff]
        %v1504 = vld [vmem:[#allocation11 + $0xb8] sm:$0xff]
        %v1505 = vld [vmem:[#allocation11 + $0xc0] sm:$0xff]
        %v1506 = vld [vmem:[#allocation11 + $0xc8] sm:$0xff]
        %v1507 = vld [vmem:[#allocation11 + $0xd0] sm:$0xff]
        %v1508 = vld [vmem:[#allocation11 + $0xd8] sm:$0xff]
        %v1509 = vld [vmem:[#allocation11 + $0xe0] sm:$0xff]
        %v1510 = vld [vmem:[#allocation11 + $0xe8] sm:$0xff]
        %v1511 = vld [vmem:[#allocation11 + $0xf0] sm:$0xff]
        %v1512 = vld [vmem:[#allocation11 + $0xf8] sm:$0xff]
        %v1513 = vld [vmem:[#allocation11 + $0x100] sm:$0xff]
        %v1514 = vld [vmem:[#allocation11 + $0x108] sm:$0xff]
        %v1515 = vld [vmem:[#allocation11 + $0x110] sm:$0xff]
        %v1516 = vld [vmem:[#allocation11 + $0x118] sm:$0xff]
        %v1517 = vld [vmem:[#allocation11 + $0x120] sm:$0xff]
        %v1518 = vld [vmem:[#allocation11 + $0x128] sm:$0xff]
        %v1519 = vld [vmem:[#allocation11 + $0x130] sm:$0xff]
        %v1520 = vld [vmem:[#allocation11 + $0x138] sm:$0xff]
        %v1521 = vld [vmem:[#allocation11 + $0x140] sm:$0xff]
        %v1522 = vld [vmem:[#allocation11 + $0x148] sm:$0xff]
        %v1523 = vld [vmem:[#allocation11 + $0x150] sm:$0xff]
        %v1524 = vld [vmem:[#allocation11 + $0x158] sm:$0xff]
        %v1525 = vld [vmem:[#allocation11 + $0x160] sm:$0xff]
        %v1526 = vld [vmem:[#allocation11 + $0x168] sm:$0xff]
        %v1527 = vld [vmem:[#allocation11 + $0x170] sm:$0xff]
        %v1528 = vld [vmem:[#allocation11 + $0x178] sm:$0xff]
        %v1529 = vld [vmem:[#allocation11 + $0x180] sm:$0xff]
        %v1530 = vld [vmem:[#allocation11 + $0x188] sm:$0xff]
        %v1531 = vld [vmem:[#allocation11 + $0x190] sm:$0xff]
        %v1532 = vld [vmem:[#allocation11 + $0x198] sm:$0xff]
        %v1533 = vld [vmem:[#allocation11 + $0x1a0] sm:$0xff]
        %v1534 = vld [vmem:[#allocation11 + $0x1a8] sm:$0xff]
        %v1535 = vld [vmem:[#allocation11 + $0x1b0] sm:$0xff]
        %v1536 = vld [vmem:[#allocation11 + $0x1b8] sm:$0xff]
        %v1537 = vld [vmem:[#allocation11 + $0x1c0] sm:$0xff]
        %v1538 = vld [vmem:[#allocation11 + $0x1c8] sm:$0xff]
        %v1539 = vld [vmem:[#allocation11 + $0x1d0] sm:$0xff]
        %v1540 = vld [vmem:[#allocation11 + $0x1d8] sm:$0xff]
        %v1541 = vld [vmem:[#allocation11 + $0x1e0] sm:$0xff]
        %v1542 = vld [vmem:[#allocation11 + $0x1e8] sm:$0xff]
        %v1543 = vld [vmem:[#allocation11 + $0x1f0] sm:$0xff]
        %v1544 = vld [vmem:[#allocation11 + $0x1f8] sm:$0xff]
        %v1545 = vld [vmem:[#allocation11 + $0x200] sm:$0xff]
        %v1546 = vld [vmem:[#allocation11 + $0x208] sm:$0xff]
        %v1547 = vld [vmem:[#allocation11 + $0x210] sm:$0xff]
        %v1548 = vld [vmem:[#allocation11 + $0x218] sm:$0xff]
        %v1549 = vld [vmem:[#allocation11 + $0x220] sm:$0xff]
        %v1550 = vld [vmem:[#allocation11 + $0x228] sm:$0xff]
        %v1551 = vld [vmem:[#allocation11 + $0x230] sm:$0xff]
        %v1552 = vld [vmem:[#allocation11 + $0x238] sm:$0xff]
        %v1553 = vld [vmem:[#allocation11 + $0x240] sm:$0xff]
        %v1554 = vld [vmem:[#allocation11 + $0x248] sm:$0xff]
        %v1555 = vld [vmem:[#allocation11 + $0x250] sm:$0xff]
        %v1556 = vld [vmem:[#allocation11 + $0x258] sm:$0xff]
        %v1557 = vld [vmem:[#allocation11 + $0x260] sm:$0xff]
        %v1558 = vld [vmem:[#allocation11 + $0x268] sm:$0xff]
        %v1559 = vld [vmem:[#allocation11 + $0x270] sm:$0xff]
        %v1560 = vld [vmem:[#allocation11 + $0x278] sm:$0xff]
        %v1561 = vld [vmem:[#allocation11 + $0x280] sm:$0xff]
        %v1562 = vld [vmem:[#allocation11 + $0x288] sm:$0xff]
        %v1563 = vld [vmem:[#allocation11 + $0x290] sm:$0xff]
        %v1564 = vld [vmem:[#allocation11 + $0x298] sm:$0xff]
        %v1565 = vld [vmem:[#allocation11 + $0x2a0] sm:$0xff]
        %v1566 = vld [vmem:[#allocation11 + $0x2a8] sm:$0xff]
        %v1567 = vld [vmem:[#allocation11 + $0x2b0] sm:$0xff]
        %v1568 = vld [vmem:[#allocation11 + $0x2b8] sm:$0xff]
        %v1569 = vld [vmem:[#allocation11 + $0x2c0] sm:$0xff]
        %v1570 = vld [vmem:[#allocation11 + $0x2c8] sm:$0xff]
        %v1571 = vld [vmem:[#allocation11 + $0x2d0] sm:$0xff]
        %v1572 = vld [vmem:[#allocation11 + $0x2d8] sm:$0xff]
        %v1573 = vld [vmem:[#allocation11 + $0x2e0] sm:$0xff]
        %v1574 = vld [vmem:[#allocation11 + $0x2e8] sm:$0xff]
        %v1575 = vld [vmem:[#allocation11 + $0x2f0] sm:$0xff]
        %v1576 = vld [vmem:[#allocation11 + $0x2f8] sm:$0xff]
        %v1577 = vld [vmem:[#allocation11 + $0x300] sm:$0xff]
        %v1578 = vld [vmem:[#allocation11 + $0x308] sm:$0xff]
        %v1579 = vld [vmem:[#allocation11 + $0x310] sm:$0xff]
        %v1580 = vld [vmem:[#allocation11 + $0x318] sm:$0xff]
        %v1581 = vld [vmem:[#allocation11 + $0x320] sm:$0xff]
        %v1582 = vld [vmem:[#allocation11 + $0x328] sm:$0xff]
        %v1583 = vld [vmem:[#allocation11 + $0x330] sm:$0xff]
        %v1584 = vld [vmem:[#allocation11 + $0x338] sm:$0xff]
        %v1585 = vld [vmem:[#allocation11 + $0x340] sm:$0xff]
        %v1586 = vld [vmem:[#allocation11 + $0x348] sm:$0xff]
        %v1587 = vld [vmem:[#allocation11 + $0x350] sm:$0xff]
        %v1588 = vld [vmem:[#allocation11 + $0x358] sm:$0xff]
        %v1589 = vld [vmem:[#allocation11 + $0x360] sm:$0xff]
        %v1590 = vld [vmem:[#allocation11 + $0x368] sm:$0xff]
        %v1591 = vld [vmem:[#allocation11 + $0x370] sm:$0xff]
        %v1592 = vld [vmem:[#allocation11 + $0x378] sm:$0xff]
        %v1593 = vld [vmem:[#allocation11 + $0x380] sm:$0xff]
        %v1594 = vld [vmem:[#allocation11 + $0x388] sm:$0xff]
        %v1595 = vld [vmem:[#allocation11 + $0x390] sm:$0xff]
        %v1596 = vld [vmem:[#allocation11 + $0x398] sm:$0xff]
        %v1597 = vld [vmem:[#allocation11 + $0x3a0] sm:$0xff]
        %v1598 = vld [vmem:[#allocation11 + $0x3a8] sm:$0xff]
        %v1599 = vld [vmem:[#allocation11 + $0x3b0] sm:$0xff]
        %v1600 = vld [vmem:[#allocation11 + $0x3b8] sm:$0xff]
        %v1601 = vld [vmem:[#allocation11 + $0x3c0] sm:$0xff]
        %v1602 = vld [vmem:[#allocation11 + $0x3c8] sm:$0xff]
        %v1603 = vld [vmem:[#allocation11 + $0x3d0] sm:$0xff]
        %v1604 = vld [vmem:[#allocation11 + $0x3d8] sm:$0xff]
        %v1605 = vld [vmem:[#allocation11 + $0x3e0] sm:$0xff]
        %v1606 = vld [vmem:[#allocation11 + $0x3e8] sm:$0xff]
        %v1607 = vld [vmem:[#allocation11 + $0x3f0] sm:$0xff]
        %v1608 = vld [vmem:[#allocation11 + $0x3f8] sm:$0xff]
        %v1609 = vld [vmem:[%s6] sm:$0x3]
        %v1611 = vperm.slane %v1609, 0
        %v1612 = vperm.slane %v1609, 1
        %1615 = vmatpush.msra.mxu0 %v1511
        %1616 = vmatpush.msra.mxu0 %v1509
        %1617 = vmatpush.msra.mxu0 %v1507
        %1618 = vmatpush.msra.mxu0 %v1505
        %1619 = vmatpush.msra.mxu0 %v1503
        %1620 = vmatpush.msra.mxu0 %v1501
        %1621 = vmatpush.msra.mxu0 %v1499
        %1622 = vmatpush.msra.mxu0 %v1497
        %1623 = vmatpush.msra.mxu0 %v1495
        %1624 = vmatpush.msra.mxu0 %v1493
        %1625 = vmatpush.msra.mxu0 %v1491
        %1626 = vmatpush.msra.mxu0 %v1489
        %1627 = vmatpush.msra.mxu0 %v1487
        %1628 = vmatpush.msra.mxu0 %v1485
        %1629 = vmatpush.msra.mxu0 %v1483
        %1630 = vmatpush.msra.mxu0 %v1481
        %1631 = vmatmul.f32.gmra.mxu0 %v1477
        %v1632 = vpop.f32.mrf.mxu0
        %v1633 = vadd.f32 %v1611, %v1632
        %1634 = vdwg.mxu0
        %1635 = vmatpush.msra.mxu0 %v1543
        %1636 = vmatpush.msra.mxu0 %v1541
        %1637 = vmatpush.msra.mxu0 %v1539
        %1638 = vmatpush.msra.mxu0 %v1537
        %1639 = vmatpush.msra.mxu0 %v1535
        %1640 = vmatpush.msra.mxu0 %v1533
        %1641 = vmatpush.msra.mxu0 %v1531
        %1642 = vmatpush.msra.mxu0 %v1529
        %1643 = vmatpush.msra.mxu0 %v1527
        %1644 = vmatpush.msra.mxu0 %v1525
        %1645 = vmatpush.msra.mxu0 %v1523
        %1646 = vmatpush.msra.mxu0 %v1521
        %1647 = vmatpush.msra.mxu0 %v1519
        %1648 = vmatpush.msra.mxu0 %v1517
        %1649 = vmatpush.msra.mxu0 %v1515
        %1650 = vmatpush.msra.mxu0 %v1513
        %1651 = vmatmul.f32.gmra.mxu0 %v1478
        %v1652 = vpop.f32.mrf.mxu0
        %v1653 = vadd.f32 %v1633, %v1652
        %1654 = vdwg.mxu0
        %1655 = vmatpush.msra.mxu0 %v1575
        %1656 = vmatpush.msra.mxu0 %v1573
        %1657 = vmatpush.msra.mxu0 %v1571
        %1658 = vmatpush.msra.mxu0 %v1569
        %1659 = vmatpush.msra.mxu0 %v1567
        %1660 = vmatpush.msra.mxu0 %v1565
        %1661 = vmatpush.msra.mxu0 %v1563
        %1662 = vmatpush.msra.mxu0 %v1561
        %1663 = vmatpush.msra.mxu0 %v1559
        %1664 = vmatpush.msra.mxu0 %v1557
        %1665 = vmatpush.msra.mxu0 %v1555
        %1666 = vmatpush.msra.mxu0 %v1553
        %1667 = vmatpush.msra.mxu0 %v1551
        %1668 = vmatpush.msra.mxu0 %v1549
        %1669 = vmatpush.msra.mxu0 %v1547
        %1670 = vmatpush.msra.mxu0 %v1545
        %1671 = vmatmul.f32.gmra.mxu0 %v1479
        %v1672 = vpop.f32.mrf.mxu0
        %v1673 = vadd.f32 %v1653, %v1672
        %1674 = vdwg.mxu0
        %1675 = vmatpush.msra.mxu0 %v1607
        %1676 = vmatpush.msra.mxu0 %v1605
        %1677 = vmatpush.msra.mxu0 %v1603
        %1678 = vmatpush.msra.mxu0 %v1601
        %1679 = vmatpush.msra.mxu0 %v1599
        %1680 = vmatpush.msra.mxu0 %v1597
        %1681 = vmatpush.msra.mxu0 %v1595
        %1682 = vmatpush.msra.mxu0 %v1593
        %1683 = vmatpush.msra.mxu0 %v1591
        %1684 = vmatpush.msra.mxu0 %v1589
        %1685 = vmatpush.msra.mxu0 %v1587
        %1686 = vmatpush.msra.mxu0 %v1585
        %1687 = vmatpush.msra.mxu0 %v1583
        %1688 = vmatpush.msra.mxu0 %v1581
        %1689 = vmatpush.msra.mxu0 %v1579
        %1690 = vmatpush.msra.mxu0 %v1577
        %1691 = vmatmul.f32.gmra.mxu0 %v1480
        %v1692 = vpop.f32.mrf.mxu0
        %v1693 = vadd.f32 %v1673, %v1692
        %1694 = vdwg.mxu0
        %1695 = vmatpush.msra.mxu0 %v1512
        %1696 = vmatpush.msra.mxu0 %v1510
        %1697 = vmatpush.msra.mxu0 %v1508
        %1698 = vmatpush.msra.mxu0 %v1506
        %1699 = vmatpush.msra.mxu0 %v1504
        %1700 = vmatpush.msra.mxu0 %v1502
        %1701 = vmatpush.msra.mxu0 %v1500
        %1702 = vmatpush.msra.mxu0 %v1498
        %1703 = vmatpush.msra.mxu0 %v1496
        %1704 = vmatpush.msra.mxu0 %v1494
        %1705 = vmatpush.msra.mxu0 %v1492
        %1706 = vmatpush.msra.mxu0 %v1490
        %1707 = vmatpush.msra.mxu0 %v1488
        %1708 = vmatpush.msra.mxu0 %v1486
        %1709 = vmatpush.msra.mxu0 %v1484
        %1710 = vmatpush.msra.mxu0 %v1482
        %1711 = vmatmul.f32.gmra.mxu0 %v1477
        %v1712 = vpop.f32.mrf.mxu0
        %v1713 = vadd.f32 %v1612, %v1712
        %1714 = vdwg.mxu0
        %1715 = vmatpush.msra.mxu0 %v1544
        %1716 = vmatpush.msra.mxu0 %v1542
        %1717 = vmatpush.msra.mxu0 %v1540
        %1718 = vmatpush.msra.mxu0 %v1538
        %1719 = vmatpush.msra.mxu0 %v1536
        %1720 = vmatpush.msra.mxu0 %v1534
        %1721 = vmatpush.msra.mxu0 %v1532
        %1722 = vmatpush.msra.mxu0 %v1530
        %1723 = vmatpush.msra.mxu0 %v1528
        %1724 = vmatpush.msra.mxu0 %v1526
        %1725 = vmatpush.msra.mxu0 %v1524
        %1726 = vmatpush.msra.mxu0 %v1522
        %1727 = vmatpush.msra.mxu0 %v1520
        %1728 = vmatpush.msra.mxu0 %v1518
        %1729 = vmatpush.msra.mxu0 %v1516
        %1730 = vmatpush.msra.mxu0 %v1514
        %1731 = vmatmul.f32.gmra.mxu0 %v1478
        %v1732 = vpop.f32.mrf.mxu0
        %v1733 = vadd.f32 %v1713, %v1732
        %1734 = vdwg.mxu0
        %1735 = vmatpush.msra.mxu0 %v1576
        %1736 = vmatpush.msra.mxu0 %v1574
        %1737 = vmatpush.msra.mxu0 %v1572
        %1738 = vmatpush.msra.mxu0 %v1570
        %1739 = vmatpush.msra.mxu0 %v1568
        %1740 = vmatpush.msra.mxu0 %v1566
        %1741 = vmatpush.msra.mxu0 %v1564
        %1742 = vmatpush.msra.mxu0 %v1562
        %1743 = vmatpush.msra.mxu0 %v1560
        %1744 = vmatpush.msra.mxu0 %v1558
        %1745 = vmatpush.msra.mxu0 %v1556
        %1746 = vmatpush.msra.mxu0 %v1554
        %1747 = vmatpush.msra.mxu0 %v1552
        %1748 = vmatpush.msra.mxu0 %v1550
        %1749 = vmatpush.msra.mxu0 %v1548
        %1750 = vmatpush.msra.mxu0 %v1546
        %1751 = vmatmul.f32.gmra.mxu0 %v1479
        %v1752 = vpop.f32.mrf.mxu0
        %v1753 = vadd.f32 %v1733, %v1752
        %1754 = vdwg.mxu0
        %1755 = vmatpush.msra.mxu0 %v1608
        %1756 = vmatpush.msra.mxu0 %v1606
        %1757 = vmatpush.msra.mxu0 %v1604
        %1758 = vmatpush.msra.mxu0 %v1602
        %1759 = vmatpush.msra.mxu0 %v1600
        %1760 = vmatpush.msra.mxu0 %v1598
        %1761 = vmatpush.msra.mxu0 %v1596
        %1762 = vmatpush.msra.mxu0 %v1594
        %1763 = vmatpush.msra.mxu0 %v1592
        %1764 = vmatpush.msra.mxu0 %v1590
        %1765 = vmatpush.msra.mxu0 %v1588
        %1766 = vmatpush.msra.mxu0 %v1586
        %1767 = vmatpush.msra.mxu0 %v1584
        %1768 = vmatpush.msra.mxu0 %v1582
        %1769 = vmatpush.msra.mxu0 %v1580
        %1770 = vmatpush.msra.mxu0 %v1578
        %1771 = vmatmul.f32.gmra.mxu0 %v1480
        %v1772 = vpop.f32.mrf.mxu0
        %v1773 = vadd.f32 %v1753, %v1772
        %1774 = vdwg.mxu0
        %v1775 = vsub.f32 0.0, %v1693
        %v1776 = vsub.f32 0.0, %v1773
        %v1777 = vmul.f32 %v1775, 1.442695
        %v1778 = vpow.pop %v1777
        %v1779 = vmul.f32 %v1776, 1.442695
        %v1780 = vpow.pop %v1779
        %v1781 = vadd.f32 %v1778, 1.0
        %v1782 = vadd.f32 %v1780, 1.0
        %v1783 = vrcp.pop %v1781
        %v1784 = vmul.f32 %v1781, %v1783
        %v1785 = vsub.f32 1.0, %v1784
        %v1786 = vmul.f32 %v1783, %v1785
        %v1787 = vadd.f32 %v1783, %v1786
        %vm1788 = vweird.f32 %v1781
        %vm1789 = vweird.f32 %v1783
        %vm1790 = vmor %vm1788, %vm1789
        %v1791 = vsel %vm1790, %v1783, %v1787
        %v1792 = vand.u32 2147483647, %v1781
        %vm1793 = vcmp.eq.f32.partialorder %v1792, 8.507059e+37
        %v1794 = vand.u32 %v1781, 2147483648
        %v1795 = vor.u32 1.1754944e-38, %v1794
        %v1796 = vsel %vm1793, %v1795, %v1791
        %v1797 = vmul.f32 1.0, %v1796
        %v1798 = vrcp.pop %v1782
        %v1799 = vmul.f32 %v1782, %v1798
        %v1800 = vsub.f32 1.0, %v1799
        %v1801 = vmul.f32 %v1798, %v1800
        %v1802 = vadd.f32 %v1798, %v1801
        %vm1803 = vweird.f32 %v1782
        %vm1804 = vweird.f32 %v1798
        %vm1805 = vmor %vm1803, %vm1804
        %v1806 = vsel %vm1805, %v1798, %v1802
        %v1807 = vand.u32 2147483647, %v1782
        %vm1808 = vcmp.eq.f32.partialorder %v1807, 8.507059e+37
        %v1809 = vand.u32 %v1782, 2147483648
        %v1810 = vor.u32 1.1754944e-38, %v1809
        %v1811 = vsel %vm1808, %v1810, %v1806
        %v1812 = vmul.f32 1.0, %v1811
        %v1813 = vadd.f32 %v1797, %v587
        %v1814 = vadd.f32 %v1812, %v588
        %v1815 = vld [vmem:[#allocation13] sm:$0xff]
        %v1816 = vld [vmem:[#allocation13 + $0x8] sm:$0xff]
        %v1817 = vld [vmem:[#allocation13 + $0x10] sm:$0xff]
        %v1818 = vld [vmem:[#allocation13 + $0x18] sm:$0xff]
        %v1819 = vld [vmem:[#allocation13 + $0x20] sm:$0xff]
        %v1820 = vld [vmem:[#allocation13 + $0x28] sm:$0xff]
        %v1821 = vld [vmem:[#allocation13 + $0x30] sm:$0xff]
        %v1822 = vld [vmem:[#allocation13 + $0x38] sm:$0xff]
        %v1823 = vld [vmem:[#allocation13 + $0x40] sm:$0xff]
        %v1824 = vld [vmem:[#allocation13 + $0x48] sm:$0xff]
        %v1825 = vld [vmem:[#allocation13 + $0x50] sm:$0xff]
        %v1826 = vld [vmem:[#allocation13 + $0x58] sm:$0xff]
        %v1827 = vld [vmem:[#allocation13 + $0x60] sm:$0xff]
        %v1828 = vld [vmem:[#allocation13 + $0x68] sm:$0xff]
        %v1829 = vld [vmem:[#allocation13 + $0x70] sm:$0xff]
        %v1830 = vld [vmem:[#allocation13 + $0x78] sm:$0xff]
        %v1831 = vld [vmem:[#allocation13 + $0x80] sm:$0xff]
        %v1832 = vld [vmem:[#allocation13 + $0x88] sm:$0xff]
        %v1833 = vld [vmem:[#allocation13 + $0x90] sm:$0xff]
        %v1834 = vld [vmem:[#allocation13 + $0x98] sm:$0xff]
        %v1835 = vld [vmem:[#allocation13 + $0xa0] sm:$0xff]
        %v1836 = vld [vmem:[#allocation13 + $0xa8] sm:$0xff]
        %v1837 = vld [vmem:[#allocation13 + $0xb0] sm:$0xff]
        %v1838 = vld [vmem:[#allocation13 + $0xb8] sm:$0xff]
        %v1839 = vld [vmem:[#allocation13 + $0xc0] sm:$0xff]
        %v1840 = vld [vmem:[#allocation13 + $0xc8] sm:$0xff]
        %v1841 = vld [vmem:[#allocation13 + $0xd0] sm:$0xff]
        %v1842 = vld [vmem:[#allocation13 + $0xd8] sm:$0xff]
        %v1843 = vld [vmem:[#allocation13 + $0xe0] sm:$0xff]
        %v1844 = vld [vmem:[#allocation13 + $0xe8] sm:$0xff]
        %v1845 = vld [vmem:[#allocation13 + $0xf0] sm:$0xff]
        %v1846 = vld [vmem:[#allocation13 + $0xf8] sm:$0xff]
        %v1847 = vld [vmem:[%s8] sm:$0x1]
        %v1849 = vperm.slane %v1847, 0
        %1851 = vmatpush.msra.mxu0 %v1830
        %1852 = vmatpush.msra.mxu0 %v1829
        %1853 = vmatpush.msra.mxu0 %v1828
        %1854 = vmatpush.msra.mxu0 %v1827
        %1855 = vmatpush.msra.mxu0 %v1826
        %1856 = vmatpush.msra.mxu0 %v1825
        %1857 = vmatpush.msra.mxu0 %v1824
        %1858 = vmatpush.msra.mxu0 %v1823
        %1859 = vmatpush.msra.mxu0 %v1822
        %1860 = vmatpush.msra.mxu0 %v1821
        %1861 = vmatpush.msra.mxu0 %v1820
        %1862 = vmatpush.msra.mxu0 %v1819
        %1863 = vmatpush.msra.mxu0 %v1818
        %1864 = vmatpush.msra.mxu0 %v1817
        %1865 = vmatpush.msra.mxu0 %v1816
        %1866 = vmatpush.msra.mxu0 %v1815
        %1867 = vmatmul.f32.gmra.mxu0 %v1813
        %v1868 = vpop.f32.mrf.mxu0
        %v1869 = vadd.f32 %v1849, %v1868
        %1870 = vdwg.mxu0
        %1871 = vmatpush.msra.mxu0 %v1846
        %1872 = vmatpush.msra.mxu0 %v1845
        %1873 = vmatpush.msra.mxu0 %v1844
        %1874 = vmatpush.msra.mxu0 %v1843
        %1875 = vmatpush.msra.mxu0 %v1842
        %1876 = vmatpush.msra.mxu0 %v1841
        %1877 = vmatpush.msra.mxu0 %v1840
        %1878 = vmatpush.msra.mxu0 %v1839
        %1879 = vmatpush.msra.mxu0 %v1838
        %1880 = vmatpush.msra.mxu0 %v1837
        %1881 = vmatpush.msra.mxu0 %v1836
        %1882 = vmatpush.msra.mxu0 %v1835
        %1883 = vmatpush.msra.mxu0 %v1834
        %1884 = vmatpush.msra.mxu0 %v1833
        %1885 = vmatpush.msra.mxu0 %v1832
        %1886 = vmatpush.msra.mxu0 %v1831
        %1887 = vmatmul.f32.gmra.mxu0 %v1814
        %v1888 = vpop.f32.mrf.mxu0
        %v1889 = vadd.f32 %v1869, %v1888
        %1890 = vdwg.mxu0
        %v1891 = vmax.f32 %v1889, 0.0
        %v1892 = vld [vmem:[#allocation14] sm:$0xff]
        %v1893 = vld [vmem:[#allocation14 + $0x8] sm:$0xff]
        %v1894 = vld [vmem:[#allocation14 + $0x10] sm:$0xff]
        %v1895 = vld [vmem:[#allocation14 + $0x18] sm:$0xff]
        %v1896 = vld [vmem:[#allocation14 + $0x20] sm:$0xff]
        %v1897 = vld [vmem:[#allocation14 + $0x28] sm:$0xff]
        %v1898 = vld [vmem:[#allocation14 + $0x30] sm:$0xff]
        %v1899 = vld [vmem:[#allocation14 + $0x38] sm:$0xff]
        %v1900 = vld [vmem:[#allocation14 + $0x40] sm:$0xff]
        %v1901 = vld [vmem:[#allocation14 + $0x48] sm:$0xff]
        %v1902 = vld [vmem:[#allocation14 + $0x50] sm:$0xff]
        %v1903 = vld [vmem:[#allocation14 + $0x58] sm:$0xff]
        %v1904 = vld [vmem:[#allocation14 + $0x60] sm:$0xff]
        %v1905 = vld [vmem:[#allocation14 + $0x68] sm:$0xff]
        %v1906 = vld [vmem:[#allocation14 + $0x70] sm:$0xff]
        %v1907 = vld [vmem:[#allocation14 + $0x78] sm:$0xff]
        %v1908 = vld [vmem:[%s10] sm:$0x1]
        %v1910 = vperm.slane %v1908, 0
        %1912 = vmatpush.msra.mxu0 %v1907
        %1913 = vmatpush.msra.mxu0 %v1906
        %1914 = vmatpush.msra.mxu0 %v1905
        %1915 = vmatpush.msra.mxu0 %v1904
        %1916 = vmatpush.msra.mxu0 %v1903
        %1917 = vmatpush.msra.mxu0 %v1902
        %1918 = vmatpush.msra.mxu0 %v1901
        %1919 = vmatpush.msra.mxu0 %v1900
        %1920 = vmatpush.msra.mxu0 %v1899
        %1921 = vmatpush.msra.mxu0 %v1898
        %1922 = vmatpush.msra.mxu0 %v1897
        %1923 = vmatpush.msra.mxu0 %v1896
        %1924 = vmatpush.msra.mxu0 %v1895
        %1925 = vmatpush.msra.mxu0 %v1894
        %1926 = vmatpush.msra.mxu0 %v1893
        %1927 = vmatpush.msra.mxu0 %v1892
        %1928 = vmatmul.f32.gmra.mxu0 %v1891
        %v1929 = vpop.f32.mrf.mxu0
        %v1930 = vadd.f32 %v1910, %v1929
        %1931 = vdwg.mxu0
        %v1932 = vmax.f32 %v1930, 0.0
        %v1933 = vld [vmem:[#allocation16] sm:$0xff]
        %v1934 = vld [vmem:[#allocation16 + $0x8] sm:$0xff]
        %v1935 = vld [vmem:[#allocation16 + $0x10] sm:$0xff]
        %v1936 = vld [vmem:[#allocation16 + $0x18] sm:$0xff]
        %v1937 = vld [vmem:[#allocation16 + $0x20] sm:$0xff]
        %v1938 = vld [vmem:[#allocation16 + $0x28] sm:$0xff]
        %v1939 = vld [vmem:[#allocation16 + $0x30] sm:$0xff]
        %v1940 = vld [vmem:[#allocation16 + $0x38] sm:$0xff]
        %v1941 = vld [vmem:[#allocation16 + $0x40] sm:$0xff]
        %v1942 = vld [vmem:[#allocation16 + $0x48] sm:$0xff]
        %v1943 = vld [vmem:[#allocation16 + $0x50] sm:$0xff]
        %v1944 = vld [vmem:[#allocation16 + $0x58] sm:$0xff]
        %v1945 = vld [vmem:[#allocation16 + $0x60] sm:$0xff]
        %v1946 = vld [vmem:[#allocation16 + $0x68] sm:$0xff]
        %v1947 = vld [vmem:[#allocation16 + $0x70] sm:$0xff]
        %v1948 = vld [vmem:[#allocation16 + $0x78] sm:$0xff]
        %v1949 = vld [vmem:[%s12] sm:$0x1]
        %v1951 = vperm.slane %v1949, 0
        %1953 = vmatpush.msra.mxu0 %v1948
        %1954 = vmatpush.msra.mxu0 %v1947
        %1955 = vmatpush.msra.mxu0 %v1946
        %1956 = vmatpush.msra.mxu0 %v1945
        %1957 = vmatpush.msra.mxu0 %v1944
        %1958 = vmatpush.msra.mxu0 %v1943
        %1959 = vmatpush.msra.mxu0 %v1942
        %1960 = vmatpush.msra.mxu0 %v1941
        %1961 = vmatpush.msra.mxu0 %v1940
        %1962 = vmatpush.msra.mxu0 %v1939
        %1963 = vmatpush.msra.mxu0 %v1938
        %1964 = vmatpush.msra.mxu0 %v1937
        %1965 = vmatpush.msra.mxu0 %v1936
        %1966 = vmatpush.msra.mxu0 %v1935
        %1967 = vmatpush.msra.mxu0 %v1934
        %1968 = vmatpush.msra.mxu0 %v1933
        %1969 = vmatmul.f32.gmra.mxu0 %v1932
        %v1970 = vpop.f32.mrf.mxu0
        %v1971 = vadd.f32 %v1951, %v1970
        %1972 = vdwg.mxu0
        %v1973 = vmul.f32 %v1971, %v1971
        %1974 = vadd.xlane.f32.xlu0 %v1973
        %v1975 = vpop.xlane.xlu0 %1974
        %v1976 = vrsqrt.pop %v1975
        %v1977 = vmul.f32 %v1976, %v1975
        %v1978 = vmul.f32 %v1977, %v1976
        %v1979 = vmul.f32 0.5, %v1978
        %v1980 = vsub.f32 1.5, %v1979
        %v1981 = vmul.f32 %v1976, %v1980
        %vm1982 = vweird.f32 %v1975
        %vm1983 = vweird.f32 %v1976
        %vm1984 = vmor %vm1982, %vm1983
        %v1985 = vsel %vm1984, %v1976, %v1981
        %v1986 = vmul.f32 %v1971, %v1985
        %1987 = vst [vmem:[%s586] sm:$0xff] %v1986
        %s1988 = sand.u32 %s320, 1
        %s1989 = scalar_lea.sflag [#allocation4], %s1988
        %s1990 = sand.u32 %s320, 1
        %s1991 = smul.addr %s1990, 8
        %s1992 = scalar_lea.vmem [#allocation17], %s1991
        // Predicated region
        $region109: #{_vistoatt_pallas.1} parent=71 // pred_check
          %p1993 = pneg %p330
        $region110: #{_vistoatt_pallas.1} parent=71 // pred_check_branch
          %1995 = sbr.rel (%p1993) target = $region112
        $region111: #{_vistoatt_pallas.1} parent=71 // pred_region
          %1997 = vsyncadd %s1989, 0
          %s1998 = smul.addr %s34, 8
          %s1999 = scalar_lea.hbm %s13, %s1998
          %s2001 = sshll.u32 %s1992, 4
          %s2002 = int_to_ptr.vmem [resolvable:$true] %s2001
          %s2003 = sshll.u32 %s1999, 4
          %s2004 = int_to_ptr.hbm [resolvable:$true] %s2003
          %2006 = dma.vmem_to_hbm [thread:$0]  %s2002, 128, %s2004, %s1989
        $region112: #{_vistoatt_pallas.1} parent=71 // pred_fallthru
          _
      $region72: #{_vistoatt_pallas.1} parent=5 // pred_fallthru
        _
      %p2007 = scmp.le.s32.totalorder 2, %s29
      // Predicated region
      $region113: #{_vistoatt_pallas.1} parent=5 // pred_check
        %p2008 = pneg %p2007
      $region114: #{_vistoatt_pallas.1} parent=5 // pred_check_branch
        %2010 = sbr.rel (%p2008) target = $region116
      $region115: #{_vistoatt_pallas.1} parent=5 // pred_region
        %s2011 = ssub.s32 %s29, 2
        // Predicated region
        $region117: #{_vistoatt_pallas.1} parent=115 // pred_check
          %p2012 = pneg %p336
        $region118: #{_vistoatt_pallas.1} parent=115 // pred_check_branch
          %2014 = sbr.rel (%p2012) target = $region120
        $region119: #{_vistoatt_pallas.1} parent=115 // pred_region
          %s2015 = sand.u32 %s321, 1
          %s2016 = scalar_lea.sflag [#allocation4], %s2015
          %s2017 = sand.u32 %s321, 1
          %s2018 = smul.addr %s2017, 8
          %s2019 = scalar_lea.vmem [#allocation17], %s2018
          %2021 = dma.done %s2016, 128
        $region120: #{_vistoatt_pallas.1} parent=115 // pred_fallthru
          _
      $region116: #{_vistoatt_pallas.1} parent=5 // pred_fallthru
        _
    $region6: #{_vistoatt_pallas.1} parent=1 // loop_footer
      %s33 = sadd.s32 1, %s29
    $region7: #{_vistoatt_pallas.1} parent=1 // loop_footer_branch
      %28 = sbr.rel target = $region3
    $region8: #{_vistoatt_pallas.1} parent=1 // loop_exit
      _
    %2022 = vsyncpa [#allocation3], 1
    %s2023 = scalar_lea.sflag [#allocation3], 1
    %2024 = vsyncpa %s2023, 1
    %2025 = vsyncpa [#allocation6], 1
    %2026 = vsyncpa [#allocation9], 1
    %2027 = vsyncpa [#allocation12], 1
    %2028 = vsyncpa [#allocation15], 1
    %2029 = vsyncpa [#allocation4], 1
    %s2030 = scalar_lea.sflag [#allocation4], 1
    %2031 = vsyncpa %s2030, 1

// kernel: _vistoatt_pallas.1
$region0: #{_vistoatt_pallas.1}
  #allocation0 [shape = 'u32[]', space=smem, size = 0x4, offset = 0x4, fixed_abs, tag = 'smem constant byte address 0x4 - core index']
  #allocation1 [shape = 'u32[72,128]{1,0:T(1,128)}', space=vmem, size = 0x9000, scoped, tag = 'internal scratch']
  %s0 = inlined_call_operand.hbm [shape: f32[16,256], index: 0, kind: input, shape index: {}]
  %s1 = inlined_call_operand.hbm [shape: f32[256,512], index: 1, kind: input, shape index: {}]
  %s2 = inlined_call_operand.hbm [shape: f32[1,512], index: 2, kind: input, shape index: {}]
  %s3 = inlined_call_operand.hbm [shape: f32[512,512], index: 3, kind: input, shape index: {}]
  %s4 = inlined_call_operand.hbm [shape: f32[1,512], index: 4, kind: input, shape index: {}]
  %s5 = inlined_call_operand.hbm [shape: f32[512,256], index: 5, kind: input, shape index: {}]
  %s6 = inlined_call_operand.vmem [shape: f32[1,256], index: 6, kind: input, shape index: {}]
  %s7 = inlined_call_operand.hbm [shape: f32[256,128], index: 7, kind: input, shape index: {}]
  %s8 = inlined_call_operand.vmem [shape: f32[1,128], index: 8, kind: input, shape index: {}]
  %s9 = inlined_call_operand.hbm [shape: f32[128,128], index: 9, kind: input, shape index: {}]
  %s10 = inlined_call_operand.vmem [shape: f32[1,128], index: 10, kind: input, shape index: {}]
  %s11 = inlined_call_operand.hbm [shape: f32[128,128], index: 11, kind: input, shape index: {}]
  %s12 = inlined_call_operand.vmem [shape: f32[1,128], index: 12, kind: input, shape index: {}]
  %s13 = inlined_call_operand.hbm [shape: f32[16,128], index: 13, kind: output, shape index: {}]
  %s14 = sld [smem:[#allocation0]]
  $region121: #{_vistoatt_pallas.1} parent=0
    _
  %s16 = ssub.s32 1, %s14
  %s17 = scalar_select 0, %s16, %s14
  $region1: #{_vistoatt_pallas.1} parent=0
    #allocation2 [shape = 'u8[16384]{0}', space=vmem, size = 0x4000, scoped, tag = 'input window, operand 0']
    #allocation3 [shape = 's32[2]{0}', space=sflag, size = 0x8, scoped, tag = 'scoped memory for _vistoatt_pallas.1']
    #allocation4 [shape = 's32[2]{0}', space=sflag, size = 0x8, scoped, tag = 'scoped memory for _vistoatt_pallas.1']
    #allocation5 [shape = 'u8[524288]{0}', space=vmem, size = 0x80000, scoped, tag = 'input window, operand 1, single buffered']
    #allocation6 [shape = 's32[1]{0}', space=sflag, size = 0x4, scoped, tag = 'scoped memory for _vistoatt_pallas.1']
    #allocation7 [shape = 'u8[2048]{0}', space=vmem, size = 0x800, scoped, tag = 'input window, operand 2, single buffered']
    #allocation8 [shape = 'u8[1048576]{0}', space=vmem, size = 0x100000, scoped, tag = 'input window, operand 3, single buffered']
    #allocation9 [shape = 's32[1]{0}', space=sflag, size = 0x4, scoped, tag = 'scoped memory for _vistoatt_pallas.1']
    #allocation10 [shape = 'u8[2048]{0}', space=vmem, size = 0x800, scoped, tag = 'input window, operand 4, single buffered']
    #allocation11 [shape = 'u8[524288]{0}', space=vmem, size = 0x80000, scoped, tag = 'input window, operand 5, single buffered']
    #allocation12 [shape = 's32[1]{0}', space=sflag, size = 0x4, scoped, tag = 'scoped memory for _vistoatt_pallas.1']
    #allocation13 [shape = 'u8[131072]{0}', space=vmem, size = 0x20000, scoped, tag = 'input window, operand 7, single buffered']
    #allocation14 [shape = 'u8[65536]{0}', space=vmem, size = 0x10000, scoped, tag = 'input window, operand 9, single buffered']
    #allocation15 [shape = 's32[1]{0}', space=sflag, size = 0x4, scoped, tag = 'scoped memory for _vistoatt_pallas.1']
    #allocation16 [shape = 'u8[65536]{0}', space=vmem, size = 0x10000, scoped, tag = 'input window, operand 11, single buffered']
    #allocation17 [shape = 'u8[8192]{0}', space=vmem, size = 0x2000, scoped, tag = 'output window, operand 0']
    %18 = vsyncpa [#allocation3], 0
    %s19 = scalar_lea.sflag [#allocation3], 1
    %20 = vsyncpa %s19, 0
    %21 = vsyncpa [#allocation6], 0
    %22 = vsyncpa [#allocation9], 0
    %23 = vsyncpa [#allocation12], 0
    %24 = vsyncpa [#allocation15], 0
    %25 = vsyncpa [#allocation4], 0
    %s26 = scalar_lea.sflag [#allocation4], 1
    %27 = vsyncpa %s26, 0
    loop: start=0, step=1, limit=4
    $region2: #{_vistoatt_pallas.1} parent=1 // loop_pre_header
      _
    $region3: #{_vistoatt_pallas.1} parent=1 // loop_header
      %s29 = sphi 0, %s33
      %p30 = scmp.ge.s32.totalorder %s29, 4
      %s39 = sphi 0, %s41
      %s42 = sphi 0, %s39
      %s43 = sphi 0, %s42
      %s59 = sphi 0, %s43
      %s63 = sphi 0, %s63
      %s65 = sphi 0, %s63
      %s66 = sphi 0, %s65
      %s80 = sphi 0, %s66
      %s84 = sphi 0, %s84
      %s86 = sphi 0, %s84
      %s87 = sphi 0, %s86
      %s101 = sphi 0, %s87
      %s105 = sphi 0, %s105
      %s107 = sphi 0, %s105
      %s108 = sphi 0, %s107
      %s122 = sphi 0, %s108
      %s126 = sphi 0, %s126
      %s128 = sphi 0, %s126
      %s129 = sphi 0, %s128
      %s143 = sphi 0, %s129
      %s147 = sphi 0, %s147
      %s149 = sphi 0, %s147
      %s150 = sphi 0, %s149
      %s164 = sphi 0, %s150
      %s168 = sphi 0, %s168
      %s170 = sphi 0, %s168
      %s171 = sphi 0, %s170
      %s185 = sphi 0, %s171
      %s189 = sphi 0, %s189
      %s191 = sphi 0, %s189
      %s192 = sphi 0, %s191
      %s206 = sphi 0, %s192
      %s210 = sphi 0, %s210
      %s212 = sphi 0, %s210
      %s213 = sphi 0, %s212
      %s227 = sphi 0, %s213
      %s231 = sphi 0, %s231
      %s233 = sphi 0, %s231
      %s234 = sphi 0, %s233
      %s248 = sphi 0, %s234
      %s252 = sphi 0, %s252
      %s254 = sphi 0, %s252
      %s255 = sphi 0, %s254
      %s269 = sphi 0, %s255
      %s273 = sphi 0, %s273
      %s275 = sphi 0, %s273
      %s276 = sphi 0, %s275
      %s290 = sphi 0, %s276
      %s294 = sphi 0, %s294
      %s296 = sphi 0, %s294
      %s297 = sphi 0, %s296
      %s311 = sphi 0, %s297
      %s317 = sphi 0, %s319
      %s320 = sphi 0, %s317
      %s321 = sphi 0, %s320
      %s337 = sphi 0, %s321
    $region4: #{_vistoatt_pallas.1} parent=1 // loop_header_branch
      %32 = sbr.rel (%p30) target = $region8
    $region5: #{_vistoatt_pallas.1} parent=1 // loop_body
      %s34 = ssub.s32 %s29, 1
      %s35 = ssub.s32 %s29, 2
      %s36 = sadd.s32 %s29, 1
      %s37 = ssub.s32 %s29, %s36
      %p38 = scmp.eq.s32.totalorder %s37, 0
      %s40 = sadd.s32 %s39, 1
      %s41 = scalar_select %p38, %s39, %s40
      %p44 = pneg %p38
      %p45 = scmp.eq.s32.totalorder %s29, 1
      %p46 = por %p44, %p45
      %p47 = scmp.ne.s32.totalorder %s39, %s42
      %p48 = scmp.eq.s32.totalorder %s29, 0
      %p49 = por %p47, %p48
      %p50 = scmp.ne.s32.totalorder %s39, %s42
      %p51 = scmp.eq.s32.totalorder %s34, 1
      %p52 = por %p50, %p51
      %p53 = scmp.ne.s32.totalorder %s42, %s43
      %p54 = scmp.eq.s32.totalorder %s34, 0
      %p55 = por %p53, %p54
      %p56 = scmp.ne.s32.totalorder %s42, %s43
      %p57 = scmp.eq.s32.totalorder %s35, 1
      %p58 = por %p56, %p57
      %p60 = scmp.ne.s32.totalorder %s43, %s59
      %p61 = scmp.eq.s32.totalorder %s35, 0
      %p62 = por %p60, %p61
      %s64 = sadd.s32 %s63, 1
      %p67 = scmp.eq.s32.totalorder %s29, 1
      %p68 = scmp.ne.s32.totalorder %s63, %s65
      %p69 = scmp.eq.s32.totalorder %s29, 0
      %p70 = por %p68, %p69
      %p71 = scmp.ne.s32.totalorder %s63, %s65
      %p72 = scmp.eq.s32.totalorder %s34, 1
      %p73 = por %p71, %p72
      %p74 = scmp.ne.s32.totalorder %s65, %s66
      %p75 = scmp.eq.s32.totalorder %s34, 0
      %p76 = por %p74, %p75
      %p77 = scmp.ne.s32.totalorder %s65, %s66
      %p78 = scmp.eq.s32.totalorder %s35, 1
      %p79 = por %p77, %p78
      %p81 = scmp.ne.s32.totalorder %s66, %s80
      %p82 = scmp.eq.s32.totalorder %s35, 0
      %p83 = por %p81, %p82
      %s85 = sadd.s32 %s84, 1
      %p88 = scmp.eq.s32.totalorder %s29, 1
      %p89 = scmp.ne.s32.totalorder %s84, %s86
      %p90 = scmp.eq.s32.totalorder %s29, 0
      %p91 = por %p89, %p90
      %p92 = scmp.ne.s32.totalorder %s84, %s86
      %p93 = scmp.eq.s32.totalorder %s34, 1
      %p94 = por %p92, %p93
      %p95 = scmp.ne.s32.totalorder %s86, %s87
      %p96 = scmp.eq.s32.totalorder %s34, 0
      %p97 = por %p95, %p96
      %p98 = scmp.ne.s32.totalorder %s86, %s87
      %p99 = scmp.eq.s32.totalorder %s35, 1
      %p100 = por %p98, %p99
      %p102 = scmp.ne.s32.totalorder %s87, %s101
      %p103 = scmp.eq.s32.totalorder %s35, 0
      %p104 = por %p102, %p103
      %s106 = sadd.s32 %s105, 1
      %p109 = scmp.eq.s32.totalorder %s29, 1
      %p110 = scmp.ne.s32.totalorder %s105, %s107
      %p111 = scmp.eq.s32.totalorder %s29, 0
      %p112 = por %p110, %p111
      %p113 = scmp.ne.s32.totalorder %s105, %s107
      %p114 = scmp.eq.s32.totalorder %s34, 1
      %p115 = por %p113, %p114
      %p116 = scmp.ne.s32.totalorder %s107, %s108
      %p117 = scmp.eq.s32.totalorder %s34, 0
      %p118 = por %p116, %p117
      %p119 = scmp.ne.s32.totalorder %s107, %s108
      %p120 = scmp.eq.s32.totalorder %s35, 1
      %p121 = por %p119, %p120
      %p123 = scmp.ne.s32.totalorder %s108, %s122
      %p124 = scmp.eq.s32.totalorder %s35, 0
      %p125 = por %p123, %p124
      %s127 = sadd.s32 %s126, 1
      %p130 = scmp.eq.s32.totalorder %s29, 1
      %p131 = scmp.ne.s32.totalorder %s126, %s128
      %p132 = scmp.eq.s32.totalorder %s29, 0
      %p133 = por %p131, %p132
      %p134 = scmp.ne.s32.totalorder %s126, %s128
      %p135 = scmp.eq.s32.totalorder %s34, 1
      %p136 = por %p134, %p135
      %p137 = scmp.ne.s32.totalorder %s128, %s129
      %p138 = scmp.eq.s32.totalorder %s34, 0
      %p139 = por %p137, %p138
      %p140 = scmp.ne.s32.totalorder %s128, %s129
      %p141 = scmp.eq.s32.totalorder %s35, 1
      %p142 = por %p140, %p141
      %p144 = scmp.ne.s32.totalorder %s129, %s143
      %p145 = scmp.eq.s32.totalorder %s35, 0
      %p146 = por %p144, %p145
      %s148 = sadd.s32 %s147, 1
      %p151 = scmp.eq.s32.totalorder %s29, 1
      %p152 = scmp.ne.s32.totalorder %s147, %s149
      %p153 = scmp.eq.s32.totalorder %s29, 0
      %p154 = por %p152, %p153
      %p155 = scmp.ne.s32.totalorder %s147, %s149
      %p156 = scmp.eq.s32.totalorder %s34, 1
      %p157 = por %p155, %p156
      %p158 = scmp.ne.s32.totalorder %s149, %s150
      %p159 = scmp.eq.s32.totalorder %s34, 0
      %p160 = por %p158, %p159
      %p161 = scmp.ne.s32.totalorder %s149, %s150
      %p162 = scmp.eq.s32.totalorder %s35, 1
      %p163 = por %p161, %p162
      %p165 = scmp.ne.s32.totalorder %s150, %s164
      %p166 = scmp.eq.s32.totalorder %s35, 0
      %p167 = por %p165, %p166
      %s169 = sadd.s32 %s168, 1
      %p172 = scmp.eq.s32.totalorder %s29, 1
      %p173 = scmp.ne.s32.totalorder %s168, %s170
      %p174 = scmp.eq.s32.totalorder %s29, 0
      %p175 = por %p173, %p174
      %p176 = scmp.ne.s32.totalorder %s168, %s170
      %p177 = scmp.eq.s32.totalorder %s34, 1
      %p178 = por %p176, %p177
      %p179 = scmp.ne.s32.totalorder %s170, %s171
      %p180 = scmp.eq.s32.totalorder %s34, 0
      %p181 = por %p179, %p180
      %p182 = scmp.ne.s32.totalorder %s170, %s171
      %p183 = scmp.eq.s32.totalorder %s35, 1
      %p184 = por %p182, %p183
      %p186 = scmp.ne.s32.totalorder %s171, %s185
      %p187 = scmp.eq.s32.totalorder %s35, 0
      %p188 = por %p186, %p187
      %s190 = sadd.s32 %s189, 1
      %p193 = scmp.eq.s32.totalorder %s29, 1
      %p194 = scmp.ne.s32.totalorder %s189, %s191
      %p195 = scmp.eq.s32.totalorder %s29, 0
      %p196 = por %p194, %p195
      %p197 = scmp.ne.s32.totalorder %s189, %s191
      %p198 = scmp.eq.s32.totalorder %s34, 1
      %p199 = por %p197, %p198
      %p200 = scmp.ne.s32.totalorder %s191, %s192
      %p201 = scmp.eq.s32.totalorder %s34, 0
      %p202 = por %p200, %p201
      %p203 = scmp.ne.s32.totalorder %s191, %s192
      %p204 = scmp.eq.s32.totalorder %s35, 1
      %p205 = por %p203, %p204
      %p207 = scmp.ne.s32.totalorder %s192, %s206
      %p208 = scmp.eq.s32.totalorder %s35, 0
      %p209 = por %p207, %p208
      %s211 = sadd.s32 %s210, 1
      %p214 = scmp.eq.s32.totalorder %s29, 1
      %p215 = scmp.ne.s32.totalorder %s210, %s212
      %p216 = scmp.eq.s32.totalorder %s29, 0
      %p217 = por %p215, %p216
      %p218 = scmp.ne.s32.totalorder %s210, %s212
      %p219 = scmp.eq.s32.totalorder %s34, 1
      %p220 = por %p218, %p219
      %p221 = scmp.ne.s32.totalorder %s212, %s213
      %p222 = scmp.eq.s32.totalorder %s34, 0
      %p223 = por %p221, %p222
      %p224 = scmp.ne.s32.totalorder %s212, %s213
      %p225 = scmp.eq.s32.totalorder %s35, 1
      %p226 = por %p224, %p225
      %p228 = scmp.ne.s32.totalorder %s213, %s227
      %p229 = scmp.eq.s32.totalorder %s35, 0
      %p230 = por %p228, %p229
      %s232 = sadd.s32 %s231, 1
      %p235 = scmp.eq.s32.totalorder %s29, 1
      %p236 = scmp.ne.s32.totalorder %s231, %s233
      %p237 = scmp.eq.s32.totalorder %s29, 0
      %p238 = por %p236, %p237
      %p239 = scmp.ne.s32.totalorder %s231, %s233
      %p240 = scmp.eq.s32.totalorder %s34, 1
      %p241 = por %p239, %p240
      %p242 = scmp.ne.s32.totalorder %s233, %s234
      %p243 = scmp.eq.s32.totalorder %s34, 0
      %p244 = por %p242, %p243
      %p245 = scmp.ne.s32.totalorder %s233, %s234
      %p246 = scmp.eq.s32.totalorder %s35, 1
      %p247 = por %p245, %p246
      %p249 = scmp.ne.s32.totalorder %s234, %s248
      %p250 = scmp.eq.s32.totalorder %s35, 0
      %p251 = por %p249, %p250
      %s253 = sadd.s32 %s252, 1
      %p256 = scmp.eq.s32.totalorder %s29, 1
      %p257 = scmp.ne.s32.totalorder %s252, %s254
      %p258 = scmp.eq.s32.totalorder %s29, 0
      %p259 = por %p257, %p258
      %p260 = scmp.ne.s32.totalorder %s252, %s254
      %p261 = scmp.eq.s32.totalorder %s34, 1
      %p262 = por %p260, %p261
      %p263 = scmp.ne.s32.totalorder %s254, %s255
      %p264 = scmp.eq.s32.totalorder %s34, 0
      %p265 = por %p263, %p264
      %p266 = scmp.ne.s32.totalorder %s254, %s255
      %p267 = scmp.eq.s32.totalorder %s35, 1
      %p268 = por %p266, %p267
      %p270 = scmp.ne.s32.totalorder %s255, %s269
      %p271 = scmp.eq.s32.totalorder %s35, 0
      %p272 = por %p270, %p271
      %s274 = sadd.s32 %s273, 1
      %p277 = scmp.eq.s32.totalorder %s29, 1
      %p278 = scmp.ne.s32.totalorder %s273, %s275
      %p279 = scmp.eq.s32.totalorder %s29, 0
      %p280 = por %p278, %p279
      %p281 = scmp.ne.s32.totalorder %s273, %s275
      %p282 = scmp.eq.s32.totalorder %s34, 1
      %p283 = por %p281, %p282
      %p284 = scmp.ne.s32.totalorder %s275, %s276
      %p285 = scmp.eq.s32.totalorder %s34, 0
      %p286 = por %p284, %p285
      %p287 = scmp.ne.s32.totalorder %s275, %s276
      %p288 = scmp.eq.s32.totalorder %s35, 1
      %p289 = por %p287, %p288
      %p291 = scmp.ne.s32.totalorder %s276, %s290
      %p292 = scmp.eq.s32.totalorder %s35, 0
      %p293 = por %p291, %p292
      %s295 = sadd.s32 %s294, 1
      %p298 = scmp.eq.s32.totalorder %s29, 1
      %p299 = scmp.ne.s32.totalorder %s294, %s296
      %p300 = scmp.eq.s32.totalorder %s29, 0
      %p301 = por %p299, %p300
      %p302 = scmp.ne.s32.totalorder %s294, %s296
      %p303 = scmp.eq.s32.totalorder %s34, 1
      %p304 = por %p302, %p303
      %p305 = scmp.ne.s32.totalorder %s296, %s297
      %p306 = scmp.eq.s32.totalorder %s34, 0
      %p307 = por %p305, %p306
      %p308 = scmp.ne.s32.totalorder %s296, %s297
      %p309 = scmp.eq.s32.totalorder %s35, 1
      %p310 = por %p308, %p309
      %p312 = scmp.ne.s32.totalorder %s297, %s311
      %p313 = scmp.eq.s32.totalorder %s35, 0
      %p314 = por %p312, %p313
      %s315 = ssub.s32 %s29, %s36
      %p316 = scmp.eq.s32.totalorder %s315, 0
      %s318 = sadd.s32 %s317, 1
      %s319 = scalar_select %p316, %s317, %s318
      %p322 = pneg %p316
      %p323 = scmp.eq.s32.totalorder %s29, 1
      %p324 = por %p322, %p323
      %p325 = scmp.ne.s32.totalorder %s317, %s320
      %p326 = scmp.eq.s32.totalorder %s29, 0
      %p327 = por %p325, %p326
      %p328 = scmp.ne.s32.totalorder %s317, %s320
      %p329 = scmp.eq.s32.totalorder %s34, 1
      %p330 = por %p328, %p329
      %p331 = scmp.ne.s32.totalorder %s320, %s321
      %p332 = scmp.eq.s32.totalorder %s34, 0
      %p333 = por %p331, %p332
      %p334 = scmp.ne.s32.totalorder %s320, %s321
      %p335 = scmp.eq.s32.totalorder %s35, 1
      %p336 = por %p334, %p335
      %p338 = scmp.ne.s32.totalorder %s321, %s337
      %p339 = scmp.eq.s32.totalorder %s35, 0
      %p340 = por %p338, %p339
      %p341 = scmp.le.s32.totalorder 1, %s29
      %p342 = scmp.lt.s32.totalorder %s29, 3
      %p343 = pnand %p341, %p342
      %p344 = pneg %p343
      // Predicated region
      $region9: #{_vistoatt_pallas.1} parent=5 // pred_check
        _
      $region10: #{_vistoatt_pallas.1} parent=5 // pred_check_branch
        %346 = sbr.rel (%p343) target = $region12
      $region11: #{_vistoatt_pallas.1} parent=5 // pred_region
        %s347 = ssub.s32 %s29, 1
        // Predicated region
        $region13: #{_vistoatt_pallas.1} parent=11 // pred_check
          %p348 = pneg %p76
        $region14: #{_vistoatt_pallas.1} parent=11 // pred_check_branch
          %350 = sbr.rel (%p348) target = $region16
        $region15: #{_vistoatt_pallas.1} parent=11 // pred_region
          %352 = vsyncadd [#allocation6], 0
          %s353 = sshll.u32 %s1, 4
          %s354 = int_to_ptr.hbm [resolvable:$true] %s353
          %s355 = sshll.u32 [#allocation5], 4
          %s356 = int_to_ptr.vmem [resolvable:$true] %s355
          %361 = dma.hbm_to_vmem [thread:$0]  %s354, 16384, %s356, [#allocation6], 512, 512, 32
        $region16: #{_vistoatt_pallas.1} parent=11 // pred_fallthru
          _
        // Predicated region
        $region17: #{_vistoatt_pallas.1} parent=11 // pred_check
          %p362 = pneg %p97
        $region18: #{_vistoatt_pallas.1} parent=11 // pred_check_branch
          %364 = sbr.rel (%p362) target = $region20
        $region19: #{_vistoatt_pallas.1} parent=11 // pred_region
          %366 = vsyncadd [#allocation6], 0
          %s368 = sshll.u32 %s2, 4
          %s369 = int_to_ptr.hbm [resolvable:$true] %s368
          %s370 = sshll.u32 [#allocation7], 4
          %s371 = int_to_ptr.vmem [resolvable:$true] %s370
          %373 = dma.hbm_to_vmem [thread:$0]  %s369, 64, %s371, [#allocation6]
        $region20: #{_vistoatt_pallas.1} parent=11 // pred_fallthru
          _
        // Predicated region
        $region21: #{_vistoatt_pallas.1} parent=11 // pred_check
          %p374 = pneg %p118
        $region22: #{_vistoatt_pallas.1} parent=11 // pred_check_branch
          %376 = sbr.rel (%p374) target = $region24
        $region23: #{_vistoatt_pallas.1} parent=11 // pred_region
          %378 = vsyncadd [#allocation9], 0
          %s379 = sshll.u32 %s3, 4
          %s380 = int_to_ptr.hbm [resolvable:$true] %s379
          %s381 = sshll.u32 [#allocation8], 4
          %s382 = int_to_ptr.vmem [resolvable:$true] %s381
          %387 = dma.hbm_to_vmem [thread:$0]  %s380, 32768, %s382, [#allocation9], 512, 512, 32
        $region24: #{_vistoatt_pallas.1} parent=11 // pred_fallthru
          _
        // Predicated region
        $region25: #{_vistoatt_pallas.1} parent=11 // pred_check
          %p388 = pneg %p139
        $region26: #{_vistoatt_pallas.1} parent=11 // pred_check_branch
          %390 = sbr.rel (%p388) target = $region28
        $region27: #{_vistoatt_pallas.1} parent=11 // pred_region
          %392 = vsyncadd [#allocation9], 0
          %s394 = sshll.u32 %s4, 4
          %s395 = int_to_ptr.hbm [resolvable:$true] %s394
          %s396 = sshll.u32 [#allocation10], 4
          %s397 = int_to_ptr.vmem [resolvable:$true] %s396
          %399 = dma.hbm_to_vmem [thread:$0]  %s395, 64, %s397, [#allocation9]
        $region28: #{_vistoatt_pallas.1} parent=11 // pred_fallthru
          _
        // Predicated region
        $region29: #{_vistoatt_pallas.1} parent=11 // pred_check
          %p400 = pneg %p160
        $region30: #{_vistoatt_pallas.1} parent=11 // pred_check_branch
          %402 = sbr.rel (%p400) target = $region32
        $region31: #{_vistoatt_pallas.1} parent=11 // pred_region
          %404 = vsyncadd [#allocation12], 0
          %s405 = sshll.u32 %s5, 4
          %s406 = int_to_ptr.hbm [resolvable:$true] %s405
          %s407 = sshll.u32 [#allocation11], 4
          %s408 = int_to_ptr.vmem [resolvable:$true] %s407
          %413 = dma.hbm_to_vmem [thread:$0]  %s406, 16384, %s408, [#allocation12], 256, 256, 16
        $region32: #{_vistoatt_pallas.1} parent=11 // pred_fallthru
          _
        // Predicated region
        $region33: #{_vistoatt_pallas.1} parent=11 // pred_check
          %p414 = pneg %p181
        $region34: #{_vistoatt_pallas.1} parent=11 // pred_check_branch
          %416 = sbr.rel (%p414) target = $region36
        $region35: #{_vistoatt_pallas.1} parent=11 // pred_region
          _
        $region36: #{_vistoatt_pallas.1} parent=11 // pred_fallthru
          _
        // Predicated region
        $region37: #{_vistoatt_pallas.1} parent=11 // pred_check
          %p417 = pneg %p202
        $region38: #{_vistoatt_pallas.1} parent=11 // pred_check_branch
          %419 = sbr.rel (%p417) target = $region40
        $region39: #{_vistoatt_pallas.1} parent=11 // pred_region
          %421 = vsyncadd [#allocation12], 0
          %s422 = sshll.u32 %s7, 4
          %s423 = int_to_ptr.hbm [resolvable:$true] %s422
          %s424 = sshll.u32 [#allocation13], 4
          %s425 = int_to_ptr.vmem [resolvable:$true] %s424
          %430 = dma.hbm_to_vmem [thread:$0]  %s423, 4096, %s425, [#allocation12], 128, 128, 8
        $region40: #{_vistoatt_pallas.1} parent=11 // pred_fallthru
          _
        // Predicated region
        $region41: #{_vistoatt_pallas.1} parent=11 // pred_check
          %p431 = pneg %p223
        $region42: #{_vistoatt_pallas.1} parent=11 // pred_check_branch
          %433 = sbr.rel (%p431) target = $region44
        $region43: #{_vistoatt_pallas.1} parent=11 // pred_region
          _
        $region44: #{_vistoatt_pallas.1} parent=11 // pred_fallthru
          _
        // Predicated region
        $region45: #{_vistoatt_pallas.1} parent=11 // pred_check
          %p434 = pneg %p244
        $region46: #{_vistoatt_pallas.1} parent=11 // pred_check_branch
          %436 = sbr.rel (%p434) target = $region48
        $region47: #{_vistoatt_pallas.1} parent=11 // pred_region
          %438 = vsyncadd [#allocation15], 0
          %s439 = sshll.u32 %s9, 4
          %s440 = int_to_ptr.hbm [resolvable:$true] %s439
          %s441 = sshll.u32 [#allocation14], 4
          %s442 = int_to_ptr.vmem [resolvable:$true] %s441
          %447 = dma.hbm_to_vmem [thread:$0]  %s440, 2048, %s442, [#allocation15], 128, 128, 8
        $region48: #{_vistoatt_pallas.1} parent=11 // pred_fallthru
          _
        // Predicated region
        $region49: #{_vistoatt_pallas.1} parent=11 // pred_check
          %p448 = pneg %p265
        $region50: #{_vistoatt_pallas.1} parent=11 // pred_check_branch
          %450 = sbr.rel (%p448) target = $region52
        $region51: #{_vistoatt_pallas.1} parent=11 // pred_region
          _
        $region52: #{_vistoatt_pallas.1} parent=11 // pred_fallthru
          _
        // Predicated region
        $region53: #{_vistoatt_pallas.1} parent=11 // pred_check
          %p451 = pneg %p286
        $region54: #{_vistoatt_pallas.1} parent=11 // pred_check_branch
          %453 = sbr.rel (%p451) target = $region56
        $region55: #{_vistoatt_pallas.1} parent=11 // pred_region
          %455 = vsyncadd [#allocation15], 0
          %s456 = sshll.u32 %s11, 4
          %s457 = int_to_ptr.hbm [resolvable:$true] %s456
          %s458 = sshll.u32 [#allocation16], 4
          %s459 = int_to_ptr.vmem [resolvable:$true] %s458
          %464 = dma.hbm_to_vmem [thread:$0]  %s457, 2048, %s459, [#allocation15], 128, 128, 8
        $region56: #{_vistoatt_pallas.1} parent=11 // pred_fallthru
          _
        // Predicated region
        $region57: #{_vistoatt_pallas.1} parent=11 // pred_check
          %p465 = pneg %p307
        $region58: #{_vistoatt_pallas.1} parent=11 // pred_check_branch
          %467 = sbr.rel (%p465) target = $region60
        $region59: #{_vistoatt_pallas.1} parent=11 // pred_region
          _
        $region60: #{_vistoatt_pallas.1} parent=11 // pred_fallthru
          _
      $region12: #{_vistoatt_pallas.1} parent=5 // pred_fallthru
        _
      %p468 = scmp.lt.s32.totalorder %s29, 2
      // Predicated region
      $region61: #{_vistoatt_pallas.1} parent=5 // pred_check
        %p469 = pneg %p468
      $region62: #{_vistoatt_pallas.1} parent=5 // pred_check_branch
        %471 = sbr.rel (%p469) target = $region64
      $region63: #{_vistoatt_pallas.1} parent=5 // pred_region
        // Predicated region
        $region65: #{_vistoatt_pallas.1} parent=63 // pred_check
          %p472 = pneg %p49
        $region66: #{_vistoatt_pallas.1} parent=63 // pred_check_branch
          %474 = sbr.rel (%p472) target = $region68
        $region67: #{_vistoatt_pallas.1} parent=63 // pred_region
          %s475 = sand.u32 %s39, 1
          %s476 = scalar_lea.sflag [#allocation3], %s475
          %s477 = sand.u32 %s39, 1
          %s478 = smul.addr %s477, 16
          %s479 = scalar_lea.vmem [#allocation2], %s478
          %481 = vsyncadd %s476, 0
          %s482 = smul.addr %s29, 2
          %s483 = smul.addr %s482, 8
          %s484 = scalar_lea.hbm %s0, %s483
          %s486 = sshll.u32 %s484, 4
          %s487 = int_to_ptr.hbm [resolvable:$true] %s486
          %s488 = sshll.u32 %s479, 4
          %s489 = int_to_ptr.vmem [resolvable:$true] %s488
          %491 = dma.hbm_to_vmem [thread:$0]  %s487, 256, %s489, %s476
        $region68: #{_vistoatt_pallas.1} parent=63 // pred_fallthru
          _
      $region64: #{_vistoatt_pallas.1} parent=5 // pred_fallthru
        _
      %p492 = scmp.le.s32.totalorder 1, %s29
      %p493 = scmp.lt.s32.totalorder %s29, 3
      %p494 = pnand %p492, %p493
      %p495 = pneg %p494
      // Predicated region
      $region69: #{_vistoatt_pallas.1} parent=5 // pred_check
        _
      $region70: #{_vistoatt_pallas.1} parent=5 // pred_check_branch
        %497 = sbr.rel (%p494) target = $region72
      $region71: #{_vistoatt_pallas.1} parent=5 // pred_region
        %s498 = ssub.s32 %s29, 1
        %s499 = sand.u32 %s42, 1
        %s500 = scalar_lea.sflag [#allocation3], %s499
        %s501 = sand.u32 %s42, 1
        %s502 = smul.addr %s501, 16
        %s503 = scalar_lea.vmem [#allocation2], %s502
        // Predicated region
        $region73: #{_vistoatt_pallas.1} parent=71 // pred_check
          %p504 = pneg %p55
        $region74: #{_vistoatt_pallas.1} parent=71 // pred_check_branch
          %506 = sbr.rel (%p504) target = $region76
        $region75: #{_vistoatt_pallas.1} parent=71 // pred_region
          %508 = dma.done %s500, 256
        $region76: #{_vistoatt_pallas.1} parent=71 // pred_fallthru
          _
        // Predicated region
        $region77: #{_vistoatt_pallas.1} parent=71 // pred_check
          %p509 = pneg %p76
        $region78: #{_vistoatt_pallas.1} parent=71 // pred_check_branch
          %511 = sbr.rel (%p509) target = $region80
        $region79: #{_vistoatt_pallas.1} parent=71 // pred_region
          %513 = dma.done [#allocation6], 16384
        $region80: #{_vistoatt_pallas.1} parent=71 // pred_fallthru
          _
        // Predicated region
        $region81: #{_vistoatt_pallas.1} parent=71 // pred_check
          %p514 = pneg %p97
        $region82: #{_vistoatt_pallas.1} parent=71 // pred_check_branch
          %516 = sbr.rel (%p514) target = $region84
        $region83: #{_vistoatt_pallas.1} parent=71 // pred_region
          %518 = dma.done [#allocation6], 64
        $region84: #{_vistoatt_pallas.1} parent=71 // pred_fallthru
          _
        // Predicated region
        $region85: #{_vistoatt_pallas.1} parent=71 // pred_check
          %p519 = pneg %p118
        $region86: #{_vistoatt_pallas.1} parent=71 // pred_check_branch
          %521 = sbr.rel (%p519) target = $region88
        $region87: #{_vistoatt_pallas.1} parent=71 // pred_region
          %523 = dma.done [#allocation9], 32768
        $region88: #{_vistoatt_pallas.1} parent=71 // pred_fallthru
          _
        // Predicated region
        $region89: #{_vistoatt_pallas.1} parent=71 // pred_check
          %p524 = pneg %p139
        $region90: #{_vistoatt_pallas.1} parent=71 // pred_check_branch
          %526 = sbr.rel (%p524) target = $region92
        $region91: #{_vistoatt_pallas.1} parent=71 // pred_region
          %528 = dma.done [#allocation9], 64
        $region92: #{_vistoatt_pallas.1} parent=71 // pred_fallthru
          _
        // Predicated region
        $region93: #{_vistoatt_pallas.1} parent=71 // pred_check
          %p529 = pneg %p160
        $region94: #{_vistoatt_pallas.1} parent=71 // pred_check_branch
          %531 = sbr.rel (%p529) target = $region96
        $region95: #{_vistoatt_pallas.1} parent=71 // pred_region
          %533 = dma.done [#allocation12], 16384
        $region96: #{_vistoatt_pallas.1} parent=71 // pred_fallthru
          _
        // Predicated region
        $region97: #{_vistoatt_pallas.1} parent=71 // pred_check
          %p534 = pneg %p202
        $region98: #{_vistoatt_pallas.1} parent=71 // pred_check_branch
          %536 = sbr.rel (%p534) target = $region100
        $region99: #{_vistoatt_pallas.1} parent=71 // pred_region
          %538 = dma.done [#allocation12], 4096
        $region100: #{_vistoatt_pallas.1} parent=71 // pred_fallthru
          _
        // Predicated region
        $region101: #{_vistoatt_pallas.1} parent=71 // pred_check
          %p539 = pneg %p244
        $region102: #{_vistoatt_pallas.1} parent=71 // pred_check_branch
          %541 = sbr.rel (%p539) target = $region104
        $region103: #{_vistoatt_pallas.1} parent=71 // pred_region
          %543 = dma.done [#allocation15], 2048
        $region104: #{_vistoatt_pallas.1} parent=71 // pred_fallthru
          _
        // Predicated region
        $region105: #{_vistoatt_pallas.1} parent=71 // pred_check
          %p544 = pneg %p286
        $region106: #{_vistoatt_pallas.1} parent=71 // pred_check_branch
          %546 = sbr.rel (%p544) target = $region108
        $region107: #{_vistoatt_pallas.1} parent=71 // pred_region
          %548 = dma.done [#allocation15], 2048
        $region108: #{_vistoatt_pallas.1} parent=71 // pred_fallthru
          _
        %s549 = sand.u32 %s42, 1
        %s550 = scalar_lea.sflag [#allocation3], %s549
        %s551 = sand.u32 %s42, 1
        %s552 = smul.addr %s551, 16
        %s553 = scalar_lea.vmem [#allocation2], %s552
        %p554 = pneg %p55
        %p555 = pneg %p52
        %p556 = pneg %p76
        %p557 = pneg %p73
        %p558 = pneg %p97
        %p559 = pneg %p94
        %p560 = pneg %p118
        %p561 = pneg %p115
        %p562 = pneg %p139
        %p563 = pneg %p136
        %p564 = pneg %p160
        %p565 = pneg %p157
        %p566 = pneg %p181
        %p567 = pneg %p178
        %p568 = pneg %p202
        %p569 = pneg %p199
        %p570 = pneg %p223
        %p571 = pneg %p220
        %p572 = pneg %p244
        %p573 = pneg %p241
        %p574 = pneg %p265
        %p575 = pneg %p262
        %p576 = pneg %p286
        %p577 = pneg %p283
        %p578 = pneg %p307
        %p579 = pneg %p304
        %p580 = pneg %p333
        %p581 = pneg %p330
        %s582 = sand.u32 %s320, 1
        %s583 = scalar_lea.sflag [#allocation4], %s582
        %s584 = sand.u32 %s320, 1
        %s585 = smul.addr %s584, 8
        %s586 = scalar_lea.vmem [#allocation17], %s585
        %v587 = vld [vmem:[%s503] sm:$0xff]
        %v588 = vld [vmem:[%s503 + $0x8] sm:$0xff]
        %v589 = vld [vmem:[#allocation5] sm:$0xff]
        %v590 = vld [vmem:[#allocation5 + $0x8] sm:$0xff]
        %v591 = vld [vmem:[#allocation5 + $0x10] sm:$0xff]
        %v592 = vld [vmem:[#allocation5 + $0x18] sm:$0xff]
        %v593 = vld [vmem:[#allocation5 + $0x20] sm:$0xff]
        %v594 = vld [vmem:[#allocation5 + $0x28] sm:$0xff]
        %v595 = vld [vmem:[#allocation5 + $0x30] sm:$0xff]
        %v596 = vld [vmem:[#allocation5 + $0x38] sm:$0xff]
        %v597 = vld [vmem:[#allocation5 + $0x40] sm:$0xff]
        %v598 = vld [vmem:[#allocation5 + $0x48] sm:$0xff]
        %v599 = vld [vmem:[#allocation5 + $0x50] sm:$0xff]
        %v600 = vld [vmem:[#allocation5 + $0x58] sm:$0xff]
        %v601 = vld [vmem:[#allocation5 + $0x60] sm:$0xff]
        %v602 = vld [vmem:[#allocation5 + $0x68] sm:$0xff]
        %v603 = vld [vmem:[#allocation5 + $0x70] sm:$0xff]
        %v604 = vld [vmem:[#allocation5 + $0x78] sm:$0xff]
        %v605 = vld [vmem:[#allocation5 + $0x80] sm:$0xff]
        %v606 = vld [vmem:[#allocation5 + $0x88] sm:$0xff]
        %v607 = vld [vmem:[#allocation5 + $0x90] sm:$0xff]
        %v608 = vld [vmem:[#allocation5 + $0x98] sm:$0xff]
        %v609 = vld [vmem:[#allocation5 + $0xa0] sm:$0xff]
        %v610 = vld [vmem:[#allocation5 + $0xa8] sm:$0xff]
        %v611 = vld [vmem:[#allocation5 + $0xb0] sm:$0xff]
        %v612 = vld [vmem:[#allocation5 + $0xb8] sm:$0xff]
        %v613 = vld [vmem:[#allocation5 + $0xc0] sm:$0xff]
        %v614 = vld [vmem:[#allocation5 + $0xc8] sm:$0xff]
        %v615 = vld [vmem:[#allocation5 + $0xd0] sm:$0xff]
        %v616 = vld [vmem:[#allocation5 + $0xd8] sm:$0xff]
        %v617 = vld [vmem:[#allocation5 + $0xe0] sm:$0xff]
        %v618 = vld [vmem:[#allocation5 + $0xe8] sm:$0xff]
        %v619 = vld [vmem:[#allocation5 + $0xf0] sm:$0xff]
        %v620 = vld [vmem:[#allocation5 + $0xf8] sm:$0xff]
        %v621 = vld [vmem:[#allocation5 + $0x100] sm:$0xff]
        %v622 = vld [vmem:[#allocation5 + $0x108] sm:$0xff]
        %v623 = vld [vmem:[#allocation5 + $0x110] sm:$0xff]
        %v624 = vld [vmem:[#allocation5 + $0x118] sm:$0xff]
        %v625 = vld [vmem:[#allocation5 + $0x120] sm:$0xff]
        %v626 = vld [vmem:[#allocation5 + $0x128] sm:$0xff]
        %v627 = vld [vmem:[#allocation5 + $0x130] sm:$0xff]
        %v628 = vld [vmem:[#allocation5 + $0x138] sm:$0xff]
        %v629 = vld [vmem:[#allocation5 + $0x140] sm:$0xff]
        %v630 = vld [vmem:[#allocation5 + $0x148] sm:$0xff]
        %v631 = vld [vmem:[#allocation5 + $0x150] sm:$0xff]
        %v632 = vld [vmem:[#allocation5 + $0x158] sm:$0xff]
        %v633 = vld [vmem:[#allocation5 + $0x160] sm:$0xff]
        %v634 = vld [vmem:[#allocation5 + $0x168] sm:$0xff]
        %v635 = vld [vmem:[#allocation5 + $0x170] sm:$0xff]
        %v636 = vld [vmem:[#allocation5 + $0x178] sm:$0xff]
        %v637 = vld [vmem:[#allocation5 + $0x180] sm:$0xff]
        %v638 = vld [vmem:[#allocation5 + $0x188] sm:$0xff]
        %v639 = vld [vmem:[#allocation5 + $0x190] sm:$0xff]
        %v640 = vld [vmem:[#allocation5 + $0x198] sm:$0xff]
        %v641 = vld [vmem:[#allocation5 + $0x1a0] sm:$0xff]
        %v642 = vld [vmem:[#allocation5 + $0x1a8] sm:$0xff]
        %v643 = vld [vmem:[#allocation5 + $0x1b0] sm:$0xff]
        %v644 = vld [vmem:[#allocation5 + $0x1b8] sm:$0xff]
        %v645 = vld [vmem:[#allocation5 + $0x1c0] sm:$0xff]
        %v646 = vld [vmem:[#allocation5 + $0x1c8] sm:$0xff]
        %v647 = vld [vmem:[#allocation5 + $0x1d0] sm:$0xff]
        %v648 = vld [vmem:[#allocation5 + $0x1d8] sm:$0xff]
        %v649 = vld [vmem:[#allocation5 + $0x1e0] sm:$0xff]
        %v650 = vld [vmem:[#allocation5 + $0x1e8] sm:$0xff]
        %v651 = vld [vmem:[#allocation5 + $0x1f0] sm:$0xff]
        %v652 = vld [vmem:[#allocation5 + $0x1f8] sm:$0xff]
        %v653 = vld [vmem:[#allocation5 + $0x200] sm:$0xff]
        %v654 = vld [vmem:[#allocation5 + $0x208] sm:$0xff]
        %v655 = vld [vmem:[#allocation5 + $0x210] sm:$0xff]
        %v656 = vld [vmem:[#allocation5 + $0x218] sm:$0xff]
        %v657 = vld [vmem:[#allocation5 + $0x220] sm:$0xff]
        %v658 = vld [vmem:[#allocation5 + $0x228] sm:$0xff]
        %v659 = vld [vmem:[#allocation5 + $0x230] sm:$0xff]
        %v660 = vld [vmem:[#allocation5 + $0x238] sm:$0xff]
        %v661 = vld [vmem:[#allocation5 + $0x240] sm:$0xff]
        %v662 = vld [vmem:[#allocation5 + $0x248] sm:$0xff]
        %v663 = vld [vmem:[#allocation5 + $0x250] sm:$0xff]
        %v664 = vld [vmem:[#allocation5 + $0x258] sm:$0xff]
        %v665 = vld [vmem:[#allocation5 + $0x260] sm:$0xff]
        %v666 = vld [vmem:[#allocation5 + $0x268] sm:$0xff]
        %v667 = vld [vmem:[#allocation5 + $0x270] sm:$0xff]
        %v668 = vld [vmem:[#allocation5 + $0x278] sm:$0xff]
        %v669 = vld [vmem:[#allocation5 + $0x280] sm:$0xff]
        %v670 = vld [vmem:[#allocation5 + $0x288] sm:$0xff]
        %v671 = vld [vmem:[#allocation5 + $0x290] sm:$0xff]
        %v672 = vld [vmem:[#allocation5 + $0x298] sm:$0xff]
        %v673 = vld [vmem:[#allocation5 + $0x2a0] sm:$0xff]
        %v674 = vld [vmem:[#allocation5 + $0x2a8] sm:$0xff]
        %v675 = vld [vmem:[#allocation5 + $0x2b0] sm:$0xff]
        %v676 = vld [vmem:[#allocation5 + $0x2b8] sm:$0xff]
        %v677 = vld [vmem:[#allocation5 + $0x2c0] sm:$0xff]
        %v678 = vld [vmem:[#allocation5 + $0x2c8] sm:$0xff]
        %v679 = vld [vmem:[#allocation5 + $0x2d0] sm:$0xff]
        %v680 = vld [vmem:[#allocation5 + $0x2d8] sm:$0xff]
        %v681 = vld [vmem:[#allocation5 + $0x2e0] sm:$0xff]
        %v682 = vld [vmem:[#allocation5 + $0x2e8] sm:$0xff]
        %v683 = vld [vmem:[#allocation5 + $0x2f0] sm:$0xff]
        %v684 = vld [vmem:[#allocation5 + $0x2f8] sm:$0xff]
        %v685 = vld [vmem:[#allocation5 + $0x300] sm:$0xff]
        %v686 = vld [vmem:[#allocation5 + $0x308] sm:$0xff]
        %v687 = vld [vmem:[#allocation5 + $0x310] sm:$0xff]
        %v688 = vld [vmem:[#allocation5 + $0x318] sm:$0xff]
        %v689 = vld [vmem:[#allocation5 + $0x320] sm:$0xff]
        %v690 = vld [vmem:[#allocation5 + $0x328] sm:$0xff]
        %v691 = vld [vmem:[#allocation5 + $0x330] sm:$0xff]
        %v692 = vld [vmem:[#allocation5 + $0x338] sm:$0xff]
        %v693 = vld [vmem:[#allocation5 + $0x340] sm:$0xff]
        %v694 = vld [vmem:[#allocation5 + $0x348] sm:$0xff]
        %v695 = vld [vmem:[#allocation5 + $0x350] sm:$0xff]
        %v696 = vld [vmem:[#allocation5 + $0x358] sm:$0xff]
        %v697 = vld [vmem:[#allocation5 + $0x360] sm:$0xff]
        %v698 = vld [vmem:[#allocation5 + $0x368] sm:$0xff]
        %v699 = vld [vmem:[#allocation5 + $0x370] sm:$0xff]
        %v700 = vld [vmem:[#allocation5 + $0x378] sm:$0xff]
        %v701 = vld [vmem:[#allocation5 + $0x380] sm:$0xff]
        %v702 = vld [vmem:[#allocation5 + $0x388] sm:$0xff]
        %v703 = vld [vmem:[#allocation5 + $0x390] sm:$0xff]
        %v704 = vld [vmem:[#allocation5 + $0x398] sm:$0xff]
        %v705 = vld [vmem:[#allocation5 + $0x3a0] sm:$0xff]
        %v706 = vld [vmem:[#allocation5 + $0x3a8] sm:$0xff]
        %v707 = vld [vmem:[#allocation5 + $0x3b0] sm:$0xff]
        %v708 = vld [vmem:[#allocation5 + $0x3b8] sm:$0xff]
        %v709 = vld [vmem:[#allocation5 + $0x3c0] sm:$0xff]
        %v710 = vld [vmem:[#allocation5 + $0x3c8] sm:$0xff]
        %v711 = vld [vmem:[#allocation5 + $0x3d0] sm:$0xff]
        %v712 = vld [vmem:[#allocation5 + $0x3d8] sm:$0xff]
        %v713 = vld [vmem:[#allocation5 + $0x3e0] sm:$0xff]
        %v714 = vld [vmem:[#allocation5 + $0x3e8] sm:$0xff]
        %v715 = vld [vmem:[#allocation5 + $0x3f0] sm:$0xff]
        %v716 = vld [vmem:[#allocation5 + $0x3f8] sm:$0xff]
        %v717 = vld [vmem:[#allocation7] sm:$0xf]
        %v719 = vperm.slane %v717, 0
        %v720 = vperm.slane %v717, 1
        %v721 = vperm.slane %v717, 2
        %v722 = vperm.slane %v717, 3
        %727 = vmatpush.msra.mxu0 %v649
        %728 = vmatpush.msra.mxu0 %v645
        %729 = vmatpush.msra.mxu0 %v641
        %730 = vmatpush.msra.mxu0 %v637
        %731 = vmatpush.msra.mxu0 %v633
        %732 = vmatpush.msra.mxu0 %v629
        %733 = vmatpush.msra.mxu0 %v625
        %734 = vmatpush.msra.mxu0 %v621
        %735 = vmatpush.msra.mxu0 %v617
        %736 = vmatpush.msra.mxu0 %v613
        %737 = vmatpush.msra.mxu0 %v609
        %738 = vmatpush.msra.mxu0 %v605
        %739 = vmatpush.msra.mxu0 %v601
        %740 = vmatpush.msra.mxu0 %v597
        %741 = vmatpush.msra.mxu0 %v593
        %742 = vmatpush.msra.mxu0 %v589
        %743 = vmatmul.f32.gmra.mxu0 %v587
        %v744 = vpop.f32.mrf.mxu0
        %v745 = vadd.f32 %v719, %v744
        %746 = vdwg.mxu0
        %747 = vmatpush.msra.mxu0 %v713
        %748 = vmatpush.msra.mxu0 %v709
        %749 = vmatpush.msra.mxu0 %v705
        %750 = vmatpush.msra.mxu0 %v701
        %751 = vmatpush.msra.mxu0 %v697
        %752 = vmatpush.msra.mxu0 %v693
        %753 = vmatpush.msra.mxu0 %v689
        %754 = vmatpush.msra.mxu0 %v685
        %755 = vmatpush.msra.mxu0 %v681
        %756 = vmatpush.msra.mxu0 %v677
        %757 = vmatpush.msra.mxu0 %v673
        %758 = vmatpush.msra.mxu0 %v669
        %759 = vmatpush.msra.mxu0 %v665
        %760 = vmatpush.msra.mxu0 %v661
        %761 = vmatpush.msra.mxu0 %v657
        %762 = vmatpush.msra.mxu0 %v653
        %763 = vmatmul.f32.gmra.mxu0 %v588
        %v764 = vpop.f32.mrf.mxu0
        %v765 = vadd.f32 %v745, %v764
        %766 = vdwg.mxu0
        %767 = vmatpush.msra.mxu0 %v650
        %768 = vmatpush.msra.mxu0 %v646
        %769 = vmatpush.msra.mxu0 %v642
        %770 = vmatpush.msra.mxu0 %v638
        %771 = vmatpush.msra.mxu0 %v634
        %772 = vmatpush.msra.mxu0 %v630
        %773 = vmatpush.msra.mxu0 %v626
        %774 = vmatpush.msra.mxu0 %v622
        %775 = vmatpush.msra.mxu0 %v618
        %776 = vmatpush.msra.mxu0 %v614
        %777 = vmatpush.msra.mxu0 %v610
        %778 = vmatpush.msra.mxu0 %v606
        %779 = vmatpush.msra.mxu0 %v602
        %780 = vmatpush.msra.mxu0 %v598
        %781 = vmatpush.msra.mxu0 %v594
        %782 = vmatpush.msra.mxu0 %v590
        %783 = vmatmul.f32.gmra.mxu0 %v587
        %v784 = vpop.f32.mrf.mxu0
        %v785 = vadd.f32 %v720, %v784
        %786 = vdwg.mxu0
        %787 = vmatpush.msra.mxu0 %v714
        %788 = vmatpush.msra.mxu0 %v710
        %789 = vmatpush.msra.mxu0 %v706
        %790 = vmatpush.msra.mxu0 %v702
        %791 = vmatpush.msra.mxu0 %v698
        %792 = vmatpush.msra.mxu0 %v694
        %793 = vmatpush.msra.mxu0 %v690
        %794 = vmatpush.msra.mxu0 %v686
        %795 = vmatpush.msra.mxu0 %v682
        %796 = vmatpush.msra.mxu0 %v678
        %797 = vmatpush.msra.mxu0 %v674
        %798 = vmatpush.msra.mxu0 %v670
        %799 = vmatpush.msra.mxu0 %v666
        %800 = vmatpush.msra.mxu0 %v662
        %801 = vmatpush.msra.mxu0 %v658
        %802 = vmatpush.msra.mxu0 %v654
        %803 = vmatmul.f32.gmra.mxu0 %v588
        %v804 = vpop.f32.mrf.mxu0
        %v805 = vadd.f32 %v785, %v804
        %806 = vdwg.mxu0
        %807 = vmatpush.msra.mxu0 %v651
        %808 = vmatpush.msra.mxu0 %v647
        %809 = vmatpush.msra.mxu0 %v643
        %810 = vmatpush.msra.mxu0 %v639
        %811 = vmatpush.msra.mxu0 %v635
        %812 = vmatpush.msra.mxu0 %v631
        %813 = vmatpush.msra.mxu0 %v627
        %814 = vmatpush.msra.mxu0 %v623
        %815 = vmatpush.msra.mxu0 %v619
        %816 = vmatpush.msra.mxu0 %v615
        %817 = vmatpush.msra.mxu0 %v611
        %818 = vmatpush.msra.mxu0 %v607
        %819 = vmatpush.msra.mxu0 %v603
        %820 = vmatpush.msra.mxu0 %v599
        %821 = vmatpush.msra.mxu0 %v595
        %822 = vmatpush.msra.mxu0 %v591
        %823 = vmatmul.f32.gmra.mxu0 %v587
        %v824 = vpop.f32.mrf.mxu0
        %v825 = vadd.f32 %v721, %v824
        %826 = vdwg.mxu0
        %827 = vmatpush.msra.mxu0 %v715
        %828 = vmatpush.msra.mxu0 %v711
        %829 = vmatpush.msra.mxu0 %v707
        %830 = vmatpush.msra.mxu0 %v703
        %831 = vmatpush.msra.mxu0 %v699
        %832 = vmatpush.msra.mxu0 %v695
        %833 = vmatpush.msra.mxu0 %v691
        %834 = vmatpush.msra.mxu0 %v687
        %835 = vmatpush.msra.mxu0 %v683
        %836 = vmatpush.msra.mxu0 %v679
        %837 = vmatpush.msra.mxu0 %v675
        %838 = vmatpush.msra.mxu0 %v671
        %839 = vmatpush.msra.mxu0 %v667
        %840 = vmatpush.msra.mxu0 %v663
        %841 = vmatpush.msra.mxu0 %v659
        %842 = vmatpush.msra.mxu0 %v655
        %843 = vmatmul.f32.gmra.mxu0 %v588
        %v844 = vpop.f32.mrf.mxu0
        %v845 = vadd.f32 %v825, %v844
        %846 = vdwg.mxu0
        %847 = vmatpush.msra.mxu0 %v652
        %848 = vmatpush.msra.mxu0 %v648
        %849 = vmatpush.msra.mxu0 %v644
        %850 = vmatpush.msra.mxu0 %v640
        %851 = vmatpush.msra.mxu0 %v636
        %852 = vmatpush.msra.mxu0 %v632
        %853 = vmatpush.msra.mxu0 %v628
        %854 = vmatpush.msra.mxu0 %v624
        %855 = vmatpush.msra.mxu0 %v620
        %856 = vmatpush.msra.mxu0 %v616
        %857 = vmatpush.msra.mxu0 %v612
        %858 = vmatpush.msra.mxu0 %v608
        %859 = vmatpush.msra.mxu0 %v604
        %860 = vmatpush.msra.mxu0 %v600
        %861 = vmatpush.msra.mxu0 %v596
        %862 = vmatpush.msra.mxu0 %v592
        %863 = vmatmul.f32.gmra.mxu0 %v587
        %v864 = vpop.f32.mrf.mxu0
        %v865 = vadd.f32 %v722, %v864
        %866 = vdwg.mxu0
        %867 = vmatpush.msra.mxu0 %v716
        %868 = vmatpush.msra.mxu0 %v712
        %869 = vmatpush.msra.mxu0 %v708
        %870 = vmatpush.msra.mxu0 %v704
        %871 = vmatpush.msra.mxu0 %v700
        %872 = vmatpush.msra.mxu0 %v696
        %873 = vmatpush.msra.mxu0 %v692
        %874 = vmatpush.msra.mxu0 %v688
        %875 = vmatpush.msra.mxu0 %v684
        %876 = vmatpush.msra.mxu0 %v680
        %877 = vmatpush.msra.mxu0 %v676
        %878 = vmatpush.msra.mxu0 %v672
        %879 = vmatpush.msra.mxu0 %v668
        %880 = vmatpush.msra.mxu0 %v664
        %881 = vmatpush.msra.mxu0 %v660
        %882 = vmatpush.msra.mxu0 %v656
        %883 = vmatmul.f32.gmra.mxu0 %v588
        %v884 = vpop.f32.mrf.mxu0
        %v885 = vadd.f32 %v865, %v884
        %886 = vdwg.mxu0
        %v887 = vmax.f32 %v765, 0.0
        %v888 = vmax.f32 %v805, 0.0
        %v889 = vmax.f32 %v845, 0.0
        %v890 = vmax.f32 %v885, 0.0
        %v891 = vld [vmem:[#allocation8] sm:$0xff]
        %v892 = vld [vmem:[#allocation8 + $0x8] sm:$0xff]
        %v893 = vld [vmem:[#allocation8 + $0x10] sm:$0xff]
        %v894 = vld [vmem:[#allocation8 + $0x18] sm:$0xff]
        %v895 = vld [vmem:[#allocation8 + $0x20] sm:$0xff]
        %v896 = vld [vmem:[#allocation8 + $0x28] sm:$0xff]
        %v897 = vld [vmem:[#allocation8 + $0x30] sm:$0xff]
        %v898 = vld [vmem:[#allocation8 + $0x38] sm:$0xff]
        %v899 = vld [vmem:[#allocation8 + $0x40] sm:$0xff]
        %v900 = vld [vmem:[#allocation8 + $0x48] sm:$0xff]
        %v901 = vld [vmem:[#allocation8 + $0x50] sm:$0xff]
        %v902 = vld [vmem:[#allocation8 + $0x58] sm:$0xff]
        %v903 = vld [vmem:[#allocation8 + $0x60] sm:$0xff]
        %v904 = vld [vmem:[#allocation8 + $0x68] sm:$0xff]
        %v905 = vld [vmem:[#allocation8 + $0x70] sm:$0xff]
        %v906 = vld [vmem:[#allocation8 + $0x78] sm:$0xff]
        %v907 = vld [vmem:[#allocation8 + $0x80] sm:$0xff]
        %v908 = vld [vmem:[#allocation8 + $0x88] sm:$0xff]
        %v909 = vld [vmem:[#allocation8 + $0x90] sm:$0xff]
        %v910 = vld [vmem:[#allocation8 + $0x98] sm:$0xff]
        %v911 = vld [vmem:[#allocation8 + $0xa0] sm:$0xff]
        %v912 = vld [vmem:[#allocation8 + $0xa8] sm:$0xff]
        %v913 = vld [vmem:[#allocation8 + $0xb0] sm:$0xff]
        %v914 = vld [vmem:[#allocation8 + $0xb8] sm:$0xff]
        %v915 = vld [vmem:[#allocation8 + $0xc0] sm:$0xff]
        %v916 = vld [vmem:[#allocation8 + $0xc8] sm:$0xff]
        %v917 = vld [vmem:[#allocation8 + $0xd0] sm:$0xff]
        %v918 = vld [vmem:[#allocation8 + $0xd8] sm:$0xff]
        %v919 = vld [vmem:[#allocation8 + $0xe0] sm:$0xff]
        %v920 = vld [vmem:[#allocation8 + $0xe8] sm:$0xff]
        %v921 = vld [vmem:[#allocation8 + $0xf0] sm:$0xff]
        %v922 = vld [vmem:[#allocation8 + $0xf8] sm:$0xff]
        %v923 = vld [vmem:[#allocation8 + $0x100] sm:$0xff]
        %v924 = vld [vmem:[#allocation8 + $0x108] sm:$0xff]
        %v925 = vld [vmem:[#allocation8 + $0x110] sm:$0xff]
        %v926 = vld [vmem:[#allocation8 + $0x118] sm:$0xff]
        %v927 = vld [vmem:[#allocation8 + $0x120] sm:$0xff]
        %v928 = vld [vmem:[#allocation8 + $0x128] sm:$0xff]
        %v929 = vld [vmem:[#allocation8 + $0x130] sm:$0xff]
        %v930 = vld [vmem:[#allocation8 + $0x138] sm:$0xff]
        %v931 = vld [vmem:[#allocation8 + $0x140] sm:$0xff]
        %v932 = vld [vmem:[#allocation8 + $0x148] sm:$0xff]
        %v933 = vld [vmem:[#allocation8 + $0x150] sm:$0xff]
        %v934 = vld [vmem:[#allocation8 + $0x158] sm:$0xff]
        %v935 = vld [vmem:[#allocation8 + $0x160] sm:$0xff]
        %v936 = vld [vmem:[#allocation8 + $0x168] sm:$0xff]
        %v937 = vld [vmem:[#allocation8 + $0x170] sm:$0xff]
        %v938 = vld [vmem:[#allocation8 + $0x178] sm:$0xff]
        %v939 = vld [vmem:[#allocation8 + $0x180] sm:$0xff]
        %v940 = vld [vmem:[#allocation8 + $0x188] sm:$0xff]
        %v941 = vld [vmem:[#allocation8 + $0x190] sm:$0xff]
        %v942 = vld [vmem:[#allocation8 + $0x198] sm:$0xff]
        %v943 = vld [vmem:[#allocation8 + $0x1a0] sm:$0xff]
        %v944 = vld [vmem:[#allocation8 + $0x1a8] sm:$0xff]
        %v945 = vld [vmem:[#allocation8 + $0x1b0] sm:$0xff]
        %v946 = vld [vmem:[#allocation8 + $0x1b8] sm:$0xff]
        %v947 = vld [vmem:[#allocation8 + $0x1c0] sm:$0xff]
        %v948 = vld [vmem:[#allocation8 + $0x1c8] sm:$0xff]
        %v949 = vld [vmem:[#allocation8 + $0x1d0] sm:$0xff]
        %v950 = vld [vmem:[#allocation8 + $0x1d8] sm:$0xff]
        %v951 = vld [vmem:[#allocation8 + $0x1e0] sm:$0xff]
        %v952 = vld [vmem:[#allocation8 + $0x1e8] sm:$0xff]
        %v953 = vld [vmem:[#allocation8 + $0x1f0] sm:$0xff]
        %v954 = vld [vmem:[#allocation8 + $0x1f8] sm:$0xff]
        %v955 = vld [vmem:[#allocation8 + $0x200] sm:$0xff]
        %v956 = vld [vmem:[#allocation8 + $0x208] sm:$0xff]
        %v957 = vld [vmem:[#allocation8 + $0x210] sm:$0xff]
        %v958 = vld [vmem:[#allocation8 + $0x218] sm:$0xff]
        %v959 = vld [vmem:[#allocation8 + $0x220] sm:$0xff]
        %v960 = vld [vmem:[#allocation8 + $0x228] sm:$0xff]
        %v961 = vld [vmem:[#allocation8 + $0x230] sm:$0xff]
        %v962 = vld [vmem:[#allocation8 + $0x238] sm:$0xff]
        %v963 = vld [vmem:[#allocation8 + $0x240] sm:$0xff]
        %v964 = vld [vmem:[#allocation8 + $0x248] sm:$0xff]
        %v965 = vld [vmem:[#allocation8 + $0x250] sm:$0xff]
        %v966 = vld [vmem:[#allocation8 + $0x258] sm:$0xff]
        %v967 = vld [vmem:[#allocation8 + $0x260] sm:$0xff]
        %v968 = vld [vmem:[#allocation8 + $0x268] sm:$0xff]
        %v969 = vld [vmem:[#allocation8 + $0x270] sm:$0xff]
        %v970 = vld [vmem:[#allocation8 + $0x278] sm:$0xff]
        %v971 = vld [vmem:[#allocation8 + $0x280] sm:$0xff]
        %v972 = vld [vmem:[#allocation8 + $0x288] sm:$0xff]
        %v973 = vld [vmem:[#allocation8 + $0x290] sm:$0xff]
        %v974 = vld [vmem:[#allocation8 + $0x298] sm:$0xff]
        %v975 = vld [vmem:[#allocation8 + $0x2a0] sm:$0xff]
        %v976 = vld [vmem:[#allocation8 + $0x2a8] sm:$0xff]
        %v977 = vld [vmem:[#allocation8 + $0x2b0] sm:$0xff]
        %v978 = vld [vmem:[#allocation8 + $0x2b8] sm:$0xff]
        %v979 = vld [vmem:[#allocation8 + $0x2c0] sm:$0xff]
        %v980 = vld [vmem:[#allocation8 + $0x2c8] sm:$0xff]
        %v981 = vld [vmem:[#allocation8 + $0x2d0] sm:$0xff]
        %v982 = vld [vmem:[#allocation8 + $0x2d8] sm:$0xff]
        %v983 = vld [vmem:[#allocation8 + $0x2e0] sm:$0xff]
        %v984 = vld [vmem:[#allocation8 + $0x2e8] sm:$0xff]
        %v985 = vld [vmem:[#allocation8 + $0x2f0] sm:$0xff]
        %v986 = vld [vmem:[#allocation8 + $0x2f8] sm:$0xff]
        %v987 = vld [vmem:[#allocation8 + $0x300] sm:$0xff]
        %v988 = vld [vmem:[#allocation8 + $0x308] sm:$0xff]
        %v989 = vld [vmem:[#allocation8 + $0x310] sm:$0xff]
        %v990 = vld [vmem:[#allocation8 + $0x318] sm:$0xff]
        %v991 = vld [vmem:[#allocation8 + $0x320] sm:$0xff]
        %v992 = vld [vmem:[#allocation8 + $0x328] sm:$0xff]
        %v993 = vld [vmem:[#allocation8 + $0x330] sm:$0xff]
        %v994 = vld [vmem:[#allocation8 + $0x338] sm:$0xff]
        %v995 = vld [vmem:[#allocation8 + $0x340] sm:$0xff]
        %v996 = vld [vmem:[#allocation8 + $0x348] sm:$0xff]
        %v997 = vld [vmem:[#allocation8 + $0x350] sm:$0xff]
        %v998 = vld [vmem:[#allocation8 + $0x358] sm:$0xff]
        %v999 = vld [vmem:[#allocation8 + $0x360] sm:$0xff]
        %v1000 = vld [vmem:[#allocation8 + $0x368] sm:$0xff]
        %v1001 = vld [vmem:[#allocation8 + $0x370] sm:$0xff]
        %v1002 = vld [vmem:[#allocation8 + $0x378] sm:$0xff]
        %v1003 = vld [vmem:[#allocation8 + $0x380] sm:$0xff]
        %v1004 = vld [vmem:[#allocation8 + $0x388] sm:$0xff]
        %v1005 = vld [vmem:[#allocation8 + $0x390] sm:$0xff]
        %v1006 = vld [vmem:[#allocation8 + $0x398] sm:$0xff]
        %v1007 = vld [vmem:[#allocation8 + $0x3a0] sm:$0xff]
        %v1008 = vld [vmem:[#allocation8 + $0x3a8] sm:$0xff]
        %v1009 = vld [vmem:[#allocation8 + $0x3b0] sm:$0xff]
        %v1010 = vld [vmem:[#allocation8 + $0x3b8] sm:$0xff]
        %v1011 = vld [vmem:[#allocation8 + $0x3c0] sm:$0xff]
        %v1012 = vld [vmem:[#allocation8 + $0x3c8] sm:$0xff]
        %v1013 = vld [vmem:[#allocation8 + $0x3d0] sm:$0xff]
        %v1014 = vld [vmem:[#allocation8 + $0x3d8] sm:$0xff]
        %v1015 = vld [vmem:[#allocation8 + $0x3e0] sm:$0xff]
        %v1016 = vld [vmem:[#allocation8 + $0x3e8] sm:$0xff]
        %v1017 = vld [vmem:[#allocation8 + $0x3f0] sm:$0xff]
        %v1018 = vld [vmem:[#allocation8 + $0x3f8] sm:$0xff]
        %v1019 = vld [vmem:[#allocation8 + $0x400] sm:$0xff]
        %v1020 = vld [vmem:[#allocation8 + $0x408] sm:$0xff]
        %v1021 = vld [vmem:[#allocation8 + $0x410] sm:$0xff]
        %v1022 = vld [vmem:[#allocation8 + $0x418] sm:$0xff]
        %v1023 = vld [vmem:[#allocation8 + $0x420] sm:$0xff]
        %v1024 = vld [vmem:[#allocation8 + $0x428] sm:$0xff]
        %v1025 = vld [vmem:[#allocation8 + $0x430] sm:$0xff]
        %v1026 = vld [vmem:[#allocation8 + $0x438] sm:$0xff]
        %v1027 = vld [vmem:[#allocation8 + $0x440] sm:$0xff]
        %v1028 = vld [vmem:[#allocation8 + $0x448] sm:$0xff]
        %v1029 = vld [vmem:[#allocation8 + $0x450] sm:$0xff]
        %v1030 = vld [vmem:[#allocation8 + $0x458] sm:$0xff]
        %v1031 = vld [vmem:[#allocation8 + $0x460] sm:$0xff]
        %v1032 = vld [vmem:[#allocation8 + $0x468] sm:$0xff]
        %v1033 = vld [vmem:[#allocation8 + $0x470] sm:$0xff]
        %v1034 = vld [vmem:[#allocation8 + $0x478] sm:$0xff]
        %v1035 = vld [vmem:[#allocation8 + $0x480] sm:$0xff]
        %v1036 = vld [vmem:[#allocation8 + $0x488] sm:$0xff]
        %v1037 = vld [vmem:[#allocation8 + $0x490] sm:$0xff]
        %v1038 = vld [vmem:[#allocation8 + $0x498] sm:$0xff]
        %v1039 = vld [vmem:[#allocation8 + $0x4a0] sm:$0xff]
        %v1040 = vld [vmem:[#allocation8 + $0x4a8] sm:$0xff]
        %v1041 = vld [vmem:[#allocation8 + $0x4b0] sm:$0xff]
        %v1042 = vld [vmem:[#allocation8 + $0x4b8] sm:$0xff]
        %v1043 = vld [vmem:[#allocation8 + $0x4c0] sm:$0xff]
        %v1044 = vld [vmem:[#allocation8 + $0x4c8] sm:$0xff]
        %v1045 = vld [vmem:[#allocation8 + $0x4d0] sm:$0xff]
        %v1046 = vld [vmem:[#allocation8 + $0x4d8] sm:$0xff]
        %v1047 = vld [vmem:[#allocation8 + $0x4e0] sm:$0xff]
        %v1048 = vld [vmem:[#allocation8 + $0x4e8] sm:$0xff]
        %v1049 = vld [vmem:[#allocation8 + $0x4f0] sm:$0xff]
        %v1050 = vld [vmem:[#allocation8 + $0x4f8] sm:$0xff]
        %v1051 = vld [vmem:[#allocation8 + $0x500] sm:$0xff]
        %v1052 = vld [vmem:[#allocation8 + $0x508] sm:$0xff]
        %v1053 = vld [vmem:[#allocation8 + $0x510] sm:$0xff]
        %v1054 = vld [vmem:[#allocation8 + $0x518] sm:$0xff]
        %v1055 = vld [vmem:[#allocation8 + $0x520] sm:$0xff]
        %v1056 = vld [vmem:[#allocation8 + $0x528] sm:$0xff]
        %v1057 = vld [vmem:[#allocation8 + $0x530] sm:$0xff]
        %v1058 = vld [vmem:[#allocation8 + $0x538] sm:$0xff]
        %v1059 = vld [vmem:[#allocation8 + $0x540] sm:$0xff]
        %v1060 = vld [vmem:[#allocation8 + $0x548] sm:$0xff]
        %v1061 = vld [vmem:[#allocation8 + $0x550] sm:$0xff]
        %v1062 = vld [vmem:[#allocation8 + $0x558] sm:$0xff]
        %v1063 = vld [vmem:[#allocation8 + $0x560] sm:$0xff]
        %v1064 = vld [vmem:[#allocation8 + $0x568] sm:$0xff]
        %v1065 = vld [vmem:[#allocation8 + $0x570] sm:$0xff]
        %v1066 = vld [vmem:[#allocation8 + $0x578] sm:$0xff]
        %v1067 = vld [vmem:[#allocation8 + $0x580] sm:$0xff]
        %v1068 = vld [vmem:[#allocation8 + $0x588] sm:$0xff]
        %v1069 = vld [vmem:[#allocation8 + $0x590] sm:$0xff]
        %v1070 = vld [vmem:[#allocation8 + $0x598] sm:$0xff]
        %v1071 = vld [vmem:[#allocation8 + $0x5a0] sm:$0xff]
        %v1072 = vld [vmem:[#allocation8 + $0x5a8] sm:$0xff]
        %v1073 = vld [vmem:[#allocation8 + $0x5b0] sm:$0xff]
        %v1074 = vld [vmem:[#allocation8 + $0x5b8] sm:$0xff]
        %v1075 = vld [vmem:[#allocation8 + $0x5c0] sm:$0xff]
        %v1076 = vld [vmem:[#allocation8 + $0x5c8] sm:$0xff]
        %v1077 = vld [vmem:[#allocation8 + $0x5d0] sm:$0xff]
        %v1078 = vld [vmem:[#allocation8 + $0x5d8] sm:$0xff]
        %v1079 = vld [vmem:[#allocation8 + $0x5e0] sm:$0xff]
        %v1080 = vld [vmem:[#allocation8 + $0x5e8] sm:$0xff]
        %v1081 = vld [vmem:[#allocation8 + $0x5f0] sm:$0xff]
        %v1082 = vld [vmem:[#allocation8 + $0x5f8] sm:$0xff]
        %v1083 = vld [vmem:[#allocation8 + $0x600] sm:$0xff]
        %v1084 = vld [vmem:[#allocation8 + $0x608] sm:$0xff]
        %v1085 = vld [vmem:[#allocation8 + $0x610] sm:$0xff]
        %v1086 = vld [vmem:[#allocation8 + $0x618] sm:$0xff]
        %v1087 = vld [vmem:[#allocation8 + $0x620] sm:$0xff]
        %v1088 = vld [vmem:[#allocation8 + $0x628] sm:$0xff]
        %v1089 = vld [vmem:[#allocation8 + $0x630] sm:$0xff]
        %v1090 = vld [vmem:[#allocation8 + $0x638] sm:$0xff]
        %v1091 = vld [vmem:[#allocation8 + $0x640] sm:$0xff]
        %v1092 = vld [vmem:[#allocation8 + $0x648] sm:$0xff]
        %v1093 = vld [vmem:[#allocation8 + $0x650] sm:$0xff]
        %v1094 = vld [vmem:[#allocation8 + $0x658] sm:$0xff]
        %v1095 = vld [vmem:[#allocation8 + $0x660] sm:$0xff]
        %v1096 = vld [vmem:[#allocation8 + $0x668] sm:$0xff]
        %v1097 = vld [vmem:[#allocation8 + $0x670] sm:$0xff]
        %v1098 = vld [vmem:[#allocation8 + $0x678] sm:$0xff]
        %v1099 = vld [vmem:[#allocation8 + $0x680] sm:$0xff]
        %v1100 = vld [vmem:[#allocation8 + $0x688] sm:$0xff]
        %v1101 = vld [vmem:[#allocation8 + $0x690] sm:$0xff]
        %v1102 = vld [vmem:[#allocation8 + $0x698] sm:$0xff]
        %v1103 = vld [vmem:[#allocation8 + $0x6a0] sm:$0xff]
        %v1104 = vld [vmem:[#allocation8 + $0x6a8] sm:$0xff]
        %v1105 = vld [vmem:[#allocation8 + $0x6b0] sm:$0xff]
        %v1106 = vld [vmem:[#allocation8 + $0x6b8] sm:$0xff]
        %v1107 = vld [vmem:[#allocation8 + $0x6c0] sm:$0xff]
        %v1108 = vld [vmem:[#allocation8 + $0x6c8] sm:$0xff]
        %v1109 = vld [vmem:[#allocation8 + $0x6d0] sm:$0xff]
        %v1110 = vld [vmem:[#allocation8 + $0x6d8] sm:$0xff]
        %v1111 = vld [vmem:[#allocation8 + $0x6e0] sm:$0xff]
        %v1112 = vld [vmem:[#allocation8 + $0x6e8] sm:$0xff]
        %v1113 = vld [vmem:[#allocation8 + $0x6f0] sm:$0xff]
        %v1114 = vld [vmem:[#allocation8 + $0x6f8] sm:$0xff]
        %v1115 = vld [vmem:[#allocation8 + $0x700] sm:$0xff]
        %v1116 = vld [vmem:[#allocation8 + $0x708] sm:$0xff]
        %v1117 = vld [vmem:[#allocation8 + $0x710] sm:$0xff]
        %v1118 = vld [vmem:[#allocation8 + $0x718] sm:$0xff]
        %v1119 = vld [vmem:[#allocation8 + $0x720] sm:$0xff]
        %v1120 = vld [vmem:[#allocation8 + $0x728] sm:$0xff]
        %v1121 = vld [vmem:[#allocation8 + $0x730] sm:$0xff]
        %v1122 = vld [vmem:[#allocation8 + $0x738] sm:$0xff]
        %v1123 = vld [vmem:[#allocation8 + $0x740] sm:$0xff]
        %v1124 = vld [vmem:[#allocation8 + $0x748] sm:$0xff]
        %v1125 = vld [vmem:[#allocation8 + $0x750] sm:$0xff]
        %v1126 = vld [vmem:[#allocation8 + $0x758] sm:$0xff]
        %v1127 = vld [vmem:[#allocation8 + $0x760] sm:$0xff]
        %v1128 = vld [vmem:[#allocation8 + $0x768] sm:$0xff]
        %v1129 = vld [vmem:[#allocation8 + $0x770] sm:$0xff]
        %v1130 = vld [vmem:[#allocation8 + $0x778] sm:$0xff]
        %v1131 = vld [vmem:[#allocation8 + $0x780] sm:$0xff]
        %v1132 = vld [vmem:[#allocation8 + $0x788] sm:$0xff]
        %v1133 = vld [vmem:[#allocation8 + $0x790] sm:$0xff]
        %v1134 = vld [vmem:[#allocation8 + $0x798] sm:$0xff]
        %v1135 = vld [vmem:[#allocation8 + $0x7a0] sm:$0xff]
        %v1136 = vld [vmem:[#allocation8 + $0x7a8] sm:$0xff]
        %v1137 = vld [vmem:[#allocation8 + $0x7b0] sm:$0xff]
        %v1138 = vld [vmem:[#allocation8 + $0x7b8] sm:$0xff]
        %v1139 = vld [vmem:[#allocation8 + $0x7c0] sm:$0xff]
        %v1140 = vld [vmem:[#allocation8 + $0x7c8] sm:$0xff]
        %v1141 = vld [vmem:[#allocation8 + $0x7d0] sm:$0xff]
        %v1142 = vld [vmem:[#allocation8 + $0x7d8] sm:$0xff]
        %v1143 = vld [vmem:[#allocation8 + $0x7e0] sm:$0xff]
        %v1144 = vld [vmem:[#allocation8 + $0x7e8] sm:$0xff]
        %v1145 = vld [vmem:[#allocation8 + $0x7f0] sm:$0xff]
        %v1146 = vld [vmem:[#allocation8 + $0x7f8] sm:$0xff]
        %v1147 = vld [vmem:[#allocation10] sm:$0xf]
        %v1149 = vperm.slane %v1147, 0
        %v1150 = vperm.slane %v1147, 1
        %v1151 = vperm.slane %v1147, 2
        %v1152 = vperm.slane %v1147, 3
        %1157 = vmatpush.msra.mxu0 %v951
        %1158 = vmatpush.msra.mxu0 %v947
        %1159 = vmatpush.msra.mxu0 %v943
        %1160 = vmatpush.msra.mxu0 %v939
        %1161 = vmatpush.msra.mxu0 %v935
        %1162 = vmatpush.msra.mxu0 %v931
        %1163 = vmatpush.msra.mxu0 %v927
        %1164 = vmatpush.msra.mxu0 %v923
        %1165 = vmatpush.msra.mxu0 %v919
        %1166 = vmatpush.msra.mxu0 %v915
        %1167 = vmatpush.msra.mxu0 %v911
        %1168 = vmatpush.msra.mxu0 %v907
        %1169 = vmatpush.msra.mxu0 %v903
        %1170 = vmatpush.msra.mxu0 %v899
        %1171 = vmatpush.msra.mxu0 %v895
        %1172 = vmatpush.msra.mxu0 %v891
        %1173 = vmatmul.f32.gmra.mxu0 %v887
        %v1174 = vpop.f32.mrf.mxu0
        %v1175 = vadd.f32 %v1149, %v1174
        %1176 = vdwg.mxu0
        %1177 = vmatpush.msra.mxu0 %v1015
        %1178 = vmatpush.msra.mxu0 %v1011
        %1179 = vmatpush.msra.mxu0 %v1007
        %1180 = vmatpush.msra.mxu0 %v1003
        %1181 = vmatpush.msra.mxu0 %v999
        %1182 = vmatpush.msra.mxu0 %v995
        %1183 = vmatpush.msra.mxu0 %v991
        %1184 = vmatpush.msra.mxu0 %v987
        %1185 = vmatpush.msra.mxu0 %v983
        %1186 = vmatpush.msra.mxu0 %v979
        %1187 = vmatpush.msra.mxu0 %v975
        %1188 = vmatpush.msra.mxu0 %v971
        %1189 = vmatpush.msra.mxu0 %v967
        %1190 = vmatpush.msra.mxu0 %v963
        %1191 = vmatpush.msra.mxu0 %v959
        %1192 = vmatpush.msra.mxu0 %v955
        %1193 = vmatmul.f32.gmra.mxu0 %v888
        %v1194 = vpop.f32.mrf.mxu0
        %v1195 = vadd.f32 %v1175, %v1194
        %1196 = vdwg.mxu0
        %1197 = vmatpush.msra.mxu0 %v1079
        %1198 = vmatpush.msra.mxu0 %v1075
        %1199 = vmatpush.msra.mxu0 %v1071
        %1200 = vmatpush.msra.mxu0 %v1067
        %1201 = vmatpush.msra.mxu0 %v1063
        %1202 = vmatpush.msra.mxu0 %v1059
        %1203 = vmatpush.msra.mxu0 %v1055
        %1204 = vmatpush.msra.mxu0 %v1051
        %1205 = vmatpush.msra.mxu0 %v1047
        %1206 = vmatpush.msra.mxu0 %v1043
        %1207 = vmatpush.msra.mxu0 %v1039
        %1208 = vmatpush.msra.mxu0 %v1035
        %1209 = vmatpush.msra.mxu0 %v1031
        %1210 = vmatpush.msra.mxu0 %v1027
        %1211 = vmatpush.msra.mxu0 %v1023
        %1212 = vmatpush.msra.mxu0 %v1019
        %1213 = vmatmul.f32.gmra.mxu0 %v889
        %v1214 = vpop.f32.mrf.mxu0
        %v1215 = vadd.f32 %v1195, %v1214
        %1216 = vdwg.mxu0
        %1217 = vmatpush.msra.mxu0 %v1143
        %1218 = vmatpush.msra.mxu0 %v1139
        %1219 = vmatpush.msra.mxu0 %v1135
        %1220 = vmatpush.msra.mxu0 %v1131
        %1221 = vmatpush.msra.mxu0 %v1127
        %1222 = vmatpush.msra.mxu0 %v1123
        %1223 = vmatpush.msra.mxu0 %v1119
        %1224 = vmatpush.msra.mxu0 %v1115
        %1225 = vmatpush.msra.mxu0 %v1111
        %1226 = vmatpush.msra.mxu0 %v1107
        %1227 = vmatpush.msra.mxu0 %v1103
        %1228 = vmatpush.msra.mxu0 %v1099
        %1229 = vmatpush.msra.mxu0 %v1095
        %1230 = vmatpush.msra.mxu0 %v1091
        %1231 = vmatpush.msra.mxu0 %v1087
        %1232 = vmatpush.msra.mxu0 %v1083
        %1233 = vmatmul.f32.gmra.mxu0 %v890
        %v1234 = vpop.f32.mrf.mxu0
        %v1235 = vadd.f32 %v1215, %v1234
        %1236 = vdwg.mxu0
        %1237 = vmatpush.msra.mxu0 %v952
        %1238 = vmatpush.msra.mxu0 %v948
        %1239 = vmatpush.msra.mxu0 %v944
        %1240 = vmatpush.msra.mxu0 %v940
        %1241 = vmatpush.msra.mxu0 %v936
        %1242 = vmatpush.msra.mxu0 %v932
        %1243 = vmatpush.msra.mxu0 %v928
        %1244 = vmatpush.msra.mxu0 %v924
        %1245 = vmatpush.msra.mxu0 %v920
        %1246 = vmatpush.msra.mxu0 %v916
        %1247 = vmatpush.msra.mxu0 %v912
        %1248 = vmatpush.msra.mxu0 %v908
        %1249 = vmatpush.msra.mxu0 %v904
        %1250 = vmatpush.msra.mxu0 %v900
        %1251 = vmatpush.msra.mxu0 %v896
        %1252 = vmatpush.msra.mxu0 %v892
        %1253 = vmatmul.f32.gmra.mxu0 %v887
        %v1254 = vpop.f32.mrf.mxu0
        %v1255 = vadd.f32 %v1150, %v1254
        %1256 = vdwg.mxu0
        %1257 = vmatpush.msra.mxu0 %v1016
        %1258 = vmatpush.msra.mxu0 %v1012
        %1259 = vmatpush.msra.mxu0 %v1008
        %1260 = vmatpush.msra.mxu0 %v1004
        %1261 = vmatpush.msra.mxu0 %v1000
        %1262 = vmatpush.msra.mxu0 %v996
        %1263 = vmatpush.msra.mxu0 %v992
        %1264 = vmatpush.msra.mxu0 %v988
        %1265 = vmatpush.msra.mxu0 %v984
        %1266 = vmatpush.msra.mxu0 %v980
        %1267 = vmatpush.msra.mxu0 %v976
        %1268 = vmatpush.msra.mxu0 %v972
        %1269 = vmatpush.msra.mxu0 %v968
        %1270 = vmatpush.msra.mxu0 %v964
        %1271 = vmatpush.msra.mxu0 %v960
        %1272 = vmatpush.msra.mxu0 %v956
        %1273 = vmatmul.f32.gmra.mxu0 %v888
        %v1274 = vpop.f32.mrf.mxu0
        %v1275 = vadd.f32 %v1255, %v1274
        %1276 = vdwg.mxu0
        %1277 = vmatpush.msra.mxu0 %v1080
        %1278 = vmatpush.msra.mxu0 %v1076
        %1279 = vmatpush.msra.mxu0 %v1072
        %1280 = vmatpush.msra.mxu0 %v1068
        %1281 = vmatpush.msra.mxu0 %v1064
        %1282 = vmatpush.msra.mxu0 %v1060
        %1283 = vmatpush.msra.mxu0 %v1056
        %1284 = vmatpush.msra.mxu0 %v1052
        %1285 = vmatpush.msra.mxu0 %v1048
        %1286 = vmatpush.msra.mxu0 %v1044
        %1287 = vmatpush.msra.mxu0 %v1040
        %1288 = vmatpush.msra.mxu0 %v1036
        %1289 = vmatpush.msra.mxu0 %v1032
        %1290 = vmatpush.msra.mxu0 %v1028
        %1291 = vmatpush.msra.mxu0 %v1024
        %1292 = vmatpush.msra.mxu0 %v1020
        %1293 = vmatmul.f32.gmra.mxu0 %v889
        %v1294 = vpop.f32.mrf.mxu0
        %v1295 = vadd.f32 %v1275, %v1294
        %1296 = vdwg.mxu0
        %1297 = vmatpush.msra.mxu0 %v1144
        %1298 = vmatpush.msra.mxu0 %v1140
        %1299 = vmatpush.msra.mxu0 %v1136
        %1300 = vmatpush.msra.mxu0 %v1132
        %1301 = vmatpush.msra.mxu0 %v1128
        %1302 = vmatpush.msra.mxu0 %v1124
        %1303 = vmatpush.msra.mxu0 %v1120
        %1304 = vmatpush.msra.mxu0 %v1116
        %1305 = vmatpush.msra.mxu0 %v1112
        %1306 = vmatpush.msra.mxu0 %v1108
        %1307 = vmatpush.msra.mxu0 %v1104
        %1308 = vmatpush.msra.mxu0 %v1100
        %1309 = vmatpush.msra.mxu0 %v1096
        %1310 = vmatpush.msra.mxu0 %v1092
        %1311 = vmatpush.msra.mxu0 %v1088
        %1312 = vmatpush.msra.mxu0 %v1084
        %1313 = vmatmul.f32.gmra.mxu0 %v890
        %v1314 = vpop.f32.mrf.mxu0
        %v1315 = vadd.f32 %v1295, %v1314
        %1316 = vdwg.mxu0
        %1317 = vmatpush.msra.mxu0 %v953
        %1318 = vmatpush.msra.mxu0 %v949
        %1319 = vmatpush.msra.mxu0 %v945
        %1320 = vmatpush.msra.mxu0 %v941
        %1321 = vmatpush.msra.mxu0 %v937
        %1322 = vmatpush.msra.mxu0 %v933
        %1323 = vmatpush.msra.mxu0 %v929
        %1324 = vmatpush.msra.mxu0 %v925
        %1325 = vmatpush.msra.mxu0 %v921
        %1326 = vmatpush.msra.mxu0 %v917
        %1327 = vmatpush.msra.mxu0 %v913
        %1328 = vmatpush.msra.mxu0 %v909
        %1329 = vmatpush.msra.mxu0 %v905
        %1330 = vmatpush.msra.mxu0 %v901
        %1331 = vmatpush.msra.mxu0 %v897
        %1332 = vmatpush.msra.mxu0 %v893
        %1333 = vmatmul.f32.gmra.mxu0 %v887
        %v1334 = vpop.f32.mrf.mxu0
        %v1335 = vadd.f32 %v1151, %v1334
        %1336 = vdwg.mxu0
        %1337 = vmatpush.msra.mxu0 %v1017
        %1338 = vmatpush.msra.mxu0 %v1013
        %1339 = vmatpush.msra.mxu0 %v1009
        %1340 = vmatpush.msra.mxu0 %v1005
        %1341 = vmatpush.msra.mxu0 %v1001
        %1342 = vmatpush.msra.mxu0 %v997
        %1343 = vmatpush.msra.mxu0 %v993
        %1344 = vmatpush.msra.mxu0 %v989
        %1345 = vmatpush.msra.mxu0 %v985
        %1346 = vmatpush.msra.mxu0 %v981
        %1347 = vmatpush.msra.mxu0 %v977
        %1348 = vmatpush.msra.mxu0 %v973
        %1349 = vmatpush.msra.mxu0 %v969
        %1350 = vmatpush.msra.mxu0 %v965
        %1351 = vmatpush.msra.mxu0 %v961
        %1352 = vmatpush.msra.mxu0 %v957
        %1353 = vmatmul.f32.gmra.mxu0 %v888
        %v1354 = vpop.f32.mrf.mxu0
        %v1355 = vadd.f32 %v1335, %v1354
        %1356 = vdwg.mxu0
        %1357 = vmatpush.msra.mxu0 %v1081
        %1358 = vmatpush.msra.mxu0 %v1077
        %1359 = vmatpush.msra.mxu0 %v1073
        %1360 = vmatpush.msra.mxu0 %v1069
        %1361 = vmatpush.msra.mxu0 %v1065
        %1362 = vmatpush.msra.mxu0 %v1061
        %1363 = vmatpush.msra.mxu0 %v1057
        %1364 = vmatpush.msra.mxu0 %v1053
        %1365 = vmatpush.msra.mxu0 %v1049
        %1366 = vmatpush.msra.mxu0 %v1045
        %1367 = vmatpush.msra.mxu0 %v1041
        %1368 = vmatpush.msra.mxu0 %v1037
        %1369 = vmatpush.msra.mxu0 %v1033
        %1370 = vmatpush.msra.mxu0 %v1029
        %1371 = vmatpush.msra.mxu0 %v1025
        %1372 = vmatpush.msra.mxu0 %v1021
        %1373 = vmatmul.f32.gmra.mxu0 %v889
        %v1374 = vpop.f32.mrf.mxu0
        %v1375 = vadd.f32 %v1355, %v1374
        %1376 = vdwg.mxu0
        %1377 = vmatpush.msra.mxu0 %v1145
        %1378 = vmatpush.msra.mxu0 %v1141
        %1379 = vmatpush.msra.mxu0 %v1137
        %1380 = vmatpush.msra.mxu0 %v1133
        %1381 = vmatpush.msra.mxu0 %v1129
        %1382 = vmatpush.msra.mxu0 %v1125
        %1383 = vmatpush.msra.mxu0 %v1121
        %1384 = vmatpush.msra.mxu0 %v1117
        %1385 = vmatpush.msra.mxu0 %v1113
        %1386 = vmatpush.msra.mxu0 %v1109
        %1387 = vmatpush.msra.mxu0 %v1105
        %1388 = vmatpush.msra.mxu0 %v1101
        %1389 = vmatpush.msra.mxu0 %v1097
        %1390 = vmatpush.msra.mxu0 %v1093
        %1391 = vmatpush.msra.mxu0 %v1089
        %1392 = vmatpush.msra.mxu0 %v1085
        %1393 = vmatmul.f32.gmra.mxu0 %v890
        %v1394 = vpop.f32.mrf.mxu0
        %v1395 = vadd.f32 %v1375, %v1394
        %1396 = vdwg.mxu0
        %1397 = vmatpush.msra.mxu0 %v954
        %1398 = vmatpush.msra.mxu0 %v950
        %1399 = vmatpush.msra.mxu0 %v946
        %1400 = vmatpush.msra.mxu0 %v942
        %1401 = vmatpush.msra.mxu0 %v938
        %1402 = vmatpush.msra.mxu0 %v934
        %1403 = vmatpush.msra.mxu0 %v930
        %1404 = vmatpush.msra.mxu0 %v926
        %1405 = vmatpush.msra.mxu0 %v922
        %1406 = vmatpush.msra.mxu0 %v918
        %1407 = vmatpush.msra.mxu0 %v914
        %1408 = vmatpush.msra.mxu0 %v910
        %1409 = vmatpush.msra.mxu0 %v906
        %1410 = vmatpush.msra.mxu0 %v902
        %1411 = vmatpush.msra.mxu0 %v898
        %1412 = vmatpush.msra.mxu0 %v894
        %1413 = vmatmul.f32.gmra.mxu0 %v887
        %v1414 = vpop.f32.mrf.mxu0
        %v1415 = vadd.f32 %v1152, %v1414
        %1416 = vdwg.mxu0
        %1417 = vmatpush.msra.mxu0 %v1018
        %1418 = vmatpush.msra.mxu0 %v1014
        %1419 = vmatpush.msra.mxu0 %v1010
        %1420 = vmatpush.msra.mxu0 %v1006
        %1421 = vmatpush.msra.mxu0 %v1002
        %1422 = vmatpush.msra.mxu0 %v998
        %1423 = vmatpush.msra.mxu0 %v994
        %1424 = vmatpush.msra.mxu0 %v990
        %1425 = vmatpush.msra.mxu0 %v986
        %1426 = vmatpush.msra.mxu0 %v982
        %1427 = vmatpush.msra.mxu0 %v978
        %1428 = vmatpush.msra.mxu0 %v974
        %1429 = vmatpush.msra.mxu0 %v970
        %1430 = vmatpush.msra.mxu0 %v966
        %1431 = vmatpush.msra.mxu0 %v962
        %1432 = vmatpush.msra.mxu0 %v958
        %1433 = vmatmul.f32.gmra.mxu0 %v888
        %v1434 = vpop.f32.mrf.mxu0
        %v1435 = vadd.f32 %v1415, %v1434
        %1436 = vdwg.mxu0
        %1437 = vmatpush.msra.mxu0 %v1082
        %1438 = vmatpush.msra.mxu0 %v1078
        %1439 = vmatpush.msra.mxu0 %v1074
        %1440 = vmatpush.msra.mxu0 %v1070
        %1441 = vmatpush.msra.mxu0 %v1066
        %1442 = vmatpush.msra.mxu0 %v1062
        %1443 = vmatpush.msra.mxu0 %v1058
        %1444 = vmatpush.msra.mxu0 %v1054
        %1445 = vmatpush.msra.mxu0 %v1050
        %1446 = vmatpush.msra.mxu0 %v1046
        %1447 = vmatpush.msra.mxu0 %v1042
        %1448 = vmatpush.msra.mxu0 %v1038
        %1449 = vmatpush.msra.mxu0 %v1034
        %1450 = vmatpush.msra.mxu0 %v1030
        %1451 = vmatpush.msra.mxu0 %v1026
        %1452 = vmatpush.msra.mxu0 %v1022
        %1453 = vmatmul.f32.gmra.mxu0 %v889
        %v1454 = vpop.f32.mrf.mxu0
        %v1455 = vadd.f32 %v1435, %v1454
        %1456 = vdwg.mxu0
        %1457 = vmatpush.msra.mxu0 %v1146
        %1458 = vmatpush.msra.mxu0 %v1142
        %1459 = vmatpush.msra.mxu0 %v1138
        %1460 = vmatpush.msra.mxu0 %v1134
        %1461 = vmatpush.msra.mxu0 %v1130
        %1462 = vmatpush.msra.mxu0 %v1126
        %1463 = vmatpush.msra.mxu0 %v1122
        %1464 = vmatpush.msra.mxu0 %v1118
        %1465 = vmatpush.msra.mxu0 %v1114
        %1466 = vmatpush.msra.mxu0 %v1110
        %1467 = vmatpush.msra.mxu0 %v1106
        %1468 = vmatpush.msra.mxu0 %v1102
        %1469 = vmatpush.msra.mxu0 %v1098
        %1470 = vmatpush.msra.mxu0 %v1094
        %1471 = vmatpush.msra.mxu0 %v1090
        %1472 = vmatpush.msra.mxu0 %v1086
        %1473 = vmatmul.f32.gmra.mxu0 %v890
        %v1474 = vpop.f32.mrf.mxu0
        %v1475 = vadd.f32 %v1455, %v1474
        %1476 = vdwg.mxu0
        %v1477 = vmax.f32 %v1235, 0.0
        %v1478 = vmax.f32 %v1315, 0.0
        %v1479 = vmax.f32 %v1395, 0.0
        %v1480 = vmax.f32 %v1475, 0.0
        %v1481 = vld [vmem:[#allocation11] sm:$0xff]
        %v1482 = vld [vmem:[#allocation11 + $0x8] sm:$0xff]
        %v1483 = vld [vmem:[#allocation11 + $0x10] sm:$0xff]
        %v1484 = vld [vmem:[#allocation11 + $0x18] sm:$0xff]
        %v1485 = vld [vmem:[#allocation11 + $0x20] sm:$0xff]
        %v1486 = vld [vmem:[#allocation11 + $0x28] sm:$0xff]
        %v1487 = vld [vmem:[#allocation11 + $0x30] sm:$0xff]
        %v1488 = vld [vmem:[#allocation11 + $0x38] sm:$0xff]
        %v1489 = vld [vmem:[#allocation11 + $0x40] sm:$0xff]
        %v1490 = vld [vmem:[#allocation11 + $0x48] sm:$0xff]
        %v1491 = vld [vmem:[#allocation11 + $0x50] sm:$0xff]
        %v1492 = vld [vmem:[#allocation11 + $0x58] sm:$0xff]
        %v1493 = vld [vmem:[#allocation11 + $0x60] sm:$0xff]
        %v1494 = vld [vmem:[#allocation11 + $0x68] sm:$0xff]
        %v1495 = vld [vmem:[#allocation11 + $0x70] sm:$0xff]
        %v1496 = vld [vmem:[#allocation11 + $0x78] sm:$0xff]
        %v1497 = vld [vmem:[#allocation11 + $0x80] sm:$0xff]
        %v1498 = vld [vmem:[#allocation11 + $0x88] sm:$0xff]
        %v1499 = vld [vmem:[#allocation11 + $0x90] sm:$0xff]
        %v1500 = vld [vmem:[#allocation11 + $0x98] sm:$0xff]
        %v1501 = vld [vmem:[#allocation11 + $0xa0] sm:$0xff]
        %v1502 = vld [vmem:[#allocation11 + $0xa8] sm:$0xff]
        %v1503 = vld [vmem:[#allocation11 + $0xb0] sm:$0xff]
        %v1504 = vld [vmem:[#allocation11 + $0xb8] sm:$0xff]
        %v1505 = vld [vmem:[#allocation11 + $0xc0] sm:$0xff]
        %v1506 = vld [vmem:[#allocation11 + $0xc8] sm:$0xff]
        %v1507 = vld [vmem:[#allocation11 + $0xd0] sm:$0xff]
        %v1508 = vld [vmem:[#allocation11 + $0xd8] sm:$0xff]
        %v1509 = vld [vmem:[#allocation11 + $0xe0] sm:$0xff]
        %v1510 = vld [vmem:[#allocation11 + $0xe8] sm:$0xff]
        %v1511 = vld [vmem:[#allocation11 + $0xf0] sm:$0xff]
        %v1512 = vld [vmem:[#allocation11 + $0xf8] sm:$0xff]
        %v1513 = vld [vmem:[#allocation11 + $0x100] sm:$0xff]
        %v1514 = vld [vmem:[#allocation11 + $0x108] sm:$0xff]
        %v1515 = vld [vmem:[#allocation11 + $0x110] sm:$0xff]
        %v1516 = vld [vmem:[#allocation11 + $0x118] sm:$0xff]
        %v1517 = vld [vmem:[#allocation11 + $0x120] sm:$0xff]
        %v1518 = vld [vmem:[#allocation11 + $0x128] sm:$0xff]
        %v1519 = vld [vmem:[#allocation11 + $0x130] sm:$0xff]
        %v1520 = vld [vmem:[#allocation11 + $0x138] sm:$0xff]
        %v1521 = vld [vmem:[#allocation11 + $0x140] sm:$0xff]
        %v1522 = vld [vmem:[#allocation11 + $0x148] sm:$0xff]
        %v1523 = vld [vmem:[#allocation11 + $0x150] sm:$0xff]
        %v1524 = vld [vmem:[#allocation11 + $0x158] sm:$0xff]
        %v1525 = vld [vmem:[#allocation11 + $0x160] sm:$0xff]
        %v1526 = vld [vmem:[#allocation11 + $0x168] sm:$0xff]
        %v1527 = vld [vmem:[#allocation11 + $0x170] sm:$0xff]
        %v1528 = vld [vmem:[#allocation11 + $0x178] sm:$0xff]
        %v1529 = vld [vmem:[#allocation11 + $0x180] sm:$0xff]
        %v1530 = vld [vmem:[#allocation11 + $0x188] sm:$0xff]
        %v1531 = vld [vmem:[#allocation11 + $0x190] sm:$0xff]
        %v1532 = vld [vmem:[#allocation11 + $0x198] sm:$0xff]
        %v1533 = vld [vmem:[#allocation11 + $0x1a0] sm:$0xff]
        %v1534 = vld [vmem:[#allocation11 + $0x1a8] sm:$0xff]
        %v1535 = vld [vmem:[#allocation11 + $0x1b0] sm:$0xff]
        %v1536 = vld [vmem:[#allocation11 + $0x1b8] sm:$0xff]
        %v1537 = vld [vmem:[#allocation11 + $0x1c0] sm:$0xff]
        %v1538 = vld [vmem:[#allocation11 + $0x1c8] sm:$0xff]
        %v1539 = vld [vmem:[#allocation11 + $0x1d0] sm:$0xff]
        %v1540 = vld [vmem:[#allocation11 + $0x1d8] sm:$0xff]
        %v1541 = vld [vmem:[#allocation11 + $0x1e0] sm:$0xff]
        %v1542 = vld [vmem:[#allocation11 + $0x1e8] sm:$0xff]
        %v1543 = vld [vmem:[#allocation11 + $0x1f0] sm:$0xff]
        %v1544 = vld [vmem:[#allocation11 + $0x1f8] sm:$0xff]
        %v1545 = vld [vmem:[#allocation11 + $0x200] sm:$0xff]
        %v1546 = vld [vmem:[#allocation11 + $0x208] sm:$0xff]
        %v1547 = vld [vmem:[#allocation11 + $0x210] sm:$0xff]
        %v1548 = vld [vmem:[#allocation11 + $0x218] sm:$0xff]
        %v1549 = vld [vmem:[#allocation11 + $0x220] sm:$0xff]
        %v1550 = vld [vmem:[#allocation11 + $0x228] sm:$0xff]
        %v1551 = vld [vmem:[#allocation11 + $0x230] sm:$0xff]
        %v1552 = vld [vmem:[#allocation11 + $0x238] sm:$0xff]
        %v1553 = vld [vmem:[#allocation11 + $0x240] sm:$0xff]
        %v1554 = vld [vmem:[#allocation11 + $0x248] sm:$0xff]
        %v1555 = vld [vmem:[#allocation11 + $0x250] sm:$0xff]
        %v1556 = vld [vmem:[#allocation11 + $0x258] sm:$0xff]
        %v1557 = vld [vmem:[#allocation11 + $0x260] sm:$0xff]
        %v1558 = vld [vmem:[#allocation11 + $0x268] sm:$0xff]
        %v1559 = vld [vmem:[#allocation11 + $0x270] sm:$0xff]
        %v1560 = vld [vmem:[#allocation11 + $0x278] sm:$0xff]
        %v1561 = vld [vmem:[#allocation11 + $0x280] sm:$0xff]
        %v1562 = vld [vmem:[#allocation11 + $0x288] sm:$0xff]
        %v1563 = vld [vmem:[#allocation11 + $0x290] sm:$0xff]
        %v1564 = vld [vmem:[#allocation11 + $0x298] sm:$0xff]
        %v1565 = vld [vmem:[#allocation11 + $0x2a0] sm:$0xff]
        %v1566 = vld [vmem:[#allocation11 + $0x2a8] sm:$0xff]
        %v1567 = vld [vmem:[#allocation11 + $0x2b0] sm:$0xff]
        %v1568 = vld [vmem:[#allocation11 + $0x2b8] sm:$0xff]
        %v1569 = vld [vmem:[#allocation11 + $0x2c0] sm:$0xff]
        %v1570 = vld [vmem:[#allocation11 + $0x2c8] sm:$0xff]
        %v1571 = vld [vmem:[#allocation11 + $0x2d0] sm:$0xff]
        %v1572 = vld [vmem:[#allocation11 + $0x2d8] sm:$0xff]
        %v1573 = vld [vmem:[#allocation11 + $0x2e0] sm:$0xff]
        %v1574 = vld [vmem:[#allocation11 + $0x2e8] sm:$0xff]
        %v1575 = vld [vmem:[#allocation11 + $0x2f0] sm:$0xff]
        %v1576 = vld [vmem:[#allocation11 + $0x2f8] sm:$0xff]
        %v1577 = vld [vmem:[#allocation11 + $0x300] sm:$0xff]
        %v1578 = vld [vmem:[#allocation11 + $0x308] sm:$0xff]
        %v1579 = vld [vmem:[#allocation11 + $0x310] sm:$0xff]
        %v1580 = vld [vmem:[#allocation11 + $0x318] sm:$0xff]
        %v1581 = vld [vmem:[#allocation11 + $0x320] sm:$0xff]
        %v1582 = vld [vmem:[#allocation11 + $0x328] sm:$0xff]
        %v1583 = vld [vmem:[#allocation11 + $0x330] sm:$0xff]
        %v1584 = vld [vmem:[#allocation11 + $0x338] sm:$0xff]
        %v1585 = vld [vmem:[#allocation11 + $0x340] sm:$0xff]
        %v1586 = vld [vmem:[#allocation11 + $0x348] sm:$0xff]
        %v1587 = vld [vmem:[#allocation11 + $0x350] sm:$0xff]
        %v1588 = vld [vmem:[#allocation11 + $0x358] sm:$0xff]
        %v1589 = vld [vmem:[#allocation11 + $0x360] sm:$0xff]
        %v1590 = vld [vmem:[#allocation11 + $0x368] sm:$0xff]
        %v1591 = vld [vmem:[#allocation11 + $0x370] sm:$0xff]
        %v1592 = vld [vmem:[#allocation11 + $0x378] sm:$0xff]
        %v1593 = vld [vmem:[#allocation11 + $0x380] sm:$0xff]
        %v1594 = vld [vmem:[#allocation11 + $0x388] sm:$0xff]
        %v1595 = vld [vmem:[#allocation11 + $0x390] sm:$0xff]
        %v1596 = vld [vmem:[#allocation11 + $0x398] sm:$0xff]
        %v1597 = vld [vmem:[#allocation11 + $0x3a0] sm:$0xff]
        %v1598 = vld [vmem:[#allocation11 + $0x3a8] sm:$0xff]
        %v1599 = vld [vmem:[#allocation11 + $0x3b0] sm:$0xff]
        %v1600 = vld [vmem:[#allocation11 + $0x3b8] sm:$0xff]
        %v1601 = vld [vmem:[#allocation11 + $0x3c0] sm:$0xff]
        %v1602 = vld [vmem:[#allocation11 + $0x3c8] sm:$0xff]
        %v1603 = vld [vmem:[#allocation11 + $0x3d0] sm:$0xff]
        %v1604 = vld [vmem:[#allocation11 + $0x3d8] sm:$0xff]
        %v1605 = vld [vmem:[#allocation11 + $0x3e0] sm:$0xff]
        %v1606 = vld [vmem:[#allocation11 + $0x3e8] sm:$0xff]
        %v1607 = vld [vmem:[#allocation11 + $0x3f0] sm:$0xff]
        %v1608 = vld [vmem:[#allocation11 + $0x3f8] sm:$0xff]
        %v1609 = vld [vmem:[%s6] sm:$0x3]
        %v1611 = vperm.slane %v1609, 0
        %v1612 = vperm.slane %v1609, 1
        %1615 = vmatpush.msra.mxu0 %v1511
        %1616 = vmatpush.msra.mxu0 %v1509
        %1617 = vmatpush.msra.mxu0 %v1507
        %1618 = vmatpush.msra.mxu0 %v1505
        %1619 = vmatpush.msra.mxu0 %v1503
        %1620 = vmatpush.msra.mxu0 %v1501
        %1621 = vmatpush.msra.mxu0 %v1499
        %1622 = vmatpush.msra.mxu0 %v1497
        %1623 = vmatpush.msra.mxu0 %v1495
        %1624 = vmatpush.msra.mxu0 %v1493
        %1625 = vmatpush.msra.mxu0 %v1491
        %1626 = vmatpush.msra.mxu0 %v1489
        %1627 = vmatpush.msra.mxu0 %v1487
        %1628 = vmatpush.msra.mxu0 %v1485
        %1629 = vmatpush.msra.mxu0 %v1483
        %1630 = vmatpush.msra.mxu0 %v1481
        %1631 = vmatmul.f32.gmra.mxu0 %v1477
        %v1632 = vpop.f32.mrf.mxu0
        %v1633 = vadd.f32 %v1611, %v1632
        %1634 = vdwg.mxu0
        %1635 = vmatpush.msra.mxu0 %v1543
        %1636 = vmatpush.msra.mxu0 %v1541
        %1637 = vmatpush.msra.mxu0 %v1539
        %1638 = vmatpush.msra.mxu0 %v1537
        %1639 = vmatpush.msra.mxu0 %v1535
        %1640 = vmatpush.msra.mxu0 %v1533
        %1641 = vmatpush.msra.mxu0 %v1531
        %1642 = vmatpush.msra.mxu0 %v1529
        %1643 = vmatpush.msra.mxu0 %v1527
        %1644 = vmatpush.msra.mxu0 %v1525
        %1645 = vmatpush.msra.mxu0 %v1523
        %1646 = vmatpush.msra.mxu0 %v1521
        %1647 = vmatpush.msra.mxu0 %v1519
        %1648 = vmatpush.msra.mxu0 %v1517
        %1649 = vmatpush.msra.mxu0 %v1515
        %1650 = vmatpush.msra.mxu0 %v1513
        %1651 = vmatmul.f32.gmra.mxu0 %v1478
        %v1652 = vpop.f32.mrf.mxu0
        %v1653 = vadd.f32 %v1633, %v1652
        %1654 = vdwg.mxu0
        %1655 = vmatpush.msra.mxu0 %v1575
        %1656 = vmatpush.msra.mxu0 %v1573
        %1657 = vmatpush.msra.mxu0 %v1571
        %1658 = vmatpush.msra.mxu0 %v1569
        %1659 = vmatpush.msra.mxu0 %v1567
        %1660 = vmatpush.msra.mxu0 %v1565
        %1661 = vmatpush.msra.mxu0 %v1563
        %1662 = vmatpush.msra.mxu0 %v1561
        %1663 = vmatpush.msra.mxu0 %v1559
        %1664 = vmatpush.msra.mxu0 %v1557
        %1665 = vmatpush.msra.mxu0 %v1555
        %1666 = vmatpush.msra.mxu0 %v1553
        %1667 = vmatpush.msra.mxu0 %v1551
        %1668 = vmatpush.msra.mxu0 %v1549
        %1669 = vmatpush.msra.mxu0 %v1547
        %1670 = vmatpush.msra.mxu0 %v1545
        %1671 = vmatmul.f32.gmra.mxu0 %v1479
        %v1672 = vpop.f32.mrf.mxu0
        %v1673 = vadd.f32 %v1653, %v1672
        %1674 = vdwg.mxu0
        %1675 = vmatpush.msra.mxu0 %v1607
        %1676 = vmatpush.msra.mxu0 %v1605
        %1677 = vmatpush.msra.mxu0 %v1603
        %1678 = vmatpush.msra.mxu0 %v1601
        %1679 = vmatpush.msra.mxu0 %v1599
        %1680 = vmatpush.msra.mxu0 %v1597
        %1681 = vmatpush.msra.mxu0 %v1595
        %1682 = vmatpush.msra.mxu0 %v1593
        %1683 = vmatpush.msra.mxu0 %v1591
        %1684 = vmatpush.msra.mxu0 %v1589
        %1685 = vmatpush.msra.mxu0 %v1587
        %1686 = vmatpush.msra.mxu0 %v1585
        %1687 = vmatpush.msra.mxu0 %v1583
        %1688 = vmatpush.msra.mxu0 %v1581
        %1689 = vmatpush.msra.mxu0 %v1579
        %1690 = vmatpush.msra.mxu0 %v1577
        %1691 = vmatmul.f32.gmra.mxu0 %v1480
        %v1692 = vpop.f32.mrf.mxu0
        %v1693 = vadd.f32 %v1673, %v1692
        %1694 = vdwg.mxu0
        %1695 = vmatpush.msra.mxu0 %v1512
        %1696 = vmatpush.msra.mxu0 %v1510
        %1697 = vmatpush.msra.mxu0 %v1508
        %1698 = vmatpush.msra.mxu0 %v1506
        %1699 = vmatpush.msra.mxu0 %v1504
        %1700 = vmatpush.msra.mxu0 %v1502
        %1701 = vmatpush.msra.mxu0 %v1500
        %1702 = vmatpush.msra.mxu0 %v1498
        %1703 = vmatpush.msra.mxu0 %v1496
        %1704 = vmatpush.msra.mxu0 %v1494
        %1705 = vmatpush.msra.mxu0 %v1492
        %1706 = vmatpush.msra.mxu0 %v1490
        %1707 = vmatpush.msra.mxu0 %v1488
        %1708 = vmatpush.msra.mxu0 %v1486
        %1709 = vmatpush.msra.mxu0 %v1484
        %1710 = vmatpush.msra.mxu0 %v1482
        %1711 = vmatmul.f32.gmra.mxu0 %v1477
        %v1712 = vpop.f32.mrf.mxu0
        %v1713 = vadd.f32 %v1612, %v1712
        %1714 = vdwg.mxu0
        %1715 = vmatpush.msra.mxu0 %v1544
        %1716 = vmatpush.msra.mxu0 %v1542
        %1717 = vmatpush.msra.mxu0 %v1540
        %1718 = vmatpush.msra.mxu0 %v1538
        %1719 = vmatpush.msra.mxu0 %v1536
        %1720 = vmatpush.msra.mxu0 %v1534
        %1721 = vmatpush.msra.mxu0 %v1532
        %1722 = vmatpush.msra.mxu0 %v1530
        %1723 = vmatpush.msra.mxu0 %v1528
        %1724 = vmatpush.msra.mxu0 %v1526
        %1725 = vmatpush.msra.mxu0 %v1524
        %1726 = vmatpush.msra.mxu0 %v1522
        %1727 = vmatpush.msra.mxu0 %v1520
        %1728 = vmatpush.msra.mxu0 %v1518
        %1729 = vmatpush.msra.mxu0 %v1516
        %1730 = vmatpush.msra.mxu0 %v1514
        %1731 = vmatmul.f32.gmra.mxu0 %v1478
        %v1732 = vpop.f32.mrf.mxu0
        %v1733 = vadd.f32 %v1713, %v1732
        %1734 = vdwg.mxu0
        %1735 = vmatpush.msra.mxu0 %v1576
        %1736 = vmatpush.msra.mxu0 %v1574
        %1737 = vmatpush.msra.mxu0 %v1572
        %1738 = vmatpush.msra.mxu0 %v1570
        %1739 = vmatpush.msra.mxu0 %v1568
        %1740 = vmatpush.msra.mxu0 %v1566
        %1741 = vmatpush.msra.mxu0 %v1564
        %1742 = vmatpush.msra.mxu0 %v1562
        %1743 = vmatpush.msra.mxu0 %v1560
        %1744 = vmatpush.msra.mxu0 %v1558
        %1745 = vmatpush.msra.mxu0 %v1556
        %1746 = vmatpush.msra.mxu0 %v1554
        %1747 = vmatpush.msra.mxu0 %v1552
        %1748 = vmatpush.msra.mxu0 %v1550
        %1749 = vmatpush.msra.mxu0 %v1548
        %1750 = vmatpush.msra.mxu0 %v1546
        %1751 = vmatmul.f32.gmra.mxu0 %v1479
        %v1752 = vpop.f32.mrf.mxu0
        %v1753 = vadd.f32 %v1733, %v1752
        %1754 = vdwg.mxu0
        %1755 = vmatpush.msra.mxu0 %v1608
        %1756 = vmatpush.msra.mxu0 %v1606
        %1757 = vmatpush.msra.mxu0 %v1604
        %1758 = vmatpush.msra.mxu0 %v1602
        %1759 = vmatpush.msra.mxu0 %v1600
        %1760 = vmatpush.msra.mxu0 %v1598
        %1761 = vmatpush.msra.mxu0 %v1596
        %1762 = vmatpush.msra.mxu0 %v1594
        %1763 = vmatpush.msra.mxu0 %v1592
        %1764 = vmatpush.msra.mxu0 %v1590
        %1765 = vmatpush.msra.mxu0 %v1588
        %1766 = vmatpush.msra.mxu0 %v1586
        %1767 = vmatpush.msra.mxu0 %v1584
        %1768 = vmatpush.msra.mxu0 %v1582
        %1769 = vmatpush.msra.mxu0 %v1580
        %1770 = vmatpush.msra.mxu0 %v1578
        %1771 = vmatmul.f32.gmra.mxu0 %v1480
        %v1772 = vpop.f32.mrf.mxu0
        %v1773 = vadd.f32 %v1753, %v1772
        %1774 = vdwg.mxu0
        %v1775 = vsub.f32 0.0, %v1693
        %v1776 = vsub.f32 0.0, %v1773
        %v1777 = vmul.f32 %v1775, 1.442695
        %v1778 = vpow.pop %v1777
        %v1779 = vmul.f32 %v1776, 1.442695
        %v1780 = vpow.pop %v1779
        %v1781 = vadd.f32 %v1778, 1.0
        %v1782 = vadd.f32 %v1780, 1.0
        %v1783 = vrcp.pop %v1781
        %v1784 = vmul.f32 %v1781, %v1783
        %v1785 = vsub.f32 1.0, %v1784
        %v1786 = vmul.f32 %v1783, %v1785
        %v1787 = vadd.f32 %v1783, %v1786
        %vm1788 = vweird.f32 %v1781
        %vm1789 = vweird.f32 %v1783
        %vm1790 = vmor %vm1788, %vm1789
        %v1791 = vsel %vm1790, %v1783, %v1787
        %v1792 = vand.u32 2147483647, %v1781
        %vm1793 = vcmp.eq.f32.partialorder %v1792, 8.507059e+37
        %v1794 = vand.u32 %v1781, 2147483648
        %v1795 = vor.u32 1.1754944e-38, %v1794
        %v1796 = vsel %vm1793, %v1795, %v1791
        %v1797 = vmul.f32 1.0, %v1796
        %v1798 = vrcp.pop %v1782
        %v1799 = vmul.f32 %v1782, %v1798
        %v1800 = vsub.f32 1.0, %v1799
        %v1801 = vmul.f32 %v1798, %v1800
        %v1802 = vadd.f32 %v1798, %v1801
        %vm1803 = vweird.f32 %v1782
        %vm1804 = vweird.f32 %v1798
        %vm1805 = vmor %vm1803, %vm1804
        %v1806 = vsel %vm1805, %v1798, %v1802
        %v1807 = vand.u32 2147483647, %v1782
        %vm1808 = vcmp.eq.f32.partialorder %v1807, 8.507059e+37
        %v1809 = vand.u32 %v1782, 2147483648
        %v1810 = vor.u32 1.1754944e-38, %v1809
        %v1811 = vsel %vm1808, %v1810, %v1806
        %v1812 = vmul.f32 1.0, %v1811
        %v1813 = vadd.f32 %v1797, %v587
        %v1814 = vadd.f32 %v1812, %v588
        %v1815 = vld [vmem:[#allocation13] sm:$0xff]
        %v1816 = vld [vmem:[#allocation13 + $0x8] sm:$0xff]
        %v1817 = vld [vmem:[#allocation13 + $0x10] sm:$0xff]
        %v1818 = vld [vmem:[#allocation13 + $0x18] sm:$0xff]
        %v1819 = vld [vmem:[#allocation13 + $0x20] sm:$0xff]
        %v1820 = vld [vmem:[#allocation13 + $0x28] sm:$0xff]
        %v1821 = vld [vmem:[#allocation13 + $0x30] sm:$0xff]
        %v1822 = vld [vmem:[#allocation13 + $0x38] sm:$0xff]
        %v1823 = vld [vmem:[#allocation13 + $0x40] sm:$0xff]
        %v1824 = vld [vmem:[#allocation13 + $0x48] sm:$0xff]
        %v1825 = vld [vmem:[#allocation13 + $0x50] sm:$0xff]
        %v1826 = vld [vmem:[#allocation13 + $0x58] sm:$0xff]
        %v1827 = vld [vmem:[#allocation13 + $0x60] sm:$0xff]
        %v1828 = vld [vmem:[#allocation13 + $0x68] sm:$0xff]
        %v1829 = vld [vmem:[#allocation13 + $0x70] sm:$0xff]
        %v1830 = vld [vmem:[#allocation13 + $0x78] sm:$0xff]
        %v1831 = vld [vmem:[#allocation13 + $0x80] sm:$0xff]
        %v1832 = vld [vmem:[#allocation13 + $0x88] sm:$0xff]
        %v1833 = vld [vmem:[#allocation13 + $0x90] sm:$0xff]
        %v1834 = vld [vmem:[#allocation13 + $0x98] sm:$0xff]
        %v1835 = vld [vmem:[#allocation13 + $0xa0] sm:$0xff]
        %v1836 = vld [vmem:[#allocation13 + $0xa8] sm:$0xff]
        %v1837 = vld [vmem:[#allocation13 + $0xb0] sm:$0xff]
        %v1838 = vld [vmem:[#allocation13 + $0xb8] sm:$0xff]
        %v1839 = vld [vmem:[#allocation13 + $0xc0] sm:$0xff]
        %v1840 = vld [vmem:[#allocation13 + $0xc8] sm:$0xff]
        %v1841 = vld [vmem:[#allocation13 + $0xd0] sm:$0xff]
        %v1842 = vld [vmem:[#allocation13 + $0xd8] sm:$0xff]
        %v1843 = vld [vmem:[#allocation13 + $0xe0] sm:$0xff]
        %v1844 = vld [vmem:[#allocation13 + $0xe8] sm:$0xff]
        %v1845 = vld [vmem:[#allocation13 + $0xf0] sm:$0xff]
        %v1846 = vld [vmem:[#allocation13 + $0xf8] sm:$0xff]
        %v1847 = vld [vmem:[%s8] sm:$0x1]
        %v1849 = vperm.slane %v1847, 0
        %1851 = vmatpush.msra.mxu0 %v1830
        %1852 = vmatpush.msra.mxu0 %v1829
        %1853 = vmatpush.msra.mxu0 %v1828
        %1854 = vmatpush.msra.mxu0 %v1827
        %1855 = vmatpush.msra.mxu0 %v1826
        %1856 = vmatpush.msra.mxu0 %v1825
        %1857 = vmatpush.msra.mxu0 %v1824
        %1858 = vmatpush.msra.mxu0 %v1823
        %1859 = vmatpush.msra.mxu0 %v1822
        %1860 = vmatpush.msra.mxu0 %v1821
        %1861 = vmatpush.msra.mxu0 %v1820
        %1862 = vmatpush.msra.mxu0 %v1819
        %1863 = vmatpush.msra.mxu0 %v1818
        %1864 = vmatpush.msra.mxu0 %v1817
        %1865 = vmatpush.msra.mxu0 %v1816
        %1866 = vmatpush.msra.mxu0 %v1815
        %1867 = vmatmul.f32.gmra.mxu0 %v1813
        %v1868 = vpop.f32.mrf.mxu0
        %v1869 = vadd.f32 %v1849, %v1868
        %1870 = vdwg.mxu0
        %1871 = vmatpush.msra.mxu0 %v1846
        %1872 = vmatpush.msra.mxu0 %v1845
        %1873 = vmatpush.msra.mxu0 %v1844
        %1874 = vmatpush.msra.mxu0 %v1843
        %1875 = vmatpush.msra.mxu0 %v1842
        %1876 = vmatpush.msra.mxu0 %v1841
        %1877 = vmatpush.msra.mxu0 %v1840
        %1878 = vmatpush.msra.mxu0 %v1839
        %1879 = vmatpush.msra.mxu0 %v1838
        %1880 = vmatpush.msra.mxu0 %v1837
        %1881 = vmatpush.msra.mxu0 %v1836
        %1882 = vmatpush.msra.mxu0 %v1835
        %1883 = vmatpush.msra.mxu0 %v1834
        %1884 = vmatpush.msra.mxu0 %v1833
        %1885 = vmatpush.msra.mxu0 %v1832
        %1886 = vmatpush.msra.mxu0 %v1831
        %1887 = vmatmul.f32.gmra.mxu0 %v1814
        %v1888 = vpop.f32.mrf.mxu0
        %v1889 = vadd.f32 %v1869, %v1888
        %1890 = vdwg.mxu0
        %v1891 = vmax.f32 %v1889, 0.0
        %v1892 = vld [vmem:[#allocation14] sm:$0xff]
        %v1893 = vld [vmem:[#allocation14 + $0x8] sm:$0xff]
        %v1894 = vld [vmem:[#allocation14 + $0x10] sm:$0xff]
        %v1895 = vld [vmem:[#allocation14 + $0x18] sm:$0xff]
        %v1896 = vld [vmem:[#allocation14 + $0x20] sm:$0xff]
        %v1897 = vld [vmem:[#allocation14 + $0x28] sm:$0xff]
        %v1898 = vld [vmem:[#allocation14 + $0x30] sm:$0xff]
        %v1899 = vld [vmem:[#allocation14 + $0x38] sm:$0xff]
        %v1900 = vld [vmem:[#allocation14 + $0x40] sm:$0xff]
        %v1901 = vld [vmem:[#allocation14 + $0x48] sm:$0xff]
        %v1902 = vld [vmem:[#allocation14 + $0x50] sm:$0xff]
        %v1903 = vld [vmem:[#allocation14 + $0x58] sm:$0xff]
        %v1904 = vld [vmem:[#allocation14 + $0x60] sm:$0xff]
        %v1905 = vld [vmem:[#allocation14 + $0x68] sm:$0xff]
        %v1906 = vld [vmem:[#allocation14 + $0x70] sm:$0xff]
        %v1907 = vld [vmem:[#allocation14 + $0x78] sm:$0xff]
        %v1908 = vld [vmem:[%s10] sm:$0x1]
        %v1910 = vperm.slane %v1908, 0
        %1912 = vmatpush.msra.mxu0 %v1907
        %1913 = vmatpush.msra.mxu0 %v1906
        %1914 = vmatpush.msra.mxu0 %v1905
        %1915 = vmatpush.msra.mxu0 %v1904
        %1916 = vmatpush.msra.mxu0 %v1903
        %1917 = vmatpush.msra.mxu0 %v1902
        %1918 = vmatpush.msra.mxu0 %v1901
        %1919 = vmatpush.msra.mxu0 %v1900
        %1920 = vmatpush.msra.mxu0 %v1899
        %1921 = vmatpush.msra.mxu0 %v1898
        %1922 = vmatpush.msra.mxu0 %v1897
        %1923 = vmatpush.msra.mxu0 %v1896
        %1924 = vmatpush.msra.mxu0 %v1895
        %1925 = vmatpush.msra.mxu0 %v1894
        %1926 = vmatpush.msra.mxu0 %v1893
        %1927 = vmatpush.msra.mxu0 %v1892
        %1928 = vmatmul.f32.gmra.mxu0 %v1891
        %v1929 = vpop.f32.mrf.mxu0
        %v1930 = vadd.f32 %v1910, %v1929
        %1931 = vdwg.mxu0
        %v1932 = vmax.f32 %v1930, 0.0
        %v1933 = vld [vmem:[#allocation16] sm:$0xff]
        %v1934 = vld [vmem:[#allocation16 + $0x8] sm:$0xff]
        %v1935 = vld [vmem:[#allocation16 + $0x10] sm:$0xff]
        %v1936 = vld [vmem:[#allocation16 + $0x18] sm:$0xff]
        %v1937 = vld [vmem:[#allocation16 + $0x20] sm:$0xff]
        %v1938 = vld [vmem:[#allocation16 + $0x28] sm:$0xff]
        %v1939 = vld [vmem:[#allocation16 + $0x30] sm:$0xff]
        %v1940 = vld [vmem:[#allocation16 + $0x38] sm:$0xff]
        %v1941 = vld [vmem:[#allocation16 + $0x40] sm:$0xff]
        %v1942 = vld [vmem:[#allocation16 + $0x48] sm:$0xff]
        %v1943 = vld [vmem:[#allocation16 + $0x50] sm:$0xff]
        %v1944 = vld [vmem:[#allocation16 + $0x58] sm:$0xff]
        %v1945 = vld [vmem:[#allocation16 + $0x60] sm:$0xff]
        %v1946 = vld [vmem:[#allocation16 + $0x68] sm:$0xff]
        %v1947 = vld [vmem:[#allocation16 + $0x70] sm:$0xff]
        %v1948 = vld [vmem:[#allocation16 + $0x78] sm:$0xff]
        %v1949 = vld [vmem:[%s12] sm:$0x1]
        %v1951 = vperm.slane %v1949, 0
        %1953 = vmatpush.msra.mxu0 %v1948
        %1954 = vmatpush.msra.mxu0 %v1947
        %1955 = vmatpush.msra.mxu0 %v1946
        %1956 = vmatpush.msra.mxu0 %v1945
        %1957 = vmatpush.msra.mxu0 %v1944
        %1958 = vmatpush.msra.mxu0 %v1943
        %1959 = vmatpush.msra.mxu0 %v1942
        %1960 = vmatpush.msra.mxu0 %v1941
        %1961 = vmatpush.msra.mxu0 %v1940
        %1962 = vmatpush.msra.mxu0 %v1939
        %1963 = vmatpush.msra.mxu0 %v1938
        %1964 = vmatpush.msra.mxu0 %v1937
        %1965 = vmatpush.msra.mxu0 %v1936
        %1966 = vmatpush.msra.mxu0 %v1935
        %1967 = vmatpush.msra.mxu0 %v1934
        %1968 = vmatpush.msra.mxu0 %v1933
        %1969 = vmatmul.f32.gmra.mxu0 %v1932
        %v1970 = vpop.f32.mrf.mxu0
        %v1971 = vadd.f32 %v1951, %v1970
        %1972 = vdwg.mxu0
        %v1973 = vmul.f32 %v1971, %v1971
        %1974 = vadd.xlane.f32.xlu0 %v1973
        %v1975 = vpop.xlane.xlu0 %1974
        %v1976 = vrsqrt.pop %v1975
        %v1977 = vmul.f32 %v1976, %v1975
        %v1978 = vmul.f32 %v1977, %v1976
        %v1979 = vmul.f32 0.5, %v1978
        %v1980 = vsub.f32 1.5, %v1979
        %v1981 = vmul.f32 %v1976, %v1980
        %vm1982 = vweird.f32 %v1975
        %vm1983 = vweird.f32 %v1976
        %vm1984 = vmor %vm1982, %vm1983
        %v1985 = vsel %vm1984, %v1976, %v1981
        %v1986 = vmul.f32 %v1971, %v1985
        %1987 = vst [vmem:[%s586] sm:$0xff] %v1986
        %s1988 = sand.u32 %s320, 1
        %s1989 = scalar_lea.sflag [#allocation4], %s1988
        %s1990 = sand.u32 %s320, 1
        %s1991 = smul.addr %s1990, 8
        %s1992 = scalar_lea.vmem [#allocation17], %s1991
        // Predicated region
        $region109: #{_vistoatt_pallas.1} parent=71 // pred_check
          %p1993 = pneg %p330
        $region110: #{_vistoatt_pallas.1} parent=71 // pred_check_branch
          %1995 = sbr.rel (%p1993) target = $region112
        $region111: #{_vistoatt_pallas.1} parent=71 // pred_region
          %1997 = vsyncadd %s1989, 0
          %s1998 = smul.addr %s34, 8
          %s1999 = scalar_lea.hbm %s13, %s1998
          %s2001 = sshll.u32 %s1992, 4
          %s2002 = int_to_ptr.vmem [resolvable:$true] %s2001
          %s2003 = sshll.u32 %s1999, 4
          %s2004 = int_to_ptr.hbm [resolvable:$true] %s2003
          %2006 = dma.vmem_to_hbm [thread:$0]  %s2002, 128, %s2004, %s1989
        $region112: #{_vistoatt_pallas.1} parent=71 // pred_fallthru
          _
      $region72: #{_vistoatt_pallas.1} parent=5 // pred_fallthru
        _
      %p2007 = scmp.le.s32.totalorder 2, %s29
      // Predicated region
      $region113: #{_vistoatt_pallas.1} parent=5 // pred_check
        %p2008 = pneg %p2007
      $region114: #{_vistoatt_pallas.1} parent=5 // pred_check_branch
        %2010 = sbr.rel (%p2008) target = $region116
      $region115: #{_vistoatt_pallas.1} parent=5 // pred_region
        %s2011 = ssub.s32 %s29, 2
        // Predicated region
        $region117: #{_vistoatt_pallas.1} parent=115 // pred_check
          %p2012 = pneg %p336
        $region118: #{_vistoatt_pallas.1} parent=115 // pred_check_branch
          %2014 = sbr.rel (%p2012) target = $region120
        $region119: #{_vistoatt_pallas.1} parent=115 // pred_region
          %s2015 = sand.u32 %s321, 1
          %s2016 = scalar_lea.sflag [#allocation4], %s2015
          %s2017 = sand.u32 %s321, 1
          %s2018 = smul.addr %s2017, 8
          %s2019 = scalar_lea.vmem [#allocation17], %s2018
          %2021 = dma.done %s2016, 128
        $region120: #{_vistoatt_pallas.1} parent=115 // pred_fallthru
          _
      $region116: #{_vistoatt_pallas.1} parent=5 // pred_fallthru
        _
    $region6: #{_vistoatt_pallas.1} parent=1 // loop_footer
      %s33 = sadd.s32 1, %s29
    $region7: #{_vistoatt_pallas.1} parent=1 // loop_footer_branch
      %28 = sbr.rel target = $region3
    $region8: #{_vistoatt_pallas.1} parent=1 // loop_exit
      _
    %2022 = vsyncpa [#allocation3], 1
    %s2023 = scalar_lea.sflag [#allocation3], 1
    %2024 = vsyncpa %s2023, 1
    %2025 = vsyncpa [#allocation6], 1
    %2026 = vsyncpa [#allocation9], 1
    %2027 = vsyncpa [#allocation12], 1
    %2028 = vsyncpa [#allocation15], 1
    %2029 = vsyncpa [#allocation4], 1
    %s2030 = scalar_lea.sflag [#allocation4], 1
    %2031 = vsyncpa %s2030, 1

</llo_original>
